<compile_context>
chip_gen: v7x
topology: tpu7x:2x2x1
jax: 0.10.0
libtpu: 0.0.40
codegen_flags: <defaults>
</compile_context>

<pallas_src>
import jax
import jax.numpy as jnp
from jax import lax
from jax.experimental import pallas as pl
from jax.experimental.pallas import tpu as pltpu

POOL_K = 5           # cfg['pooling_size'] = 5 (YOLOv5-style SPPF default)
POOL_PAD = POOL_K // 2


def _silu(x):
    return x * jax.nn.sigmoid(x)


def _maxpool5_same(a):
    """5x5 max pool, stride 1, pad 2 (same spatial size), separable, on (H, W, C) f32."""
    H, W, C = a.shape

    # ---- H direction: 5-tap max. Leading-axis shifts = whole-tile moves (cheap). ----
    neg_rows = jnp.full((POOL_PAD, W, C), -jnp.inf, dtype=a.dtype)
    ah = jnp.concatenate([neg_rows, a, neg_rows], axis=0)        # (H+4, W, C)
    m = ah[0:H]
    for d in range(1, POOL_K):
        m = jnp.maximum(m, ah[d:d + H])

    # ---- W direction: 5-tap max over the sublane axis. ----
    neg_cols = jnp.full((H, POOL_PAD, C), -jnp.inf, dtype=a.dtype)
    aw = jnp.concatenate([neg_cols, m, neg_cols], axis=1)        # (H, W+4, C)
    out = aw[:, 0:W]
    for d in range(1, POOL_K):
        out = jnp.maximum(out, aw[:, d:d + W])
    return out


def _sppf_kernel(x_ref, w1_ref, b1_ref, w2_ref, b2_ref, o_ref):
    # x_ref block: (1, H, W, Cin) for the current batch element (NHWC).
    _, H, W, Cin = x_ref.shape
    Cmid = w1_ref.shape[1]
    Cout = w2_ref.shape[2]

    # ---- cv1: 1x1 conv (folded BN) + SiLU == channel matmul, bf16 operands, f32 acc.
    x2d = x_ref[0].reshape(H * W, Cin).astype(jnp.bfloat16)
    h = jnp.dot(x2d, w1_ref[...], preferred_element_type=jnp.float32) + b1_ref[...]
    h = _silu(h)                                                  # (H*W, Cmid), f32

    # ---- cv2 accumulated over the four concat slots (no cat buffer).
    acc = jnp.dot(h.astype(jnp.bfloat16), w2_ref[0],
                  preferred_element_type=jnp.float32)

    y = _maxpool5_same(h.reshape(H, W, Cmid))                     # y1
    acc += jnp.dot(y.reshape(H * W, Cmid).astype(jnp.bfloat16), w2_ref[1],
                   preferred_element_type=jnp.float32)

    y = _maxpool5_same(y)                                         # y2
    acc += jnp.dot(y.reshape(H * W, Cmid).astype(jnp.bfloat16), w2_ref[2],
                   preferred_element_type=jnp.float32)

    y = _maxpool5_same(y)                                         # y3
    acc += jnp.dot(y.reshape(H * W, Cmid).astype(jnp.bfloat16), w2_ref[3],
                   preferred_element_type=jnp.float32)

    out = _silu(acc + b2_ref[...])                                # (H*W, Cout), f32
    o_ref[...] = out.reshape(1, H, W, Cout).astype(o_ref.dtype)


@jax.jit
def sppf_forward(x_nchw, w1, b1, w2, b2):
    """x_nchw: (B, Cin, H, W) f32. w1: (Cin, Cmid), w2: (4*Cmid, Cout), BN pre-folded.

    Returns (B, Cout, H, W) f32.
    """
    B, Cin, H, W = x_nchw.shape
    Cmid = w1.shape[1]
    Cout = w2.shape[1]

    # NCHW -> NHWC glue (channels-last keeps the lane axis dense inside the kernel).
    x = jnp.transpose(x_nchw, (0, 2, 3, 1))
    w1_bf = w1.astype(jnp.bfloat16)                               # (Cin, Cmid)
    w2_bf = w2.reshape(4, Cmid, Cout).astype(jnp.bfloat16)        # per-concat-slot blocks
    b1_2d = b1.reshape(1, Cmid)
    b2_2d = b2.reshape(1, Cout)

    out_nhwc = pl.pallas_call(
        _sppf_kernel,
        out_shape=jax.ShapeDtypeStruct((B, H, W, Cout), jnp.float32),
        grid_spec=pltpu.PrefetchScalarGridSpec(
            num_scalar_prefetch=0,
            grid=(B,),
            in_specs=[
                pl.BlockSpec((1, H, W, Cin), lambda b: (b, 0, 0, 0)),
                pl.BlockSpec((Cin, Cmid), lambda b: (0, 0)),
                pl.BlockSpec((1, Cmid), lambda b: (0, 0)),
                pl.BlockSpec((4, Cmid, Cout), lambda b: (0, 0, 0)),
                pl.BlockSpec((1, Cout), lambda b: (0, 0)),
            ],
            out_specs=pl.BlockSpec((1, H, W, Cout), lambda b: (b, 0, 0, 0)),
        ),
        compiler_params=pltpu.CompilerParams(
            dimension_semantics=("parallel",),
            vmem_limit_bytes=32 * 1024 * 1024,
        ),
    )(x, w1_bf, b1_2d, w2_bf, b2_2d)

    return jnp.transpose(out_nhwc, (0, 3, 1, 2))                  # NHWC -> NCHW


def _fold_bn(w_oi, gamma, beta, mean, var, eps=1e-5):
    """Fold BatchNorm into a bias-free 1x1 conv. w_oi: (Cout, Cin)."""
    scale = gamma / jnp.sqrt(var + eps)
    w_folded = w_oi * scale[:, None]                              # (Cout, Cin)
    b_folded = beta - mean * scale                                # (Cout,)
    return w_folded.T, b_folded                                   # (Cin, Cout), (Cout,)


def _make_params(key, in_dim, out_dim, expand_ratio=0.5):
    inter_dim = int(in_dim * expand_ratio)
    k = jax.random.split(key, 10)
    # cv1: Conv2d(in_dim, inter_dim, 1, bias=False) + BN(inter_dim)
    w1_raw = jax.random.normal(k[0], (inter_dim, in_dim), jnp.float32) * 0.1
    g1 = 1.0 + 0.1 * jax.random.normal(k[1], (inter_dim,), jnp.float32)
    be1 = 0.1 * jax.random.normal(k[2], (inter_dim,), jnp.float32)
    m1 = 0.1 * jax.random.normal(k[3], (inter_dim,), jnp.float32)
    v1 = jnp.abs(jax.random.normal(k[4], (inter_dim,), jnp.float32)) + 0.5
    # cv2: Conv2d(4*inter_dim, out_dim, 1, bias=False) + BN(out_dim)
    w2_raw = jax.random.normal(k[5], (out_dim, 4 * inter_dim), jnp.float32) * 0.1
    g2 = 1.0 + 0.1 * jax.random.normal(k[6], (out_dim,), jnp.float32)
    be2 = 0.1 * jax.random.normal(k[7], (out_dim,), jnp.float32)
    m2 = 0.1 * jax.random.normal(k[8], (out_dim,), jnp.float32)
    v2 = jnp.abs(jax.random.normal(k[9], (out_dim,), jnp.float32)) + 0.5

    w1, b1 = _fold_bn(w1_raw, g1, be1, m1, v1)                    # (Cin, Cmid), (Cmid,)
    w2, b2 = _fold_bn(w2_raw, g2, be2, m2, v2)                    # (4*Cmid, Cout), (Cout,)
    return w1, b1, w2, b2


def _reference_sppf(x_nchw, w1, b1, w2, b2):
    """Pure-JAX reference (NHWC internally). Matmul operands rounded to bf16 with f32
    accumulation, exactly like the kernel, so the comparison isolates kernel logic."""
    x = jnp.transpose(x_nchw, (0, 2, 3, 1))
    h = jnp.einsum('bhwc,cd->bhwd', x.astype(jnp.bfloat16), w1.astype(jnp.bfloat16),
                   preferred_element_type=jnp.float32) + b1
    h = _silu(h)

    def pool(a):
        return lax.reduce_window(
            a, -jnp.inf, lax.max,
            window_dimensions=(1, POOL_K, POOL_K, 1),
            window_strides=(1, 1, 1, 1),
            padding=[(0, 0), (POOL_PAD, POOL_PAD), (POOL_PAD, POOL_PAD), (0, 0)])

    y1 = pool(h)
    y2 = pool(y1)
    y3 = pool(y2)
    cat = jnp.concatenate([h, y1, y2, y3], axis=-1)
    out = jnp.einsum('bhwc,cd->bhwd', cat.astype(jnp.bfloat16), w2.astype(jnp.bfloat16),
                     preferred_element_type=jnp.float32) + b2
    out = _silu(out)
    return jnp.transpose(out, (0, 3, 1, 2))


if __name__ == "__main__":
    key = jax.random.PRNGKey(0)
    kx, kp = jax.random.split(key)

    # Small but lane-friendly SPPF shapes: in_dim=256 -> inter_dim=128, out_dim=256.
    B, IN_DIM, OUT_DIM, H, W = 2, 256, 256, 16, 16
    x = jax.random.normal(kx, (B, IN_DIM, H, W), jnp.float32)
    w1, b1, w2, b2 = _make_params(kp, IN_DIM, OUT_DIM, expand_ratio=0.5)

    out = sppf_forward(x, w1, b1, w2, b2)
    out = jax.block_until_ready(out)

    ref = _reference_sppf(x, w1, b1, w2, b2)
    assert out.shape == (B, OUT_DIM, H, W)
    max_err = float(jnp.max(jnp.abs(out - ref)))
    assert jnp.allclose(out, ref, atol=1e-2, rtol=1e-2), f"mismatch vs reference (max abs err {max_err})"

    print("KERNEL_OK")
</pallas_src>

<mosaic_0001>
module attributes {stable_mosaic.version = 11 : i64} {
  func.func @_sppf_kernel(%arg0: i32, %arg1: memref<1x16x16x256xf32, #tpu.memory_space<vmem>>, %arg2: memref<256x128xbf16, #tpu.memory_space<vmem>>, %arg3: memref<1x128xf32, #tpu.memory_space<vmem>>, %arg4: memref<4x128x256xbf16, #tpu.memory_space<vmem>>, %arg5: memref<1x256xf32, #tpu.memory_space<vmem>>, %arg6: memref<1x16x16x256xf32, #tpu.memory_space<vmem>>) attributes {dimension_semantics = [#tpu.dimension_semantics<parallel>], iteration_bounds = array<i64: 2>, scalar_prefetch = 0 : i64, scratch_operands = 0 : i64, tpu.core_type = #tpu.core_type<tc>, window_params = [{transform_indices = @transform_0, window_bounds = array<i64: 1, 16, 16, 256>}, {pipeline_mode = #tpu.pipeline_mode<synchronous>, transform_indices = @transform_1, window_bounds = array<i64: 256, 128>}, {pipeline_mode = #tpu.pipeline_mode<synchronous>, transform_indices = @transform_2, window_bounds = array<i64: 1, 128>}, {pipeline_mode = #tpu.pipeline_mode<synchronous>, transform_indices = @transform_3, window_bounds = array<i64: 4, 128, 256>}, {pipeline_mode = #tpu.pipeline_mode<synchronous>, transform_indices = @transform_4, window_bounds = array<i64: 1, 256>}, {transform_indices = @transform_5, window_bounds = array<i64: 1, 16, 16, 256>}]} {
    %c0 = arith.constant 0 : index
    %c0_0 = arith.constant 0 : index
    %c0_1 = arith.constant 0 : index
    %c0_2 = arith.constant 0 : index
    %0 = vector.load %arg1[%c0, %c0_0, %c0_1, %c0_2] : memref<1x16x16x256xf32, #tpu.memory_space<vmem>>, vector<1x16x16x256xf32>
    %1 = vector.shape_cast %0 : vector<1x16x16x256xf32> to vector<16x16x256xf32>
    %2 = vector.shape_cast %1 : vector<16x16x256xf32> to vector<256x256xf32>
    %3 = arith.truncf %2 : vector<256x256xf32> to vector<256x256xbf16>
    %c0_3 = arith.constant 0 : index
    %c0_4 = arith.constant 0 : index
    %4 = vector.load %arg2[%c0_3, %c0_4] : memref<256x128xbf16, #tpu.memory_space<vmem>>, vector<256x128xbf16>
    %cst = arith.constant dense<0.000000e+00> : vector<256x128xf32>
    %5 = tpu.matmul %3, %4, %cst {dimension_numbers = #tpu.dot_dimension_numbers<[1], [0], [0], [1], [0, 0, 1, 1], [], []>} : vector<256x256xbf16>, vector<256x128xbf16>, vector<256x128xf32> -> vector<256x128xf32>
    %c0_5 = arith.constant 0 : index
    %c0_6 = arith.constant 0 : index
    %6 = vector.load %arg3[%c0_5, %c0_6] : memref<1x128xf32, #tpu.memory_space<vmem>>, vector<1x128xf32>
    %7 = vector.broadcast %6 : vector<1x128xf32> to vector<256x128xf32>
    %8 = arith.addf %5, %7 : vector<256x128xf32>
    %9 = arith.negf %8 : vector<256x128xf32>
    %10 = math.exp %9 : vector<256x128xf32>
    %cst_7 = arith.constant 1.000000e+00 : f32
    %11 = vector.broadcast %cst_7 : f32 to vector<256x128xf32>
    %12 = arith.addf %11, %10 : vector<256x128xf32>
    %13 = arith.divf %11, %12 : vector<256x128xf32>
    %14 = arith.mulf %8, %13 : vector<256x128xf32>
    %15 = arith.truncf %14 : vector<256x128xf32> to vector<256x128xbf16>
    %c0_8 = arith.constant 0 : index
    %c0_9 = arith.constant 0 : index
    %c0_10 = arith.constant 0 : index
    %16 = vector.load %arg4[%c0_8, %c0_9, %c0_10] : memref<4x128x256xbf16, #tpu.memory_space<vmem>>, vector<1x128x256xbf16>
    %17 = vector.shape_cast %16 : vector<1x128x256xbf16> to vector<128x256xbf16>
    %cst_11 = arith.constant dense<0.000000e+00> : vector<256x256xf32>
    %18 = tpu.matmul %15, %17, %cst_11 {dimension_numbers = #tpu.dot_dimension_numbers<[1], [0], [0], [1], [0, 0, 1, 1], [], []>} : vector<256x128xbf16>, vector<128x256xbf16>, vector<256x256xf32> -> vector<256x256xf32>
    %19 = vector.shape_cast %14 : vector<256x128xf32> to vector<16x16x128xf32>
    %cst_12 = arith.constant 0xFF800000 : f32
    %20 = vector.broadcast %cst_12 : f32 to vector<2x16x128xf32>
    %21 = tpu.concatenate %20, %19, %20 in 0 : vector<2x16x128xf32>, vector<16x16x128xf32>, vector<2x16x128xf32> -> vector<20x16x128xf32>
    %22 = vector.extract_strided_slice %21 {offsets = [0, 0, 0], sizes = [16, 16, 128], strides = [1, 1, 1]} : vector<20x16x128xf32> to vector<16x16x128xf32>
    %23 = vector.extract_strided_slice %21 {offsets = [1, 0, 0], sizes = [16, 16, 128], strides = [1, 1, 1]} : vector<20x16x128xf32> to vector<16x16x128xf32>
    %24 = arith.maximumf %22, %23 : vector<16x16x128xf32>
    %25 = vector.extract_strided_slice %21 {offsets = [2, 0, 0], sizes = [16, 16, 128], strides = [1, 1, 1]} : vector<20x16x128xf32> to vector<16x16x128xf32>
    %26 = arith.maximumf %24, %25 : vector<16x16x128xf32>
    %27 = vector.extract_strided_slice %21 {offsets = [3, 0, 0], sizes = [16, 16, 128], strides = [1, 1, 1]} : vector<20x16x128xf32> to vector<16x16x128xf32>
    %28 = arith.maximumf %26, %27 : vector<16x16x128xf32>
    %29 = vector.extract_strided_slice %21 {offsets = [4, 0, 0], sizes = [16, 16, 128], strides = [1, 1, 1]} : vector<20x16x128xf32> to vector<16x16x128xf32>
    %30 = arith.maximumf %28, %29 : vector<16x16x128xf32>
    %cst_13 = arith.constant 0xFF800000 : f32
    %31 = vector.broadcast %cst_13 : f32 to vector<16x2x128xf32>
    %32 = tpu.concatenate %31, %30, %31 in 1 : vector<16x2x128xf32>, vector<16x16x128xf32>, vector<16x2x128xf32> -> vector<16x20x128xf32>
    %33 = vector.extract_strided_slice %32 {offsets = [0, 0, 0], sizes = [16, 16, 128], strides = [1, 1, 1]} : vector<16x20x128xf32> to vector<16x16x128xf32>
    %34 = vector.extract_strided_slice %32 {offsets = [0, 1, 0], sizes = [16, 16, 128], strides = [1, 1, 1]} : vector<16x20x128xf32> to vector<16x16x128xf32>
    %35 = arith.maximumf %33, %34 : vector<16x16x128xf32>
    %36 = vector.extract_strided_slice %32 {offsets = [0, 2, 0], sizes = [16, 16, 128], strides = [1, 1, 1]} : vector<16x20x128xf32> to vector<16x16x128xf32>
    %37 = arith.maximumf %35, %36 : vector<16x16x128xf32>
    %38 = vector.extract_strided_slice %32 {offsets = [0, 3, 0], sizes = [16, 16, 128], strides = [1, 1, 1]} : vector<16x20x128xf32> to vector<16x16x128xf32>
    %39 = arith.maximumf %37, %38 : vector<16x16x128xf32>
    %40 = vector.extract_strided_slice %32 {offsets = [0, 4, 0], sizes = [16, 16, 128], strides = [1, 1, 1]} : vector<16x20x128xf32> to vector<16x16x128xf32>
    %41 = arith.maximumf %39, %40 : vector<16x16x128xf32>
    %42 = vector.shape_cast %41 : vector<16x16x128xf32> to vector<256x128xf32>
    %43 = arith.truncf %42 : vector<256x128xf32> to vector<256x128xbf16>
    %c1 = arith.constant 1 : index
    %c0_14 = arith.constant 0 : index
    %c0_15 = arith.constant 0 : index
    %44 = vector.load %arg4[%c1, %c0_14, %c0_15] : memref<4x128x256xbf16, #tpu.memory_space<vmem>>, vector<1x128x256xbf16>
    %45 = vector.shape_cast %44 : vector<1x128x256xbf16> to vector<128x256xbf16>
    %cst_16 = arith.constant dense<0.000000e+00> : vector<256x256xf32>
    %46 = tpu.matmul %43, %45, %cst_16 {dimension_numbers = #tpu.dot_dimension_numbers<[1], [0], [0], [1], [0, 0, 1, 1], [], []>} : vector<256x128xbf16>, vector<128x256xbf16>, vector<256x256xf32> -> vector<256x256xf32>
    %47 = arith.addf %18, %46 : vector<256x256xf32>
    %cst_17 = arith.constant 0xFF800000 : f32
    %48 = vector.broadcast %cst_17 : f32 to vector<2x16x128xf32>
    %49 = tpu.concatenate %48, %41, %48 in 0 : vector<2x16x128xf32>, vector<16x16x128xf32>, vector<2x16x128xf32> -> vector<20x16x128xf32>
    %50 = vector.extract_strided_slice %49 {offsets = [0, 0, 0], sizes = [16, 16, 128], strides = [1, 1, 1]} : vector<20x16x128xf32> to vector<16x16x128xf32>
    %51 = vector.extract_strided_slice %49 {offsets = [1, 0, 0], sizes = [16, 16, 128], strides = [1, 1, 1]} : vector<20x16x128xf32> to vector<16x16x128xf32>
    %52 = arith.maximumf %50, %51 : vector<16x16x128xf32>
    %53 = vector.extract_strided_slice %49 {offsets = [2, 0, 0], sizes = [16, 16, 128], strides = [1, 1, 1]} : vector<20x16x128xf32> to vector<16x16x128xf32>
    %54 = arith.maximumf %52, %53 : vector<16x16x128xf32>
    %55 = vector.extract_strided_slice %49 {offsets = [3, 0, 0], sizes = [16, 16, 128], strides = [1, 1, 1]} : vector<20x16x128xf32> to vector<16x16x128xf32>
    %56 = arith.maximumf %54, %55 : vector<16x16x128xf32>
    %57 = vector.extract_strided_slice %49 {offsets = [4, 0, 0], sizes = [16, 16, 128], strides = [1, 1, 1]} : vector<20x16x128xf32> to vector<16x16x128xf32>
    %58 = arith.maximumf %56, %57 : vector<16x16x128xf32>
    %cst_18 = arith.constant 0xFF800000 : f32
    %59 = vector.broadcast %cst_18 : f32 to vector<16x2x128xf32>
    %60 = tpu.concatenate %59, %58, %59 in 1 : vector<16x2x128xf32>, vector<16x16x128xf32>, vector<16x2x128xf32> -> vector<16x20x128xf32>
    %61 = vector.extract_strided_slice %60 {offsets = [0, 0, 0], sizes = [16, 16, 128], strides = [1, 1, 1]} : vector<16x20x128xf32> to vector<16x16x128xf32>
    %62 = vector.extract_strided_slice %60 {offsets = [0, 1, 0], sizes = [16, 16, 128], strides = [1, 1, 1]} : vector<16x20x128xf32> to vector<16x16x128xf32>
    %63 = arith.maximumf %61, %62 : vector<16x16x128xf32>
    %64 = vector.extract_strided_slice %60 {offsets = [0, 2, 0], sizes = [16, 16, 128], strides = [1, 1, 1]} : vector<16x20x128xf32> to vector<16x16x128xf32>
    %65 = arith.maximumf %63, %64 : vector<16x16x128xf32>
    %66 = vector.extract_strided_slice %60 {offsets = [0, 3, 0], sizes = [16, 16, 128], strides = [1, 1, 1]} : vector<16x20x128xf32> to vector<16x16x128xf32>
    %67 = arith.maximumf %65, %66 : vector<16x16x128xf32>
    %68 = vector.extract_strided_slice %60 {offsets = [0, 4, 0], sizes = [16, 16, 128], strides = [1, 1, 1]} : vector<16x20x128xf32> to vector<16x16x128xf32>
    %69 = arith.maximumf %67, %68 : vector<16x16x128xf32>
    %70 = vector.shape_cast %69 : vector<16x16x128xf32> to vector<256x128xf32>
    %71 = arith.truncf %70 : vector<256x128xf32> to vector<256x128xbf16>
    %c2 = arith.constant 2 : index
    %c0_19 = arith.constant 0 : index
    %c0_20 = arith.constant 0 : index
    %72 = vector.load %arg4[%c2, %c0_19, %c0_20] : memref<4x128x256xbf16, #tpu.memory_space<vmem>>, vector<1x128x256xbf16>
    %73 = vector.shape_cast %72 : vector<1x128x256xbf16> to vector<128x256xbf16>
    %cst_21 = arith.constant dense<0.000000e+00> : vector<256x256xf32>
    %74 = tpu.matmul %71, %73, %cst_21 {dimension_numbers = #tpu.dot_dimension_numbers<[1], [0], [0], [1], [0, 0, 1, 1], [], []>} : vector<256x128xbf16>, vector<128x256xbf16>, vector<256x256xf32> -> vector<256x256xf32>
    %75 = arith.addf %47, %74 : vector<256x256xf32>
    %cst_22 = arith.constant 0xFF800000 : f32
    %76 = vector.broadcast %cst_22 : f32 to vector<2x16x128xf32>
    %77 = tpu.concatenate %76, %69, %76 in 0 : vector<2x16x128xf32>, vector<16x16x128xf32>, vector<2x16x128xf32> -> vector<20x16x128xf32>
    %78 = vector.extract_strided_slice %77 {offsets = [0, 0, 0], sizes = [16, 16, 128], strides = [1, 1, 1]} : vector<20x16x128xf32> to vector<16x16x128xf32>
    %79 = vector.extract_strided_slice %77 {offsets = [1, 0, 0], sizes = [16, 16, 128], strides = [1, 1, 1]} : vector<20x16x128xf32> to vector<16x16x128xf32>
    %80 = arith.maximumf %78, %79 : vector<16x16x128xf32>
    %81 = vector.extract_strided_slice %77 {offsets = [2, 0, 0], sizes = [16, 16, 128], strides = [1, 1, 1]} : vector<20x16x128xf32> to vector<16x16x128xf32>
    %82 = arith.maximumf %80, %81 : vector<16x16x128xf32>
    %83 = vector.extract_strided_slice %77 {offsets = [3, 0, 0], sizes = [16, 16, 128], strides = [1, 1, 1]} : vector<20x16x128xf32> to vector<16x16x128xf32>
    %84 = arith.maximumf %82, %83 : vector<16x16x128xf32>
    %85 = vector.extract_strided_slice %77 {offsets = [4, 0, 0], sizes = [16, 16, 128], strides = [1, 1, 1]} : vector<20x16x128xf32> to vector<16x16x128xf32>
    %86 = arith.maximumf %84, %85 : vector<16x16x128xf32>
    %cst_23 = arith.constant 0xFF800000 : f32
    %87 = vector.broadcast %cst_23 : f32 to vector<16x2x128xf32>
    %88 = tpu.concatenate %87, %86, %87 in 1 : vector<16x2x128xf32>, vector<16x16x128xf32>, vector<16x2x128xf32> -> vector<16x20x128xf32>
    %89 = vector.extract_strided_slice %88 {offsets = [0, 0, 0], sizes = [16, 16, 128], strides = [1, 1, 1]} : vector<16x20x128xf32> to vector<16x16x128xf32>
    %90 = vector.extract_strided_slice %88 {offsets = [0, 1, 0], sizes = [16, 16, 128], strides = [1, 1, 1]} : vector<16x20x128xf32> to vector<16x16x128xf32>
    %91 = arith.maximumf %89, %90 : vector<16x16x128xf32>
    %92 = vector.extract_strided_slice %88 {offsets = [0, 2, 0], sizes = [16, 16, 128], strides = [1, 1, 1]} : vector<16x20x128xf32> to vector<16x16x128xf32>
    %93 = arith.maximumf %91, %92 : vector<16x16x128xf32>
    %94 = vector.extract_strided_slice %88 {offsets = [0, 3, 0], sizes = [16, 16, 128], strides = [1, 1, 1]} : vector<16x20x128xf32> to vector<16x16x128xf32>
    %95 = arith.maximumf %93, %94 : vector<16x16x128xf32>
    %96 = vector.extract_strided_slice %88 {offsets = [0, 4, 0], sizes = [16, 16, 128], strides = [1, 1, 1]} : vector<16x20x128xf32> to vector<16x16x128xf32>
    %97 = arith.maximumf %95, %96 : vector<16x16x128xf32>
    %98 = vector.shape_cast %97 : vector<16x16x128xf32> to vector<256x128xf32>
    %99 = arith.truncf %98 : vector<256x128xf32> to vector<256x128xbf16>
    %c3 = arith.constant 3 : index
    %c0_24 = arith.constant 0 : index
    %c0_25 = arith.constant 0 : index
    %100 = vector.load %arg4[%c3, %c0_24, %c0_25] : memref<4x128x256xbf16, #tpu.memory_space<vmem>>, vector<1x128x256xbf16>
    %101 = vector.shape_cast %100 : vector<1x128x256xbf16> to vector<128x256xbf16>
    %cst_26 = arith.constant dense<0.000000e+00> : vector<256x256xf32>
    %102 = tpu.matmul %99, %101, %cst_26 {dimension_numbers = #tpu.dot_dimension_numbers<[1], [0], [0], [1], [0, 0, 1, 1], [], []>} : vector<256x128xbf16>, vector<128x256xbf16>, vector<256x256xf32> -> vector<256x256xf32>
    %103 = arith.addf %75, %102 : vector<256x256xf32>
    %c0_27 = arith.constant 0 : index
    %c0_28 = arith.constant 0 : index
    %104 = vector.load %arg5[%c0_27, %c0_28] : memref<1x256xf32, #tpu.memory_space<vmem>>, vector<1x256xf32>
    %105 = vector.broadcast %104 : vector<1x256xf32> to vector<256x256xf32>
    %106 = arith.addf %103, %105 : vector<256x256xf32>
    %107 = arith.negf %106 : vector<256x256xf32>
    %108 = math.exp %107 : vector<256x256xf32>
    %cst_29 = arith.constant 1.000000e+00 : f32
    %109 = vector.broadcast %cst_29 : f32 to vector<256x256xf32>
    %110 = arith.addf %109, %108 : vector<256x256xf32>
    %111 = arith.divf %109, %110 : vector<256x256xf32>
    %112 = arith.mulf %106, %111 : vector<256x256xf32>
    %113 = vector.shape_cast %112 : vector<256x256xf32> to vector<1x16x16x256xf32>
    %c0_30 = arith.constant 0 : index
    %c0_31 = arith.constant 0 : index
    %c0_32 = arith.constant 0 : index
    %c0_33 = arith.constant 0 : index
    %114 = vector.load %arg6[%c0_30, %c0_31, %c0_32, %c0_33] : memref<1x16x16x256xf32, #tpu.memory_space<vmem>>, vector<1x16x16x256xf32>
    tpu.vector_store %arg6[%c0_30, %c0_31, %c0_32, %c0_33], %113 {strides = array<i32>} : memref<1x16x16x256xf32, #tpu.memory_space<vmem>>, vector<1x16x16x256xf32>,
    return
  }
  func.func @transform_0(%arg0: i32) -> (i32, i32, i32, i32) {
    %c0_i32 = arith.constant 0 : i32
    %c0_i32_0 = arith.constant 0 : i32
    %c0_i32_1 = arith.constant 0 : i32
    %c0_i32_2 = arith.constant 0 : i32
    return %arg0, %c0_i32, %c0_i32_0, %c0_i32_1 : i32, i32, i32, i32
  }
  func.func @transform_1(%arg0: i32) -> (i32, i32) {
    %c0_i32 = arith.constant 0 : i32
    %c0_i32_0 = arith.constant 0 : i32
    %c0_i32_1 = arith.constant 0 : i32
    return %c0_i32, %c0_i32_0 : i32, i32
  }
  func.func @transform_2(%arg0: i32) -> (i32, i32) {
    %c0_i32 = arith.constant 0 : i32
    %c0_i32_0 = arith.constant 0 : i32
    %c0_i32_1 = arith.constant 0 : i32
    return %c0_i32, %c0_i32_0 : i32, i32
  }
  func.func @transform_3(%arg0: i32) -> (i32, i32, i32) {
    %c0_i32 = arith.constant 0 : i32
    %c0_i32_0 = arith.constant 0 : i32
    %c0_i32_1 = arith.constant 0 : i32
    %c0_i32_2 = arith.constant 0 : i32
    return %c0_i32, %c0_i32_0, %c0_i32_1 : i32, i32, i32
  }
  func.func @transform_4(%arg0: i32) -> (i32, i32) {
    %c0_i32 = arith.constant 0 : i32
    %c0_i32_0 = arith.constant 0 : i32
    %c0_i32_1 = arith.constant 0 : i32
    return %c0_i32, %c0_i32_0 : i32, i32
  }
  func.func @transform_5(%arg0: i32) -> (i32, i32, i32, i32) {
    %c0_i32 = arith.constant 0 : i32
    %c0_i32_0 = arith.constant 0 : i32
    %c0_i32_1 = arith.constant 0 : i32
    %c0_i32_2 = arith.constant 0 : i32
    return %arg0, %c0_i32, %c0_i32_0, %c0_i32_1 : i32, i32, i32, i32
  }
}

</mosaic_0001>

<llo_original>
// kernel: sppf_forward.1
$region0: #{sppf_forward.1}
  #allocation0 [shape = 'u32[]', space=smem, size = 0x4, offset = 0x4, fixed_abs, tag = 'smem constant byte address 0x4 - core index']
  #allocation1 [shape = 'u32[144,128]{1,0:T(1,128)}', space=vmem, size = 0x12000, scoped, tag = 'internal scratch']
  %s0 = inlined_call_operand.vmem [shape: f32[2,16,16,256], index: 0, kind: input, shape index: {}]
  %s1 = inlined_call_operand.vmem [shape: bf16[256,128], index: 1, kind: input, shape index: {}]
  %s2 = inlined_call_operand.vmem [shape: f32[1,128], index: 2, kind: input, shape index: {}]
  %s3 = inlined_call_operand.vmem [shape: bf16[4,128,256], index: 3, kind: input, shape index: {}]
  %s4 = inlined_call_operand.vmem [shape: f32[1,256], index: 4, kind: input, shape index: {}]
  %s5 = inlined_call_operand.hbm [shape: f32[2,16,16,256], index: 5, kind: output, shape index: {}]
  %s6 = sld [smem:[#allocation0]]
  $region53: #{sppf_forward.1} parent=0
    _
  %s8 = ssub.s32 1, %s6
  %s9 = scalar_select 0, %s8, %s6
  $region1: #{sppf_forward.1} parent=0
    #allocation2 [shape = 'u8[524288]{0}', space=vmem, size = 0x80000, scoped, tag = 'output window, operand 0']
    #allocation3 [shape = 's32[2]{0}', space=sflag, size = 0x8, scoped, tag = 'scoped memory for sppf_forward.1']
    %10 = vsyncpa [#allocation3], 0
    %s11 = scalar_lea.sflag [#allocation3], 1
    %12 = vsyncpa %s11, 0
    loop: start=0, step=1, limit=4
    $region2: #{sppf_forward.1} parent=1 // loop_pre_header
      _
    $region3: #{sppf_forward.1} parent=1 // loop_header
      %s14 = sphi 0, %s18
      %p15 = scmp.ge.s32.totalorder %s14, 4
      %s24 = sphi 0, %s26
      %s27 = sphi 0, %s24
      %s28 = sphi 0, %s27
      %s44 = sphi 0, %s28
      %s48 = sphi 0, %s48
      %s50 = sphi 0, %s48
      %s51 = sphi 0, %s50
      %s65 = sphi 0, %s51
      %s69 = sphi 0, %s69
      %s71 = sphi 0, %s69
      %s72 = sphi 0, %s71
      %s86 = sphi 0, %s72
      %s90 = sphi 0, %s90
      %s92 = sphi 0, %s90
      %s93 = sphi 0, %s92
      %s107 = sphi 0, %s93
      %s111 = sphi 0, %s111
      %s113 = sphi 0, %s111
      %s114 = sphi 0, %s113
      %s128 = sphi 0, %s114
      %s134 = sphi 0, %s136
      %s137 = sphi 0, %s134
      %s138 = sphi 0, %s137
      %s154 = sphi 0, %s138
    $region4: #{sppf_forward.1} parent=1 // loop_header_branch
      %17 = sbr.rel (%p15) target = $region8
    $region5: #{sppf_forward.1} parent=1 // loop_body
      %s19 = ssub.s32 %s14, 1
      %s20 = ssub.s32 %s14, 2
      %s21 = sadd.s32 %s14, 1
      %s22 = ssub.s32 %s14, %s21
      %p23 = scmp.eq.s32.totalorder %s22, 0
      %s25 = sadd.s32 %s24, 1
      %s26 = scalar_select %p23, %s24, %s25
      %p29 = pneg %p23
      %p30 = scmp.eq.s32.totalorder %s14, 1
      %p31 = por %p29, %p30
      %p32 = scmp.ne.s32.totalorder %s24, %s27
      %p33 = scmp.eq.s32.totalorder %s14, 0
      %p34 = por %p32, %p33
      %p35 = scmp.ne.s32.totalorder %s24, %s27
      %p36 = scmp.eq.s32.totalorder %s19, 1
      %p37 = por %p35, %p36
      %p38 = scmp.ne.s32.totalorder %s27, %s28
      %p39 = scmp.eq.s32.totalorder %s19, 0
      %p40 = por %p38, %p39
      %p41 = scmp.ne.s32.totalorder %s27, %s28
      %p42 = scmp.eq.s32.totalorder %s20, 1
      %p43 = por %p41, %p42
      %p45 = scmp.ne.s32.totalorder %s28, %s44
      %p46 = scmp.eq.s32.totalorder %s20, 0
      %p47 = por %p45, %p46
      %s49 = sadd.s32 %s48, 1
      %p52 = scmp.eq.s32.totalorder %s14, 1
      %p53 = scmp.ne.s32.totalorder %s48, %s50
      %p54 = scmp.eq.s32.totalorder %s14, 0
      %p55 = por %p53, %p54
      %p56 = scmp.ne.s32.totalorder %s48, %s50
      %p57 = scmp.eq.s32.totalorder %s19, 1
      %p58 = por %p56, %p57
      %p59 = scmp.ne.s32.totalorder %s50, %s51
      %p60 = scmp.eq.s32.totalorder %s19, 0
      %p61 = por %p59, %p60
      %p62 = scmp.ne.s32.totalorder %s50, %s51
      %p63 = scmp.eq.s32.totalorder %s20, 1
      %p64 = por %p62, %p63
      %p66 = scmp.ne.s32.totalorder %s51, %s65
      %p67 = scmp.eq.s32.totalorder %s20, 0
      %p68 = por %p66, %p67
      %s70 = sadd.s32 %s69, 1
      %p73 = scmp.eq.s32.totalorder %s14, 1
      %p74 = scmp.ne.s32.totalorder %s69, %s71
      %p75 = scmp.eq.s32.totalorder %s14, 0
      %p76 = por %p74, %p75
      %p77 = scmp.ne.s32.totalorder %s69, %s71
      %p78 = scmp.eq.s32.totalorder %s19, 1
      %p79 = por %p77, %p78
      %p80 = scmp.ne.s32.totalorder %s71, %s72
      %p81 = scmp.eq.s32.totalorder %s19, 0
      %p82 = por %p80, %p81
      %p83 = scmp.ne.s32.totalorder %s71, %s72
      %p84 = scmp.eq.s32.totalorder %s20, 1
      %p85 = por %p83, %p84
      %p87 = scmp.ne.s32.totalorder %s72, %s86
      %p88 = scmp.eq.s32.totalorder %s20, 0
      %p89 = por %p87, %p88
      %s91 = sadd.s32 %s90, 1
      %p94 = scmp.eq.s32.totalorder %s14, 1
      %p95 = scmp.ne.s32.totalorder %s90, %s92
      %p96 = scmp.eq.s32.totalorder %s14, 0
      %p97 = por %p95, %p96
      %p98 = scmp.ne.s32.totalorder %s90, %s92
      %p99 = scmp.eq.s32.totalorder %s19, 1
      %p100 = por %p98, %p99
      %p101 = scmp.ne.s32.totalorder %s92, %s93
      %p102 = scmp.eq.s32.totalorder %s19, 0
      %p103 = por %p101, %p102
      %p104 = scmp.ne.s32.totalorder %s92, %s93
      %p105 = scmp.eq.s32.totalorder %s20, 1
      %p106 = por %p104, %p105
      %p108 = scmp.ne.s32.totalorder %s93, %s107
      %p109 = scmp.eq.s32.totalorder %s20, 0
      %p110 = por %p108, %p109
      %s112 = sadd.s32 %s111, 1
      %p115 = scmp.eq.s32.totalorder %s14, 1
      %p116 = scmp.ne.s32.totalorder %s111, %s113
      %p117 = scmp.eq.s32.totalorder %s14, 0
      %p118 = por %p116, %p117
      %p119 = scmp.ne.s32.totalorder %s111, %s113
      %p120 = scmp.eq.s32.totalorder %s19, 1
      %p121 = por %p119, %p120
      %p122 = scmp.ne.s32.totalorder %s113, %s114
      %p123 = scmp.eq.s32.totalorder %s19, 0
      %p124 = por %p122, %p123
      %p125 = scmp.ne.s32.totalorder %s113, %s114
      %p126 = scmp.eq.s32.totalorder %s20, 1
      %p127 = por %p125, %p126
      %p129 = scmp.ne.s32.totalorder %s114, %s128
      %p130 = scmp.eq.s32.totalorder %s20, 0
      %p131 = por %p129, %p130
      %s132 = ssub.s32 %s14, %s21
      %p133 = scmp.eq.s32.totalorder %s132, 0
      %s135 = sadd.s32 %s134, 1
      %s136 = scalar_select %p133, %s134, %s135
      %p139 = pneg %p133
      %p140 = scmp.eq.s32.totalorder %s14, 1
      %p141 = por %p139, %p140
      %p142 = scmp.ne.s32.totalorder %s134, %s137
      %p143 = scmp.eq.s32.totalorder %s14, 0
      %p144 = por %p142, %p143
      %p145 = scmp.ne.s32.totalorder %s134, %s137
      %p146 = scmp.eq.s32.totalorder %s19, 1
      %p147 = por %p145, %p146
      %p148 = scmp.ne.s32.totalorder %s137, %s138
      %p149 = scmp.eq.s32.totalorder %s19, 0
      %p150 = por %p148, %p149
      %p151 = scmp.ne.s32.totalorder %s137, %s138
      %p152 = scmp.eq.s32.totalorder %s20, 1
      %p153 = por %p151, %p152
      %p155 = scmp.ne.s32.totalorder %s138, %s154
      %p156 = scmp.eq.s32.totalorder %s20, 0
      %p157 = por %p155, %p156
      %p158 = scmp.le.s32.totalorder 1, %s14
      %p159 = scmp.lt.s32.totalorder %s14, 3
      %p160 = pnand %p158, %p159
      %p161 = pneg %p160
      // Predicated region
      $region9: #{sppf_forward.1} parent=5 // pred_check
        _
      $region10: #{sppf_forward.1} parent=5 // pred_check_branch
        %163 = sbr.rel (%p160) target = $region12
      $region11: #{sppf_forward.1} parent=5 // pred_region
        %s164 = ssub.s32 %s14, 1
        // Predicated region
        $region13: #{sppf_forward.1} parent=11 // pred_check
          %p165 = pneg %p61
        $region14: #{sppf_forward.1} parent=11 // pred_check_branch
          %167 = sbr.rel (%p165) target = $region16
        $region15: #{sppf_forward.1} parent=11 // pred_region
          _
        $region16: #{sppf_forward.1} parent=11 // pred_fallthru
          _
        // Predicated region
        $region17: #{sppf_forward.1} parent=11 // pred_check
          %p168 = pneg %p82
        $region18: #{sppf_forward.1} parent=11 // pred_check_branch
          %170 = sbr.rel (%p168) target = $region20
        $region19: #{sppf_forward.1} parent=11 // pred_region
          _
        $region20: #{sppf_forward.1} parent=11 // pred_fallthru
          _
        // Predicated region
        $region21: #{sppf_forward.1} parent=11 // pred_check
          %p171 = pneg %p103
        $region22: #{sppf_forward.1} parent=11 // pred_check_branch
          %173 = sbr.rel (%p171) target = $region24
        $region23: #{sppf_forward.1} parent=11 // pred_region
          _
        $region24: #{sppf_forward.1} parent=11 // pred_fallthru
          _
        // Predicated region
        $region25: #{sppf_forward.1} parent=11 // pred_check
          %p174 = pneg %p124
        $region26: #{sppf_forward.1} parent=11 // pred_check_branch
          %176 = sbr.rel (%p174) target = $region28
        $region27: #{sppf_forward.1} parent=11 // pred_region
          _
        $region28: #{sppf_forward.1} parent=11 // pred_fallthru
          _
      $region12: #{sppf_forward.1} parent=5 // pred_fallthru
        _
      %p177 = scmp.lt.s32.totalorder %s14, 2
      // Predicated region
      $region29: #{sppf_forward.1} parent=5 // pred_check
        %p178 = pneg %p177
      $region30: #{sppf_forward.1} parent=5 // pred_check_branch
        %180 = sbr.rel (%p178) target = $region32
      $region31: #{sppf_forward.1} parent=5 // pred_region
        // Predicated region
        $region33: #{sppf_forward.1} parent=31 // pred_check
          %p181 = pneg %p34
        $region34: #{sppf_forward.1} parent=31 // pred_check_branch
          %183 = sbr.rel (%p181) target = $region36
        $region35: #{sppf_forward.1} parent=31 // pred_region
          %p184 = scmp.lt.s32.totalorder %s14, 1
          %s185 = scalar_select %p184, %s14, 1
          %s186 = smul.addr %s185, 64
          %s187 = smul.addr %s186, 8
          %s188 = scalar_lea.vmem %s0, %s187
        $region36: #{sppf_forward.1} parent=31 // pred_fallthru
          _
      $region32: #{sppf_forward.1} parent=5 // pred_fallthru
        _
      %p189 = scmp.le.s32.totalorder 1, %s14
      %p190 = scmp.lt.s32.totalorder %s14, 3
      %p191 = pnand %p189, %p190
      %p192 = pneg %p191
      // Predicated region
      $region37: #{sppf_forward.1} parent=5 // pred_check
        _
      $region38: #{sppf_forward.1} parent=5 // pred_check_branch
        %194 = sbr.rel (%p191) target = $region40
      $region39: #{sppf_forward.1} parent=5 // pred_region
        %s195 = ssub.s32 %s14, 1
        %p196 = scmp.lt.s32.totalorder %s19, 1
        %s197 = scalar_select %p196, %s19, 1
        %s198 = smul.addr %s197, 64
        %s199 = smul.addr %s198, 8
        %s200 = scalar_lea.vmem %s0, %s199
        %p201 = pneg %p40
        %p202 = pneg %p37
        %p203 = pneg %p61
        %p204 = pneg %p58
        %p205 = pneg %p82
        %p206 = pneg %p79
        %p207 = pneg %p103
        %p208 = pneg %p100
        %p209 = pneg %p124
        %p210 = pneg %p121
        %p211 = pneg %p150
        %p212 = pneg %p147
        %s213 = sand.u32 %s137, 1
        %s214 = scalar_lea.sflag [#allocation3], %s213
        %s215 = sand.u32 %s137, 1
        %s216 = smul.addr %s215, 512
        %s217 = scalar_lea.vmem [#allocation2], %s216
        %p218 = scmp.lt.s32.totalorder %s19, 1
        %s219 = scalar_select %p218, %s19, 1
        %s220 = smul.addr %s219, 64
        %s221 = smul.addr %s220, 8
        %s222 = scalar_lea.vmem %s0, %s221
        %v224 = vld [vmem:[%s222] sm:$0xff]
        %v225 = vld [vmem:[%s222 + $0x8] sm:$0xff]
        %v226 = vld [vmem:[%s222 + $0x10] sm:$0xff]
        %v227 = vld [vmem:[%s222 + $0x18] sm:$0xff]
        %v228 = vld [vmem:[%s222 + $0x20] sm:$0xff]
        %v229 = vld [vmem:[%s222 + $0x28] sm:$0xff]
        %v230 = vld [vmem:[%s222 + $0x30] sm:$0xff]
        %v231 = vld [vmem:[%s222 + $0x38] sm:$0xff]
        %v232 = vld [vmem:[%s222 + $0x40] sm:$0xff]
        %v233 = vld [vmem:[%s222 + $0x48] sm:$0xff]
        %v234 = vld [vmem:[%s222 + $0x50] sm:$0xff]
        %v235 = vld [vmem:[%s222 + $0x58] sm:$0xff]
        %v236 = vld [vmem:[%s222 + $0x60] sm:$0xff]
        %v237 = vld [vmem:[%s222 + $0x68] sm:$0xff]
        %v238 = vld [vmem:[%s222 + $0x70] sm:$0xff]
        %v239 = vld [vmem:[%s222 + $0x78] sm:$0xff]
        %v240 = vld [vmem:[%s222 + $0x80] sm:$0xff]
        %v241 = vld [vmem:[%s222 + $0x88] sm:$0xff]
        %v242 = vld [vmem:[%s222 + $0x90] sm:$0xff]
        %v243 = vld [vmem:[%s222 + $0x98] sm:$0xff]
        %v244 = vld [vmem:[%s222 + $0xa0] sm:$0xff]
        %v245 = vld [vmem:[%s222 + $0xa8] sm:$0xff]
        %v246 = vld [vmem:[%s222 + $0xb0] sm:$0xff]
        %v247 = vld [vmem:[%s222 + $0xb8] sm:$0xff]
        %v248 = vld [vmem:[%s222 + $0xc0] sm:$0xff]
        %v249 = vld [vmem:[%s222 + $0xc8] sm:$0xff]
        %v250 = vld [vmem:[%s222 + $0xd0] sm:$0xff]
        %v251 = vld [vmem:[%s222 + $0xd8] sm:$0xff]
        %v252 = vld [vmem:[%s222 + $0xe0] sm:$0xff]
        %v253 = vld [vmem:[%s222 + $0xe8] sm:$0xff]
        %v254 = vld [vmem:[%s222 + $0xf0] sm:$0xff]
        %v255 = vld [vmem:[%s222 + $0xf8] sm:$0xff]
        %v256 = vld [vmem:[%s222 + $0x100] sm:$0xff]
        %v257 = vld [vmem:[%s222 + $0x108] sm:$0xff]
        %v258 = vld [vmem:[%s222 + $0x110] sm:$0xff]
        %v259 = vld [vmem:[%s222 + $0x118] sm:$0xff]
        %v260 = vld [vmem:[%s222 + $0x120] sm:$0xff]
        %v261 = vld [vmem:[%s222 + $0x128] sm:$0xff]
        %v262 = vld [vmem:[%s222 + $0x130] sm:$0xff]
        %v263 = vld [vmem:[%s222 + $0x138] sm:$0xff]
        %v264 = vld [vmem:[%s222 + $0x140] sm:$0xff]
        %v265 = vld [vmem:[%s222 + $0x148] sm:$0xff]
        %v266 = vld [vmem:[%s222 + $0x150] sm:$0xff]
        %v267 = vld [vmem:[%s222 + $0x158] sm:$0xff]
        %v268 = vld [vmem:[%s222 + $0x160] sm:$0xff]
        %v269 = vld [vmem:[%s222 + $0x168] sm:$0xff]
        %v270 = vld [vmem:[%s222 + $0x170] sm:$0xff]
        %v271 = vld [vmem:[%s222 + $0x178] sm:$0xff]
        %v272 = vld [vmem:[%s222 + $0x180] sm:$0xff]
        %v273 = vld [vmem:[%s222 + $0x188] sm:$0xff]
        %v274 = vld [vmem:[%s222 + $0x190] sm:$0xff]
        %v275 = vld [vmem:[%s222 + $0x198] sm:$0xff]
        %v276 = vld [vmem:[%s222 + $0x1a0] sm:$0xff]
        %v277 = vld [vmem:[%s222 + $0x1a8] sm:$0xff]
        %v278 = vld [vmem:[%s222 + $0x1b0] sm:$0xff]
        %v279 = vld [vmem:[%s222 + $0x1b8] sm:$0xff]
        %v280 = vld [vmem:[%s222 + $0x1c0] sm:$0xff]
        %v281 = vld [vmem:[%s222 + $0x1c8] sm:$0xff]
        %v282 = vld [vmem:[%s222 + $0x1d0] sm:$0xff]
        %v283 = vld [vmem:[%s222 + $0x1d8] sm:$0xff]
        %v284 = vld [vmem:[%s222 + $0x1e0] sm:$0xff]
        %v285 = vld [vmem:[%s222 + $0x1e8] sm:$0xff]
        %v286 = vld [vmem:[%s222 + $0x1f0] sm:$0xff]
        %v287 = vld [vmem:[%s222 + $0x1f8] sm:$0xff]
        %v288 = vpack.c.bf16 %v226, %v224
        %v289 = vpack.c.bf16 %v227, %v225
        %v290 = vpack.c.bf16 %v230, %v228
        %v291 = vpack.c.bf16 %v231, %v229
        %v292 = vpack.c.bf16 %v234, %v232
        %v293 = vpack.c.bf16 %v235, %v233
        %v294 = vpack.c.bf16 %v238, %v236
        %v295 = vpack.c.bf16 %v239, %v237
        %v296 = vpack.c.bf16 %v242, %v240
        %v297 = vpack.c.bf16 %v243, %v241
        %v298 = vpack.c.bf16 %v246, %v244
        %v299 = vpack.c.bf16 %v247, %v245
        %v300 = vpack.c.bf16 %v250, %v248
        %v301 = vpack.c.bf16 %v251, %v249
        %v302 = vpack.c.bf16 %v254, %v252
        %v303 = vpack.c.bf16 %v255, %v253
        %v304 = vpack.c.bf16 %v258, %v256
        %v305 = vpack.c.bf16 %v259, %v257
        %v306 = vpack.c.bf16 %v262, %v260
        %v307 = vpack.c.bf16 %v263, %v261
        %v308 = vpack.c.bf16 %v266, %v264
        %v309 = vpack.c.bf16 %v267, %v265
        %v310 = vpack.c.bf16 %v270, %v268
        %v311 = vpack.c.bf16 %v271, %v269
        %v312 = vpack.c.bf16 %v274, %v272
        %v313 = vpack.c.bf16 %v275, %v273
        %v314 = vpack.c.bf16 %v278, %v276
        %v315 = vpack.c.bf16 %v279, %v277
        %v316 = vpack.c.bf16 %v282, %v280
        %v317 = vpack.c.bf16 %v283, %v281
        %v318 = vpack.c.bf16 %v286, %v284
        %v319 = vpack.c.bf16 %v287, %v285
        %v320 = vld [vmem:[%s1] sm:$0xf]
        %v321 = vld [vmem:[%s1 + $0x4] sm:$0xf]
        %v322 = vld [vmem:[%s1 + $0x8] sm:$0xf]
        %v323 = vld [vmem:[%s1 + $0xc] sm:$0xf]
        %v324 = vld [vmem:[%s1 + $0x10] sm:$0xf]
        %v325 = vld [vmem:[%s1 + $0x14] sm:$0xf]
        %v326 = vld [vmem:[%s1 + $0x18] sm:$0xf]
        %v327 = vld [vmem:[%s1 + $0x1c] sm:$0xf]
        %v328 = vld [vmem:[%s1 + $0x20] sm:$0xf]
        %v329 = vld [vmem:[%s1 + $0x24] sm:$0xf]
        %v330 = vld [vmem:[%s1 + $0x28] sm:$0xf]
        %v331 = vld [vmem:[%s1 + $0x2c] sm:$0xf]
        %v332 = vld [vmem:[%s1 + $0x30] sm:$0xf]
        %v333 = vld [vmem:[%s1 + $0x34] sm:$0xf]
        %v334 = vld [vmem:[%s1 + $0x38] sm:$0xf]
        %v335 = vld [vmem:[%s1 + $0x3c] sm:$0xf]
        %v336 = vld [vmem:[%s1 + $0x40] sm:$0xf]
        %v337 = vld [vmem:[%s1 + $0x44] sm:$0xf]
        %v338 = vld [vmem:[%s1 + $0x48] sm:$0xf]
        %v339 = vld [vmem:[%s1 + $0x4c] sm:$0xf]
        %v340 = vld [vmem:[%s1 + $0x50] sm:$0xf]
        %v341 = vld [vmem:[%s1 + $0x54] sm:$0xf]
        %v342 = vld [vmem:[%s1 + $0x58] sm:$0xf]
        %v343 = vld [vmem:[%s1 + $0x5c] sm:$0xf]
        %v344 = vld [vmem:[%s1 + $0x60] sm:$0xf]
        %v345 = vld [vmem:[%s1 + $0x64] sm:$0xf]
        %v346 = vld [vmem:[%s1 + $0x68] sm:$0xf]
        %v347 = vld [vmem:[%s1 + $0x6c] sm:$0xf]
        %v348 = vld [vmem:[%s1 + $0x70] sm:$0xf]
        %v349 = vld [vmem:[%s1 + $0x74] sm:$0xf]
        %v350 = vld [vmem:[%s1 + $0x78] sm:$0xf]
        %v351 = vld [vmem:[%s1 + $0x7c] sm:$0xf]
        %v352 = vld [vmem:[%s2] sm:$0x1]
        %v354 = vlaneseq
        %v355 = vshrl.u32 %v354, 7
        %v356 = vsub.s32 0, %v355
        %v357 = vrot.slane %v352, %v356
        %v391 = vunpack.c.l.b16 %v320
        %v392 = vunpack.c.l.b16 %v321
        %v393 = vunpack.c.l.b16 %v322
        %v394 = vunpack.c.l.b16 %v323
        %v395 = vunpack.c.l.b16 %v324
        %v396 = vunpack.c.l.b16 %v325
        %v397 = vunpack.c.l.b16 %v326
        %v398 = vunpack.c.l.b16 %v327
        %v399 = vunpack.c.l.b16 %v328
        %v400 = vunpack.c.l.b16 %v329
        %v401 = vunpack.c.l.b16 %v330
        %v402 = vunpack.c.l.b16 %v331
        %v403 = vunpack.c.l.b16 %v332
        %v404 = vunpack.c.l.b16 %v333
        %v405 = vunpack.c.l.b16 %v334
        %v406 = vunpack.c.l.b16 %v335
        %v407 = vunpack.c.l.b16 %v336
        %v408 = vunpack.c.l.b16 %v337
        %v409 = vunpack.c.l.b16 %v338
        %v410 = vunpack.c.l.b16 %v339
        %v411 = vunpack.c.l.b16 %v340
        %v412 = vunpack.c.l.b16 %v341
        %v413 = vunpack.c.l.b16 %v342
        %v414 = vunpack.c.l.b16 %v343
        %v415 = vunpack.c.l.b16 %v344
        %v416 = vunpack.c.l.b16 %v345
        %v417 = vunpack.c.l.b16 %v346
        %v418 = vunpack.c.l.b16 %v347
        %v419 = vunpack.c.l.b16 %v348
        %v420 = vunpack.c.l.b16 %v349
        %v421 = vunpack.c.l.b16 %v350
        %v422 = vunpack.c.l.b16 %v351
        %v423 = vpack.c.b16 %v392, %v391
        %v424 = vpack.c.b16 %v394, %v393
        %v425 = vpack.c.b16 %v396, %v395
        %v426 = vpack.c.b16 %v398, %v397
        %v427 = vpack.c.b16 %v400, %v399
        %v428 = vpack.c.b16 %v402, %v401
        %v429 = vpack.c.b16 %v404, %v403
        %v430 = vpack.c.b16 %v406, %v405
        %v431 = vpack.c.b16 %v408, %v407
        %v432 = vpack.c.b16 %v410, %v409
        %v433 = vpack.c.b16 %v412, %v411
        %v434 = vpack.c.b16 %v414, %v413
        %v435 = vpack.c.b16 %v416, %v415
        %v436 = vpack.c.b16 %v418, %v417
        %v437 = vpack.c.b16 %v420, %v419
        %v438 = vpack.c.b16 %v422, %v421
        %455 = vmatprep.subr.bf16.mxu0 0
        %456 = vmatpush1.bf16.msra.mxu0 %v423
        %457 = vmatprep.subr.bf16.mxu0 0
        %458 = vmatpush1.bf16.msra.mxu0 %v424
        %459 = vmatprep.subr.bf16.mxu0 0
        %460 = vmatpush1.bf16.msra.mxu0 %v425
        %461 = vmatprep.subr.bf16.mxu0 0
        %462 = vmatpush1.bf16.msra.mxu0 %v426
        %463 = vmatprep.subr.bf16.mxu0 0
        %464 = vmatpush1.bf16.msra.mxu0 %v427
        %465 = vmatprep.subr.bf16.mxu0 0
        %466 = vmatpush1.bf16.msra.mxu0 %v428
        %467 = vmatprep.subr.bf16.mxu0 0
        %468 = vmatpush1.bf16.msra.mxu0 %v429
        %469 = vmatprep.subr.bf16.mxu0 0
        %470 = vmatpush1.bf16.msra.mxu0 %v430
        %471 = vmatprep.subr.bf16.mxu0 0
        %472 = vmatpush1.bf16.msra.mxu0 %v431
        %473 = vmatprep.subr.bf16.mxu0 0
        %474 = vmatpush1.bf16.msra.mxu0 %v432
        %475 = vmatprep.subr.bf16.mxu0 0
        %476 = vmatpush1.bf16.msra.mxu0 %v433
        %477 = vmatprep.subr.bf16.mxu0 0
        %478 = vmatpush1.bf16.msra.mxu0 %v434
        %479 = vmatprep.subr.bf16.mxu0 0
        %480 = vmatpush1.bf16.msra.mxu0 %v435
        %481 = vmatprep.subr.bf16.mxu0 0
        %482 = vmatpush1.bf16.msra.mxu0 %v436
        %483 = vmatprep.subr.bf16.mxu0 0
        %484 = vmatpush1.bf16.msra.mxu0 %v437
        %485 = vmatprep.subr.bf16.mxu0 0
        %486 = vmatpush1.bf16.msra.mxu0 %v438
        %487 = vmatprep.mubr.bf16.mxu0 %v289
        %488 = vmatmul.mubr.bf16.gmra.mrb[0].mxu0 %v288
        %v489 = vpop.f32.mrb[0].mxu0
        %v490 = vadd.f32 %v357, %v489
        %v491 = vpop.f32.mrb[0].mxu0
        %v492 = vpop.f32.mrb[0].mxu0
        %v493 = vadd.f32 %v357, %v492
        %v494 = vpop.f32.mrb[0].mxu0
        %495 = vmatprep.mubr.bf16.mxu0 %v291
        %496 = vmatmul.mubr.bf16.gmra.mrb[0].mxu0 %v290
        %v497 = vpop.f32.mrb[0].mxu0
        %v498 = vadd.f32 %v357, %v497
        %v499 = vpop.f32.mrb[0].mxu0
        %v500 = vpop.f32.mrb[0].mxu0
        %v501 = vadd.f32 %v357, %v500
        %v502 = vpop.f32.mrb[0].mxu0
        %503 = vmatprep.mubr.bf16.mxu0 %v293
        %504 = vmatmul.mubr.bf16.gmra.mrb[0].mxu0 %v292
        %v505 = vpop.f32.mrb[0].mxu0
        %v506 = vadd.f32 %v357, %v505
        %v507 = vpop.f32.mrb[0].mxu0
        %v508 = vpop.f32.mrb[0].mxu0
        %v509 = vadd.f32 %v357, %v508
        %v510 = vpop.f32.mrb[0].mxu0
        %511 = vmatprep.mubr.bf16.mxu0 %v295
        %512 = vmatmul.mubr.bf16.gmra.mrb[0].mxu0 %v294
        %v513 = vpop.f32.mrb[0].mxu0
        %v514 = vadd.f32 %v357, %v513
        %v515 = vpop.f32.mrb[0].mxu0
        %v516 = vpop.f32.mrb[0].mxu0
        %v517 = vadd.f32 %v357, %v516
        %v518 = vpop.f32.mrb[0].mxu0
        %519 = vmatprep.mubr.bf16.mxu0 %v297
        %520 = vmatmul.mubr.bf16.gmra.mrb[0].mxu0 %v296
        %v521 = vpop.f32.mrb[0].mxu0
        %v522 = vadd.f32 %v357, %v521
        %v523 = vpop.f32.mrb[0].mxu0
        %v524 = vpop.f32.mrb[0].mxu0
        %v525 = vadd.f32 %v357, %v524
        %v526 = vpop.f32.mrb[0].mxu0
        %527 = vmatprep.mubr.bf16.mxu0 %v299
        %528 = vmatmul.mubr.bf16.gmra.mrb[0].mxu0 %v298
        %v529 = vpop.f32.mrb[0].mxu0
        %v530 = vadd.f32 %v357, %v529
        %v531 = vpop.f32.mrb[0].mxu0
        %v532 = vpop.f32.mrb[0].mxu0
        %v533 = vadd.f32 %v357, %v532
        %v534 = vpop.f32.mrb[0].mxu0
        %535 = vmatprep.mubr.bf16.mxu0 %v301
        %536 = vmatmul.mubr.bf16.gmra.mrb[0].mxu0 %v300
        %v537 = vpop.f32.mrb[0].mxu0
        %v538 = vadd.f32 %v357, %v537
        %v539 = vpop.f32.mrb[0].mxu0
        %v540 = vpop.f32.mrb[0].mxu0
        %v541 = vadd.f32 %v357, %v540
        %v542 = vpop.f32.mrb[0].mxu0
        %543 = vmatprep.mubr.bf16.mxu0 %v303
        %544 = vmatmul.mubr.bf16.gmra.mrb[0].mxu0 %v302
        %v545 = vpop.f32.mrb[0].mxu0
        %v546 = vadd.f32 %v357, %v545
        %v547 = vpop.f32.mrb[0].mxu0
        %v548 = vpop.f32.mrb[0].mxu0
        %v549 = vadd.f32 %v357, %v548
        %v550 = vpop.f32.mrb[0].mxu0
        %551 = vmatprep.mubr.bf16.mxu0 %v305
        %552 = vmatmul.mubr.bf16.gmra.mrb[0].mxu0 %v304
        %v553 = vpop.f32.mrb[0].mxu0
        %v554 = vadd.f32 %v357, %v553
        %v555 = vpop.f32.mrb[0].mxu0
        %v556 = vpop.f32.mrb[0].mxu0
        %v557 = vadd.f32 %v357, %v556
        %v558 = vpop.f32.mrb[0].mxu0
        %559 = vmatprep.mubr.bf16.mxu0 %v307
        %560 = vmatmul.mubr.bf16.gmra.mrb[0].mxu0 %v306
        %v561 = vpop.f32.mrb[0].mxu0
        %v562 = vadd.f32 %v357, %v561
        %v563 = vpop.f32.mrb[0].mxu0
        %v564 = vpop.f32.mrb[0].mxu0
        %v565 = vadd.f32 %v357, %v564
        %v566 = vpop.f32.mrb[0].mxu0
        %567 = vmatprep.mubr.bf16.mxu0 %v309
        %568 = vmatmul.mubr.bf16.gmra.mrb[0].mxu0 %v308
        %v569 = vpop.f32.mrb[0].mxu0
        %v570 = vadd.f32 %v357, %v569
        %v571 = vpop.f32.mrb[0].mxu0
        %v572 = vpop.f32.mrb[0].mxu0
        %v573 = vadd.f32 %v357, %v572
        %v574 = vpop.f32.mrb[0].mxu0
        %575 = vmatprep.mubr.bf16.mxu0 %v311
        %576 = vmatmul.mubr.bf16.gmra.mrb[0].mxu0 %v310
        %v577 = vpop.f32.mrb[0].mxu0
        %v578 = vadd.f32 %v357, %v577
        %v579 = vpop.f32.mrb[0].mxu0
        %v580 = vpop.f32.mrb[0].mxu0
        %v581 = vadd.f32 %v357, %v580
        %v582 = vpop.f32.mrb[0].mxu0
        %583 = vmatprep.mubr.bf16.mxu0 %v313
        %584 = vmatmul.mubr.bf16.gmra.mrb[0].mxu0 %v312
        %v585 = vpop.f32.mrb[0].mxu0
        %v586 = vadd.f32 %v357, %v585
        %v587 = vpop.f32.mrb[0].mxu0
        %v588 = vpop.f32.mrb[0].mxu0
        %v589 = vadd.f32 %v357, %v588
        %v590 = vpop.f32.mrb[0].mxu0
        %591 = vmatprep.mubr.bf16.mxu0 %v315
        %592 = vmatmul.mubr.bf16.gmra.mrb[0].mxu0 %v314
        %v593 = vpop.f32.mrb[0].mxu0
        %v594 = vadd.f32 %v357, %v593
        %v595 = vpop.f32.mrb[0].mxu0
        %v596 = vpop.f32.mrb[0].mxu0
        %v597 = vadd.f32 %v357, %v596
        %v598 = vpop.f32.mrb[0].mxu0
        %599 = vmatprep.mubr.bf16.mxu0 %v317
        %600 = vmatmul.mubr.bf16.gmra.mrb[0].mxu0 %v316
        %v601 = vpop.f32.mrb[0].mxu0
        %v602 = vadd.f32 %v357, %v601
        %v603 = vpop.f32.mrb[0].mxu0
        %v604 = vpop.f32.mrb[0].mxu0
        %v605 = vadd.f32 %v357, %v604
        %v606 = vpop.f32.mrb[0].mxu0
        %607 = vmatprep.mubr.bf16.mxu0 %v319
        %608 = vmatmul.mubr.bf16.gmra.mrb[0].mxu0 %v318
        %v609 = vpop.f32.mrb[0].mxu0
        %v610 = vadd.f32 %v357, %v609
        %v611 = vpop.f32.mrb[0].mxu0
        %v612 = vpop.f32.mrb[0].mxu0
        %v613 = vadd.f32 %v357, %v612
        %v614 = vpop.f32.mrb[0].mxu0
        %615 = vdwg.mxu0
        %v616 = vxor.u32 %v490, 2147483648
        %v617 = vxor.u32 %v493, 2147483648
        %v618 = vxor.u32 %v498, 2147483648
        %v619 = vxor.u32 %v501, 2147483648
        %v620 = vxor.u32 %v506, 2147483648
        %v621 = vxor.u32 %v509, 2147483648
        %v622 = vxor.u32 %v514, 2147483648
        %v623 = vxor.u32 %v517, 2147483648
        %v624 = vxor.u32 %v522, 2147483648
        %v625 = vxor.u32 %v525, 2147483648
        %v626 = vxor.u32 %v530, 2147483648
        %v627 = vxor.u32 %v533, 2147483648
        %v628 = vxor.u32 %v538, 2147483648
        %v629 = vxor.u32 %v541, 2147483648
        %v630 = vxor.u32 %v546, 2147483648
        %v631 = vxor.u32 %v549, 2147483648
        %v632 = vxor.u32 %v554, 2147483648
        %v633 = vxor.u32 %v557, 2147483648
        %v634 = vxor.u32 %v562, 2147483648
        %v635 = vxor.u32 %v565, 2147483648
        %v636 = vxor.u32 %v570, 2147483648
        %v637 = vxor.u32 %v573, 2147483648
        %v638 = vxor.u32 %v578, 2147483648
        %v639 = vxor.u32 %v581, 2147483648
        %v640 = vxor.u32 %v586, 2147483648
        %v641 = vxor.u32 %v589, 2147483648
        %v642 = vxor.u32 %v594, 2147483648
        %v643 = vxor.u32 %v597, 2147483648
        %v644 = vxor.u32 %v602, 2147483648
        %v645 = vxor.u32 %v605, 2147483648
        %v646 = vxor.u32 %v610, 2147483648
        %v647 = vxor.u32 %v613, 2147483648
        %v648 = vmul.f32 %v616, 1.442695
        %v649 = vpow.pop %v648
        %v650 = vmul.f32 %v617, 1.442695
        %v651 = vpow.pop %v650
        %v652 = vmul.f32 %v618, 1.442695
        %v653 = vpow.pop %v652
        %v654 = vmul.f32 %v619, 1.442695
        %v655 = vpow.pop %v654
        %v656 = vmul.f32 %v620, 1.442695
        %v657 = vpow.pop %v656
        %v658 = vmul.f32 %v621, 1.442695
        %v659 = vpow.pop %v658
        %v660 = vmul.f32 %v622, 1.442695
        %v661 = vpow.pop %v660
        %v662 = vmul.f32 %v623, 1.442695
        %v663 = vpow.pop %v662
        %v664 = vmul.f32 %v624, 1.442695
        %v665 = vpow.pop %v664
        %v666 = vmul.f32 %v625, 1.442695
        %v667 = vpow.pop %v666
        %v668 = vmul.f32 %v626, 1.442695
        %v669 = vpow.pop %v668
        %v670 = vmul.f32 %v627, 1.442695
        %v671 = vpow.pop %v670
        %v672 = vmul.f32 %v628, 1.442695
        %v673 = vpow.pop %v672
        %v674 = vmul.f32 %v629, 1.442695
        %v675 = vpow.pop %v674
        %v676 = vmul.f32 %v630, 1.442695
        %v677 = vpow.pop %v676
        %v678 = vmul.f32 %v631, 1.442695
        %v679 = vpow.pop %v678
        %v680 = vmul.f32 %v632, 1.442695
        %v681 = vpow.pop %v680
        %v682 = vmul.f32 %v633, 1.442695
        %v683 = vpow.pop %v682
        %v684 = vmul.f32 %v634, 1.442695
        %v685 = vpow.pop %v684
        %v686 = vmul.f32 %v635, 1.442695
        %v687 = vpow.pop %v686
        %v688 = vmul.f32 %v636, 1.442695
        %v689 = vpow.pop %v688
        %v690 = vmul.f32 %v637, 1.442695
        %v691 = vpow.pop %v690
        %v692 = vmul.f32 %v638, 1.442695
        %v693 = vpow.pop %v692
        %v694 = vmul.f32 %v639, 1.442695
        %v695 = vpow.pop %v694
        %v696 = vmul.f32 %v640, 1.442695
        %v697 = vpow.pop %v696
        %v698 = vmul.f32 %v641, 1.442695
        %v699 = vpow.pop %v698
        %v700 = vmul.f32 %v642, 1.442695
        %v701 = vpow.pop %v700
        %v702 = vmul.f32 %v643, 1.442695
        %v703 = vpow.pop %v702
        %v704 = vmul.f32 %v644, 1.442695
        %v705 = vpow.pop %v704
        %v706 = vmul.f32 %v645, 1.442695
        %v707 = vpow.pop %v706
        %v708 = vmul.f32 %v646, 1.442695
        %v709 = vpow.pop %v708
        %v710 = vmul.f32 %v647, 1.442695
        %v711 = vpow.pop %v710
        %v712 = vadd.f32 %v649, 1.0
        %v713 = vadd.f32 %v651, 1.0
        %v714 = vadd.f32 %v653, 1.0
        %v715 = vadd.f32 %v655, 1.0
        %v716 = vadd.f32 %v657, 1.0
        %v717 = vadd.f32 %v659, 1.0
        %v718 = vadd.f32 %v661, 1.0
        %v719 = vadd.f32 %v663, 1.0
        %v720 = vadd.f32 %v665, 1.0
        %v721 = vadd.f32 %v667, 1.0
        %v722 = vadd.f32 %v669, 1.0
        %v723 = vadd.f32 %v671, 1.0
        %v724 = vadd.f32 %v673, 1.0
        %v725 = vadd.f32 %v675, 1.0
        %v726 = vadd.f32 %v677, 1.0
        %v727 = vadd.f32 %v679, 1.0
        %v728 = vadd.f32 %v681, 1.0
        %v729 = vadd.f32 %v683, 1.0
        %v730 = vadd.f32 %v685, 1.0
        %v731 = vadd.f32 %v687, 1.0
        %v732 = vadd.f32 %v689, 1.0
        %v733 = vadd.f32 %v691, 1.0
        %v734 = vadd.f32 %v693, 1.0
        %v735 = vadd.f32 %v695, 1.0
        %v736 = vadd.f32 %v697, 1.0
        %v737 = vadd.f32 %v699, 1.0
        %v738 = vadd.f32 %v701, 1.0
        %v739 = vadd.f32 %v703, 1.0
        %v740 = vadd.f32 %v705, 1.0
        %v741 = vadd.f32 %v707, 1.0
        %v742 = vadd.f32 %v709, 1.0
        %v743 = vadd.f32 %v711, 1.0
        %v744 = vrcp.pop %v712
        %v745 = vmul.f32 1.0, %v744
        %v746 = vrcp.pop %v713
        %v747 = vmul.f32 1.0, %v746
        %v748 = vrcp.pop %v714
        %v749 = vmul.f32 1.0, %v748
        %v750 = vrcp.pop %v715
        %v751 = vmul.f32 1.0, %v750
        %v752 = vrcp.pop %v716
        %v753 = vmul.f32 1.0, %v752
        %v754 = vrcp.pop %v717
        %v755 = vmul.f32 1.0, %v754
        %v756 = vrcp.pop %v718
        %v757 = vmul.f32 1.0, %v756
        %v758 = vrcp.pop %v719
        %v759 = vmul.f32 1.0, %v758
        %v760 = vrcp.pop %v720
        %v761 = vmul.f32 1.0, %v760
        %v762 = vrcp.pop %v721
        %v763 = vmul.f32 1.0, %v762
        %v764 = vrcp.pop %v722
        %v765 = vmul.f32 1.0, %v764
        %v766 = vrcp.pop %v723
        %v767 = vmul.f32 1.0, %v766
        %v768 = vrcp.pop %v724
        %v769 = vmul.f32 1.0, %v768
        %v770 = vrcp.pop %v725
        %v771 = vmul.f32 1.0, %v770
        %v772 = vrcp.pop %v726
        %v773 = vmul.f32 1.0, %v772
        %v774 = vrcp.pop %v727
        %v775 = vmul.f32 1.0, %v774
        %v776 = vrcp.pop %v728
        %v777 = vmul.f32 1.0, %v776
        %v778 = vrcp.pop %v729
        %v779 = vmul.f32 1.0, %v778
        %v780 = vrcp.pop %v730
        %v781 = vmul.f32 1.0, %v780
        %v782 = vrcp.pop %v731
        %v783 = vmul.f32 1.0, %v782
        %v784 = vrcp.pop %v732
        %v785 = vmul.f32 1.0, %v784
        %v786 = vrcp.pop %v733
        %v787 = vmul.f32 1.0, %v786
        %v788 = vrcp.pop %v734
        %v789 = vmul.f32 1.0, %v788
        %v790 = vrcp.pop %v735
        %v791 = vmul.f32 1.0, %v790
        %v792 = vrcp.pop %v736
        %v793 = vmul.f32 1.0, %v792
        %v794 = vrcp.pop %v737
        %v795 = vmul.f32 1.0, %v794
        %v796 = vrcp.pop %v738
        %v797 = vmul.f32 1.0, %v796
        %v798 = vrcp.pop %v739
        %v799 = vmul.f32 1.0, %v798
        %v800 = vrcp.pop %v740
        %v801 = vmul.f32 1.0, %v800
        %v802 = vrcp.pop %v741
        %v803 = vmul.f32 1.0, %v802
        %v804 = vrcp.pop %v742
        %v805 = vmul.f32 1.0, %v804
        %v806 = vrcp.pop %v743
        %v807 = vmul.f32 1.0, %v806
        %v808 = vmul.f32 %v490, %v745
        %v809 = vmul.f32 %v493, %v747
        %v810 = vmul.f32 %v498, %v749
        %v811 = vmul.f32 %v501, %v751
        %v812 = vmul.f32 %v506, %v753
        %v813 = vmul.f32 %v509, %v755
        %v814 = vmul.f32 %v514, %v757
        %v815 = vmul.f32 %v517, %v759
        %v816 = vmul.f32 %v522, %v761
        %v817 = vmul.f32 %v525, %v763
        %v818 = vmul.f32 %v530, %v765
        %v819 = vmul.f32 %v533, %v767
        %v820 = vmul.f32 %v538, %v769
        %v821 = vmul.f32 %v541, %v771
        %v822 = vmul.f32 %v546, %v773
        %v823 = vmul.f32 %v549, %v775
        %v824 = vmul.f32 %v554, %v777
        %v825 = vmul.f32 %v557, %v779
        %v826 = vmul.f32 %v562, %v781
        %v827 = vmul.f32 %v565, %v783
        %v828 = vmul.f32 %v570, %v785
        %v829 = vmul.f32 %v573, %v787
        %v830 = vmul.f32 %v578, %v789
        %v831 = vmul.f32 %v581, %v791
        %v832 = vmul.f32 %v586, %v793
        %v833 = vmul.f32 %v589, %v795
        %v834 = vmul.f32 %v594, %v797
        %v835 = vmul.f32 %v597, %v799
        %v836 = vmul.f32 %v602, %v801
        %v837 = vmul.f32 %v605, %v803
        %v838 = vmul.f32 %v610, %v805
        %v839 = vmul.f32 %v613, %v807
        %v840 = vpack.c.bf16 %v809, %v808
        %v841 = vpack.c.bf16 %v811, %v810
        %v842 = vpack.c.bf16 %v813, %v812
        %v843 = vpack.c.bf16 %v815, %v814
        %v844 = vpack.c.bf16 %v817, %v816
        %v845 = vpack.c.bf16 %v819, %v818
        %v846 = vpack.c.bf16 %v821, %v820
        %v847 = vpack.c.bf16 %v823, %v822
        %v848 = vpack.c.bf16 %v825, %v824
        %v849 = vpack.c.bf16 %v827, %v826
        %v850 = vpack.c.bf16 %v829, %v828
        %v851 = vpack.c.bf16 %v831, %v830
        %v852 = vpack.c.bf16 %v833, %v832
        %v853 = vpack.c.bf16 %v835, %v834
        %v854 = vpack.c.bf16 %v837, %v836
        %v855 = vpack.c.bf16 %v839, %v838
        %v856 = vld [vmem:[%s3] sm:$0xff]
        %v857 = vld [vmem:[%s3 + $0x8] sm:$0xff]
        %v858 = vld [vmem:[%s3 + $0x10] sm:$0xff]
        %v859 = vld [vmem:[%s3 + $0x18] sm:$0xff]
        %v860 = vld [vmem:[%s3 + $0x20] sm:$0xff]
        %v861 = vld [vmem:[%s3 + $0x28] sm:$0xff]
        %v862 = vld [vmem:[%s3 + $0x30] sm:$0xff]
        %v863 = vld [vmem:[%s3 + $0x38] sm:$0xff]
        %v864 = vld [vmem:[%s3 + $0x40] sm:$0xff]
        %v865 = vld [vmem:[%s3 + $0x48] sm:$0xff]
        %v866 = vld [vmem:[%s3 + $0x50] sm:$0xff]
        %v867 = vld [vmem:[%s3 + $0x58] sm:$0xff]
        %v868 = vld [vmem:[%s3 + $0x60] sm:$0xff]
        %v869 = vld [vmem:[%s3 + $0x68] sm:$0xff]
        %v870 = vld [vmem:[%s3 + $0x70] sm:$0xff]
        %v871 = vld [vmem:[%s3 + $0x78] sm:$0xff]
        %v872 = vmax.f32 %v808, %v810
        %v873 = vmax.f32 %v809, %v811
        %v874 = vmax.f32 %v810, %v812
        %v875 = vmax.f32 %v811, %v813
        %v876 = vmax.f32 %v812, %v814
        %v877 = vmax.f32 %v813, %v815
        %v878 = vmax.f32 %v814, %v816
        %v879 = vmax.f32 %v815, %v817
        %v880 = vmax.f32 %v816, %v818
        %v881 = vmax.f32 %v817, %v819
        %v882 = vmax.f32 %v818, %v820
        %v883 = vmax.f32 %v819, %v821
        %v884 = vmax.f32 %v820, %v822
        %v885 = vmax.f32 %v821, %v823
        %v886 = vmax.f32 %v822, %v824
        %v887 = vmax.f32 %v823, %v825
        %v888 = vmax.f32 %v824, %v826
        %v889 = vmax.f32 %v825, %v827
        %v890 = vmax.f32 %v826, %v828
        %v891 = vmax.f32 %v827, %v829
        %v892 = vmax.f32 %v828, %v830
        %v893 = vmax.f32 %v829, %v831
        %v894 = vmax.f32 %v830, %v832
        %v895 = vmax.f32 %v831, %v833
        %v896 = vmax.f32 %v832, %v834
        %v897 = vmax.f32 %v833, %v835
        %v898 = vmax.f32 %v834, %v836
        %v899 = vmax.f32 %v835, %v837
        %v900 = vmax.f32 %v872, %v812
        %v901 = vmax.f32 %v873, %v813
        %v902 = vmax.f32 %v874, %v814
        %v903 = vmax.f32 %v875, %v815
        %v904 = vmax.f32 %v876, %v816
        %v905 = vmax.f32 %v877, %v817
        %v906 = vmax.f32 %v878, %v818
        %v907 = vmax.f32 %v879, %v819
        %v908 = vmax.f32 %v880, %v820
        %v909 = vmax.f32 %v881, %v821
        %v910 = vmax.f32 %v882, %v822
        %v911 = vmax.f32 %v883, %v823
        %v912 = vmax.f32 %v884, %v824
        %v913 = vmax.f32 %v885, %v825
        %v914 = vmax.f32 %v886, %v826
        %v915 = vmax.f32 %v887, %v827
        %v916 = vmax.f32 %v888, %v828
        %v917 = vmax.f32 %v889, %v829
        %v918 = vmax.f32 %v890, %v830
        %v919 = vmax.f32 %v891, %v831
        %v920 = vmax.f32 %v892, %v832
        %v921 = vmax.f32 %v893, %v833
        %v922 = vmax.f32 %v894, %v834
        %v923 = vmax.f32 %v895, %v835
        %v924 = vmax.f32 %v896, %v836
        %v925 = vmax.f32 %v897, %v837
        %v926 = vmax.f32 %v898, %v838
        %v927 = vmax.f32 %v899, %v839
        %v928 = vmax.f32 %v900, %v814
        %v929 = vmax.f32 %v901, %v815
        %v930 = vmax.f32 %v902, %v816
        %v931 = vmax.f32 %v903, %v817
        %v932 = vmax.f32 %v904, %v818
        %v933 = vmax.f32 %v905, %v819
        %v934 = vmax.f32 %v906, %v820
        %v935 = vmax.f32 %v907, %v821
        %v936 = vmax.f32 %v908, %v822
        %v937 = vmax.f32 %v909, %v823
        %v938 = vmax.f32 %v910, %v824
        %v939 = vmax.f32 %v911, %v825
        %v940 = vmax.f32 %v912, %v826
        %v941 = vmax.f32 %v913, %v827
        %v942 = vmax.f32 %v914, %v828
        %v943 = vmax.f32 %v915, %v829
        %v944 = vmax.f32 %v916, %v830
        %v945 = vmax.f32 %v917, %v831
        %v946 = vmax.f32 %v918, %v832
        %v947 = vmax.f32 %v919, %v833
        %v948 = vmax.f32 %v920, %v834
        %v949 = vmax.f32 %v921, %v835
        %v950 = vmax.f32 %v922, %v836
        %v951 = vmax.f32 %v923, %v837
        %v952 = vmax.f32 %v924, %v838
        %v953 = vmax.f32 %v925, %v839
        %v954 = vmax.f32 %v928, %v816
        %v955 = vmax.f32 %v929, %v817
        %v956 = vmax.f32 %v930, %v818
        %v957 = vmax.f32 %v931, %v819
        %v958 = vmax.f32 %v932, %v820
        %v959 = vmax.f32 %v933, %v821
        %v960 = vmax.f32 %v934, %v822
        %v961 = vmax.f32 %v935, %v823
        %v962 = vmax.f32 %v936, %v824
        %v963 = vmax.f32 %v937, %v825
        %v964 = vmax.f32 %v938, %v826
        %v965 = vmax.f32 %v939, %v827
        %v966 = vmax.f32 %v940, %v828
        %v967 = vmax.f32 %v941, %v829
        %v968 = vmax.f32 %v942, %v830
        %v969 = vmax.f32 %v943, %v831
        %v970 = vmax.f32 %v944, %v832
        %v971 = vmax.f32 %v945, %v833
        %v972 = vmax.f32 %v946, %v834
        %v973 = vmax.f32 %v947, %v835
        %v974 = vmax.f32 %v948, %v836
        %v975 = vmax.f32 %v949, %v837
        %v976 = vmax.f32 %v950, %v838
        %v977 = vmax.f32 %v951, %v839
        %vm1010 = vcmask 1041408
        %v1011 = vrot.slane %v900, 6
        %v1012 = vrot.slane %v901, 6
        %v1013 = vsel %vm1010, %v1011, %v1012
        %v1014 = vrot.slane %v928, 6
        %v1015 = vrot.slane %v929, 6
        %v1016 = vsel %vm1010, %v1014, %v1015
        %v1017 = vrot.slane %v954, 6
        %v1018 = vrot.slane %v955, 6
        %v1019 = vsel %vm1010, %v1017, %v1018
        %v1020 = vrot.slane %v956, 6
        %v1021 = vrot.slane %v957, 6
        %v1022 = vsel %vm1010, %v1020, %v1021
        %v1023 = vrot.slane %v958, 6
        %v1024 = vrot.slane %v959, 6
        %v1025 = vsel %vm1010, %v1023, %v1024
        %v1026 = vrot.slane %v960, 6
        %v1027 = vrot.slane %v961, 6
        %v1028 = vsel %vm1010, %v1026, %v1027
        %v1029 = vrot.slane %v962, 6
        %v1030 = vrot.slane %v963, 6
        %v1031 = vsel %vm1010, %v1029, %v1030
        %v1032 = vrot.slane %v964, 6
        %v1033 = vrot.slane %v965, 6
        %v1034 = vsel %vm1010, %v1032, %v1033
        %v1035 = vrot.slane %v966, 6
        %v1036 = vrot.slane %v967, 6
        %v1037 = vsel %vm1010, %v1035, %v1036
        %v1038 = vrot.slane %v968, 6
        %v1039 = vrot.slane %v969, 6
        %v1040 = vsel %vm1010, %v1038, %v1039
        %v1041 = vrot.slane %v970, 6
        %v1042 = vrot.slane %v971, 6
        %v1043 = vsel %vm1010, %v1041, %v1042
        %v1044 = vrot.slane %v972, 6
        %v1045 = vrot.slane %v973, 6
        %v1046 = vsel %vm1010, %v1044, %v1045
        %v1047 = vrot.slane %v974, 6
        %v1048 = vrot.slane %v975, 6
        %v1049 = vsel %vm1010, %v1047, %v1048
        %v1050 = vrot.slane %v976, 6
        %v1051 = vrot.slane %v977, 6
        %v1052 = vsel %vm1010, %v1050, %v1051
        %v1053 = vrot.slane %v952, 6
        %v1054 = vrot.slane %v953, 6
        %v1055 = vsel %vm1010, %v1053, %v1054
        %v1056 = vrot.slane %v926, 6
        %v1057 = vrot.slane %v927, 6
        %v1058 = vsel %vm1010, %v1056, %v1057
        %v1107 = vsel %vm1010, -inf, %v1011
        %v1108 = vsel %vm1010, -inf, %v1014
        %v1109 = vsel %vm1010, -inf, %v1017
        %v1110 = vsel %vm1010, -inf, %v1020
        %v1111 = vsel %vm1010, -inf, %v1023
        %v1112 = vsel %vm1010, -inf, %v1026
        %v1113 = vsel %vm1010, -inf, %v1029
        %v1114 = vsel %vm1010, -inf, %v1032
        %v1115 = vsel %vm1010, -inf, %v1035
        %v1116 = vsel %vm1010, -inf, %v1038
        %v1117 = vsel %vm1010, -inf, %v1041
        %v1118 = vsel %vm1010, -inf, %v1044
        %v1119 = vsel %vm1010, -inf, %v1047
        %v1120 = vsel %vm1010, -inf, %v1050
        %v1121 = vsel %vm1010, -inf, %v1053
        %v1122 = vsel %vm1010, -inf, %v1056
        %v1123 = vsel %vm1010, %v1012, -inf
        %v1124 = vsel %vm1010, %v1015, -inf
        %v1125 = vsel %vm1010, %v1018, -inf
        %v1126 = vsel %vm1010, %v1021, -inf
        %v1127 = vsel %vm1010, %v1024, -inf
        %v1128 = vsel %vm1010, %v1027, -inf
        %v1129 = vsel %vm1010, %v1030, -inf
        %v1130 = vsel %vm1010, %v1033, -inf
        %v1131 = vsel %vm1010, %v1036, -inf
        %v1132 = vsel %vm1010, %v1039, -inf
        %v1133 = vsel %vm1010, %v1042, -inf
        %v1134 = vsel %vm1010, %v1045, -inf
        %v1135 = vsel %vm1010, %v1048, -inf
        %v1136 = vsel %vm1010, %v1051, -inf
        %v1137 = vsel %vm1010, %v1054, -inf
        %v1138 = vsel %vm1010, %v1057, -inf
        %vm1171 = vcmask 1046528
        %v1172 = vrot.slane %v1107, 1
        %v1173 = vrot.slane %v1013, 1
        %v1174 = vsel %vm1171, %v1172, %v1173
        %v1175 = vrot.slane %v1123, 1
        %v1176 = vsel %vm1171, %v1173, %v1175
        %v1177 = vrot.slane %v1108, 1
        %v1178 = vrot.slane %v1016, 1
        %v1179 = vsel %vm1171, %v1177, %v1178
        %v1180 = vrot.slane %v1124, 1
        %v1181 = vsel %vm1171, %v1178, %v1180
        %v1182 = vrot.slane %v1109, 1
        %v1183 = vrot.slane %v1019, 1
        %v1184 = vsel %vm1171, %v1182, %v1183
        %v1185 = vrot.slane %v1125, 1
        %v1186 = vsel %vm1171, %v1183, %v1185
        %v1187 = vrot.slane %v1110, 1
        %v1188 = vrot.slane %v1022, 1
        %v1189 = vsel %vm1171, %v1187, %v1188
        %v1190 = vrot.slane %v1126, 1
        %v1191 = vsel %vm1171, %v1188, %v1190
        %v1192 = vrot.slane %v1111, 1
        %v1193 = vrot.slane %v1025, 1
        %v1194 = vsel %vm1171, %v1192, %v1193
        %v1195 = vrot.slane %v1127, 1
        %v1196 = vsel %vm1171, %v1193, %v1195
        %v1197 = vrot.slane %v1112, 1
        %v1198 = vrot.slane %v1028, 1
        %v1199 = vsel %vm1171, %v1197, %v1198
        %v1200 = vrot.slane %v1128, 1
        %v1201 = vsel %vm1171, %v1198, %v1200
        %v1202 = vrot.slane %v1113, 1
        %v1203 = vrot.slane %v1031, 1
        %v1204 = vsel %vm1171, %v1202, %v1203
        %v1205 = vrot.slane %v1129, 1
        %v1206 = vsel %vm1171, %v1203, %v1205
        %v1207 = vrot.slane %v1114, 1
        %v1208 = vrot.slane %v1034, 1
        %v1209 = vsel %vm1171, %v1207, %v1208
        %v1210 = vrot.slane %v1130, 1
        %v1211 = vsel %vm1171, %v1208, %v1210
        %v1212 = vrot.slane %v1115, 1
        %v1213 = vrot.slane %v1037, 1
        %v1214 = vsel %vm1171, %v1212, %v1213
        %v1215 = vrot.slane %v1131, 1
        %v1216 = vsel %vm1171, %v1213, %v1215
        %v1217 = vrot.slane %v1116, 1
        %v1218 = vrot.slane %v1040, 1
        %v1219 = vsel %vm1171, %v1217, %v1218
        %v1220 = vrot.slane %v1132, 1
        %v1221 = vsel %vm1171, %v1218, %v1220
        %v1222 = vrot.slane %v1117, 1
        %v1223 = vrot.slane %v1043, 1
        %v1224 = vsel %vm1171, %v1222, %v1223
        %v1225 = vrot.slane %v1133, 1
        %v1226 = vsel %vm1171, %v1223, %v1225
        %v1227 = vrot.slane %v1118, 1
        %v1228 = vrot.slane %v1046, 1
        %v1229 = vsel %vm1171, %v1227, %v1228
        %v1230 = vrot.slane %v1134, 1
        %v1231 = vsel %vm1171, %v1228, %v1230
        %v1232 = vrot.slane %v1119, 1
        %v1233 = vrot.slane %v1049, 1
        %v1234 = vsel %vm1171, %v1232, %v1233
        %v1235 = vrot.slane %v1135, 1
        %v1236 = vsel %vm1171, %v1233, %v1235
        %v1237 = vrot.slane %v1120, 1
        %v1238 = vrot.slane %v1052, 1
        %v1239 = vsel %vm1171, %v1237, %v1238
        %v1240 = vrot.slane %v1136, 1
        %v1241 = vsel %vm1171, %v1238, %v1240
        %v1242 = vrot.slane %v1121, 1
        %v1243 = vrot.slane %v1055, 1
        %v1244 = vsel %vm1171, %v1242, %v1243
        %v1245 = vrot.slane %v1137, 1
        %v1246 = vsel %vm1171, %v1243, %v1245
        %v1247 = vrot.slane %v1122, 1
        %v1248 = vrot.slane %v1058, 1
        %v1249 = vsel %vm1171, %v1247, %v1248
        %v1250 = vrot.slane %v1138, 1
        %v1251 = vsel %vm1171, %v1248, %v1250
        %v1284 = vmax.f32 %v1107, %v1174
        %v1285 = vmax.f32 %v1013, %v1176
        %v1286 = vmax.f32 %v1108, %v1179
        %v1287 = vmax.f32 %v1016, %v1181
        %v1288 = vmax.f32 %v1109, %v1184
        %v1289 = vmax.f32 %v1019, %v1186
        %v1290 = vmax.f32 %v1110, %v1189
        %v1291 = vmax.f32 %v1022, %v1191
        %v1292 = vmax.f32 %v1111, %v1194
        %v1293 = vmax.f32 %v1025, %v1196
        %v1294 = vmax.f32 %v1112, %v1199
        %v1295 = vmax.f32 %v1028, %v1201
        %v1296 = vmax.f32 %v1113, %v1204
        %v1297 = vmax.f32 %v1031, %v1206
        %v1298 = vmax.f32 %v1114, %v1209
        %v1299 = vmax.f32 %v1034, %v1211
        %v1300 = vmax.f32 %v1115, %v1214
        %v1301 = vmax.f32 %v1037, %v1216
        %v1302 = vmax.f32 %v1116, %v1219
        %v1303 = vmax.f32 %v1040, %v1221
        %v1304 = vmax.f32 %v1117, %v1224
        %v1305 = vmax.f32 %v1043, %v1226
        %v1306 = vmax.f32 %v1118, %v1229
        %v1307 = vmax.f32 %v1046, %v1231
        %v1308 = vmax.f32 %v1119, %v1234
        %v1309 = vmax.f32 %v1049, %v1236
        %v1310 = vmax.f32 %v1120, %v1239
        %v1311 = vmax.f32 %v1052, %v1241
        %v1312 = vmax.f32 %v1121, %v1244
        %v1313 = vmax.f32 %v1055, %v1246
        %v1314 = vmax.f32 %v1122, %v1249
        %v1315 = vmax.f32 %v1058, %v1251
        %vm1316 = vcmask 1045504
        %v1317 = vrot.slane %v1107, 2
        %v1318 = vrot.slane %v1013, 2
        %v1319 = vsel %vm1316, %v1317, %v1318
        %v1320 = vrot.slane %v1123, 2
        %v1321 = vsel %vm1316, %v1318, %v1320
        %v1322 = vrot.slane %v1108, 2
        %v1323 = vrot.slane %v1016, 2
        %v1324 = vsel %vm1316, %v1322, %v1323
        %v1325 = vrot.slane %v1124, 2
        %v1326 = vsel %vm1316, %v1323, %v1325
        %v1327 = vrot.slane %v1109, 2
        %v1328 = vrot.slane %v1019, 2
        %v1329 = vsel %vm1316, %v1327, %v1328
        %v1330 = vrot.slane %v1125, 2
        %v1331 = vsel %vm1316, %v1328, %v1330
        %v1332 = vrot.slane %v1110, 2
        %v1333 = vrot.slane %v1022, 2
        %v1334 = vsel %vm1316, %v1332, %v1333
        %v1335 = vrot.slane %v1126, 2
        %v1336 = vsel %vm1316, %v1333, %v1335
        %v1337 = vrot.slane %v1111, 2
        %v1338 = vrot.slane %v1025, 2
        %v1339 = vsel %vm1316, %v1337, %v1338
        %v1340 = vrot.slane %v1127, 2
        %v1341 = vsel %vm1316, %v1338, %v1340
        %v1342 = vrot.slane %v1112, 2
        %v1343 = vrot.slane %v1028, 2
        %v1344 = vsel %vm1316, %v1342, %v1343
        %v1345 = vrot.slane %v1128, 2
        %v1346 = vsel %vm1316, %v1343, %v1345
        %v1347 = vrot.slane %v1113, 2
        %v1348 = vrot.slane %v1031, 2
        %v1349 = vsel %vm1316, %v1347, %v1348
        %v1350 = vrot.slane %v1129, 2
        %v1351 = vsel %vm1316, %v1348, %v1350
        %v1352 = vrot.slane %v1114, 2
        %v1353 = vrot.slane %v1034, 2
        %v1354 = vsel %vm1316, %v1352, %v1353
        %v1355 = vrot.slane %v1130, 2
        %v1356 = vsel %vm1316, %v1353, %v1355
        %v1357 = vrot.slane %v1115, 2
        %v1358 = vrot.slane %v1037, 2
        %v1359 = vsel %vm1316, %v1357, %v1358
        %v1360 = vrot.slane %v1131, 2
        %v1361 = vsel %vm1316, %v1358, %v1360
        %v1362 = vrot.slane %v1116, 2
        %v1363 = vrot.slane %v1040, 2
        %v1364 = vsel %vm1316, %v1362, %v1363
        %v1365 = vrot.slane %v1132, 2
        %v1366 = vsel %vm1316, %v1363, %v1365
        %v1367 = vrot.slane %v1117, 2
        %v1368 = vrot.slane %v1043, 2
        %v1369 = vsel %vm1316, %v1367, %v1368
        %v1370 = vrot.slane %v1133, 2
        %v1371 = vsel %vm1316, %v1368, %v1370
        %v1372 = vrot.slane %v1118, 2
        %v1373 = vrot.slane %v1046, 2
        %v1374 = vsel %vm1316, %v1372, %v1373
        %v1375 = vrot.slane %v1134, 2
        %v1376 = vsel %vm1316, %v1373, %v1375
        %v1377 = vrot.slane %v1119, 2
        %v1378 = vrot.slane %v1049, 2
        %v1379 = vsel %vm1316, %v1377, %v1378
        %v1380 = vrot.slane %v1135, 2
        %v1381 = vsel %vm1316, %v1378, %v1380
        %v1382 = vrot.slane %v1120, 2
        %v1383 = vrot.slane %v1052, 2
        %v1384 = vsel %vm1316, %v1382, %v1383
        %v1385 = vrot.slane %v1136, 2
        %v1386 = vsel %vm1316, %v1383, %v1385
        %v1387 = vrot.slane %v1121, 2
        %v1388 = vrot.slane %v1055, 2
        %v1389 = vsel %vm1316, %v1387, %v1388
        %v1390 = vrot.slane %v1137, 2
        %v1391 = vsel %vm1316, %v1388, %v1390
        %v1392 = vrot.slane %v1122, 2
        %v1393 = vrot.slane %v1058, 2
        %v1394 = vsel %vm1316, %v1392, %v1393
        %v1395 = vrot.slane %v1138, 2
        %v1396 = vsel %vm1316, %v1393, %v1395
        %v1429 = vmax.f32 %v1284, %v1319
        %v1430 = vmax.f32 %v1285, %v1321
        %v1431 = vmax.f32 %v1286, %v1324
        %v1432 = vmax.f32 %v1287, %v1326
        %v1433 = vmax.f32 %v1288, %v1329
        %v1434 = vmax.f32 %v1289, %v1331
        %v1435 = vmax.f32 %v1290, %v1334
        %v1436 = vmax.f32 %v1291, %v1336
        %v1437 = vmax.f32 %v1292, %v1339
        %v1438 = vmax.f32 %v1293, %v1341
        %v1439 = vmax.f32 %v1294, %v1344
        %v1440 = vmax.f32 %v1295, %v1346
        %v1441 = vmax.f32 %v1296, %v1349
        %v1442 = vmax.f32 %v1297, %v1351
        %v1443 = vmax.f32 %v1298, %v1354
        %v1444 = vmax.f32 %v1299, %v1356
        %v1445 = vmax.f32 %v1300, %v1359
        %v1446 = vmax.f32 %v1301, %v1361
        %v1447 = vmax.f32 %v1302, %v1364
        %v1448 = vmax.f32 %v1303, %v1366
        %v1449 = vmax.f32 %v1304, %v1369
        %v1450 = vmax.f32 %v1305, %v1371
        %v1451 = vmax.f32 %v1306, %v1374
        %v1452 = vmax.f32 %v1307, %v1376
        %v1453 = vmax.f32 %v1308, %v1379
        %v1454 = vmax.f32 %v1309, %v1381
        %v1455 = vmax.f32 %v1310, %v1384
        %v1456 = vmax.f32 %v1311, %v1386
        %v1457 = vmax.f32 %v1312, %v1389
        %v1458 = vmax.f32 %v1313, %v1391
        %v1459 = vmax.f32 %v1314, %v1394
        %v1460 = vmax.f32 %v1315, %v1396
        %vm1461 = vcmask 1044480
        %v1462 = vrot.slane %v1107, 3
        %v1463 = vrot.slane %v1013, 3
        %v1464 = vsel %vm1461, %v1462, %v1463
        %v1465 = vrot.slane %v1123, 3
        %v1466 = vsel %vm1461, %v1463, %v1465
        %v1467 = vrot.slane %v1108, 3
        %v1468 = vrot.slane %v1016, 3
        %v1469 = vsel %vm1461, %v1467, %v1468
        %v1470 = vrot.slane %v1124, 3
        %v1471 = vsel %vm1461, %v1468, %v1470
        %v1472 = vrot.slane %v1109, 3
        %v1473 = vrot.slane %v1019, 3
        %v1474 = vsel %vm1461, %v1472, %v1473
        %v1475 = vrot.slane %v1125, 3
        %v1476 = vsel %vm1461, %v1473, %v1475
        %v1477 = vrot.slane %v1110, 3
        %v1478 = vrot.slane %v1022, 3
        %v1479 = vsel %vm1461, %v1477, %v1478
        %v1480 = vrot.slane %v1126, 3
        %v1481 = vsel %vm1461, %v1478, %v1480
        %v1482 = vrot.slane %v1111, 3
        %v1483 = vrot.slane %v1025, 3
        %v1484 = vsel %vm1461, %v1482, %v1483
        %v1485 = vrot.slane %v1127, 3
        %v1486 = vsel %vm1461, %v1483, %v1485
        %v1487 = vrot.slane %v1112, 3
        %v1488 = vrot.slane %v1028, 3
        %v1489 = vsel %vm1461, %v1487, %v1488
        %v1490 = vrot.slane %v1128, 3
        %v1491 = vsel %vm1461, %v1488, %v1490
        %v1492 = vrot.slane %v1113, 3
        %v1493 = vrot.slane %v1031, 3
        %v1494 = vsel %vm1461, %v1492, %v1493
        %v1495 = vrot.slane %v1129, 3
        %v1496 = vsel %vm1461, %v1493, %v1495
        %v1497 = vrot.slane %v1114, 3
        %v1498 = vrot.slane %v1034, 3
        %v1499 = vsel %vm1461, %v1497, %v1498
        %v1500 = vrot.slane %v1130, 3
        %v1501 = vsel %vm1461, %v1498, %v1500
        %v1502 = vrot.slane %v1115, 3
        %v1503 = vrot.slane %v1037, 3
        %v1504 = vsel %vm1461, %v1502, %v1503
        %v1505 = vrot.slane %v1131, 3
        %v1506 = vsel %vm1461, %v1503, %v1505
        %v1507 = vrot.slane %v1116, 3
        %v1508 = vrot.slane %v1040, 3
        %v1509 = vsel %vm1461, %v1507, %v1508
        %v1510 = vrot.slane %v1132, 3
        %v1511 = vsel %vm1461, %v1508, %v1510
        %v1512 = vrot.slane %v1117, 3
        %v1513 = vrot.slane %v1043, 3
        %v1514 = vsel %vm1461, %v1512, %v1513
        %v1515 = vrot.slane %v1133, 3
        %v1516 = vsel %vm1461, %v1513, %v1515
        %v1517 = vrot.slane %v1118, 3
        %v1518 = vrot.slane %v1046, 3
        %v1519 = vsel %vm1461, %v1517, %v1518
        %v1520 = vrot.slane %v1134, 3
        %v1521 = vsel %vm1461, %v1518, %v1520
        %v1522 = vrot.slane %v1119, 3
        %v1523 = vrot.slane %v1049, 3
        %v1524 = vsel %vm1461, %v1522, %v1523
        %v1525 = vrot.slane %v1135, 3
        %v1526 = vsel %vm1461, %v1523, %v1525
        %v1527 = vrot.slane %v1120, 3
        %v1528 = vrot.slane %v1052, 3
        %v1529 = vsel %vm1461, %v1527, %v1528
        %v1530 = vrot.slane %v1136, 3
        %v1531 = vsel %vm1461, %v1528, %v1530
        %v1532 = vrot.slane %v1121, 3
        %v1533 = vrot.slane %v1055, 3
        %v1534 = vsel %vm1461, %v1532, %v1533
        %v1535 = vrot.slane %v1137, 3
        %v1536 = vsel %vm1461, %v1533, %v1535
        %v1537 = vrot.slane %v1122, 3
        %v1538 = vrot.slane %v1058, 3
        %v1539 = vsel %vm1461, %v1537, %v1538
        %v1540 = vrot.slane %v1138, 3
        %v1541 = vsel %vm1461, %v1538, %v1540
        %v1574 = vmax.f32 %v1429, %v1464
        %v1575 = vmax.f32 %v1430, %v1466
        %v1576 = vmax.f32 %v1431, %v1469
        %v1577 = vmax.f32 %v1432, %v1471
        %v1578 = vmax.f32 %v1433, %v1474
        %v1579 = vmax.f32 %v1434, %v1476
        %v1580 = vmax.f32 %v1435, %v1479
        %v1581 = vmax.f32 %v1436, %v1481
        %v1582 = vmax.f32 %v1437, %v1484
        %v1583 = vmax.f32 %v1438, %v1486
        %v1584 = vmax.f32 %v1439, %v1489
        %v1585 = vmax.f32 %v1440, %v1491
        %v1586 = vmax.f32 %v1441, %v1494
        %v1587 = vmax.f32 %v1442, %v1496
        %v1588 = vmax.f32 %v1443, %v1499
        %v1589 = vmax.f32 %v1444, %v1501
        %v1590 = vmax.f32 %v1445, %v1504
        %v1591 = vmax.f32 %v1446, %v1506
        %v1592 = vmax.f32 %v1447, %v1509
        %v1593 = vmax.f32 %v1448, %v1511
        %v1594 = vmax.f32 %v1449, %v1514
        %v1595 = vmax.f32 %v1450, %v1516
        %v1596 = vmax.f32 %v1451, %v1519
        %v1597 = vmax.f32 %v1452, %v1521
        %v1598 = vmax.f32 %v1453, %v1524
        %v1599 = vmax.f32 %v1454, %v1526
        %v1600 = vmax.f32 %v1455, %v1529
        %v1601 = vmax.f32 %v1456, %v1531
        %v1602 = vmax.f32 %v1457, %v1534
        %v1603 = vmax.f32 %v1458, %v1536
        %v1604 = vmax.f32 %v1459, %v1539
        %v1605 = vmax.f32 %v1460, %v1541
        %vm1606 = vcmask 1043456
        %v1607 = vrot.slane %v1107, 4
        %v1608 = vrot.slane %v1013, 4
        %v1609 = vsel %vm1606, %v1607, %v1608
        %v1610 = vrot.slane %v1123, 4
        %v1611 = vsel %vm1606, %v1608, %v1610
        %v1612 = vrot.slane %v1108, 4
        %v1613 = vrot.slane %v1016, 4
        %v1614 = vsel %vm1606, %v1612, %v1613
        %v1615 = vrot.slane %v1124, 4
        %v1616 = vsel %vm1606, %v1613, %v1615
        %v1617 = vrot.slane %v1109, 4
        %v1618 = vrot.slane %v1019, 4
        %v1619 = vsel %vm1606, %v1617, %v1618
        %v1620 = vrot.slane %v1125, 4
        %v1621 = vsel %vm1606, %v1618, %v1620
        %v1622 = vrot.slane %v1110, 4
        %v1623 = vrot.slane %v1022, 4
        %v1624 = vsel %vm1606, %v1622, %v1623
        %v1625 = vrot.slane %v1126, 4
        %v1626 = vsel %vm1606, %v1623, %v1625
        %v1627 = vrot.slane %v1111, 4
        %v1628 = vrot.slane %v1025, 4
        %v1629 = vsel %vm1606, %v1627, %v1628
        %v1630 = vrot.slane %v1127, 4
        %v1631 = vsel %vm1606, %v1628, %v1630
        %v1632 = vrot.slane %v1112, 4
        %v1633 = vrot.slane %v1028, 4
        %v1634 = vsel %vm1606, %v1632, %v1633
        %v1635 = vrot.slane %v1128, 4
        %v1636 = vsel %vm1606, %v1633, %v1635
        %v1637 = vrot.slane %v1113, 4
        %v1638 = vrot.slane %v1031, 4
        %v1639 = vsel %vm1606, %v1637, %v1638
        %v1640 = vrot.slane %v1129, 4
        %v1641 = vsel %vm1606, %v1638, %v1640
        %v1642 = vrot.slane %v1114, 4
        %v1643 = vrot.slane %v1034, 4
        %v1644 = vsel %vm1606, %v1642, %v1643
        %v1645 = vrot.slane %v1130, 4
        %v1646 = vsel %vm1606, %v1643, %v1645
        %v1647 = vrot.slane %v1115, 4
        %v1648 = vrot.slane %v1037, 4
        %v1649 = vsel %vm1606, %v1647, %v1648
        %v1650 = vrot.slane %v1131, 4
        %v1651 = vsel %vm1606, %v1648, %v1650
        %v1652 = vrot.slane %v1116, 4
        %v1653 = vrot.slane %v1040, 4
        %v1654 = vsel %vm1606, %v1652, %v1653
        %v1655 = vrot.slane %v1132, 4
        %v1656 = vsel %vm1606, %v1653, %v1655
        %v1657 = vrot.slane %v1117, 4
        %v1658 = vrot.slane %v1043, 4
        %v1659 = vsel %vm1606, %v1657, %v1658
        %v1660 = vrot.slane %v1133, 4
        %v1661 = vsel %vm1606, %v1658, %v1660
        %v1662 = vrot.slane %v1118, 4
        %v1663 = vrot.slane %v1046, 4
        %v1664 = vsel %vm1606, %v1662, %v1663
        %v1665 = vrot.slane %v1134, 4
        %v1666 = vsel %vm1606, %v1663, %v1665
        %v1667 = vrot.slane %v1119, 4
        %v1668 = vrot.slane %v1049, 4
        %v1669 = vsel %vm1606, %v1667, %v1668
        %v1670 = vrot.slane %v1135, 4
        %v1671 = vsel %vm1606, %v1668, %v1670
        %v1672 = vrot.slane %v1120, 4
        %v1673 = vrot.slane %v1052, 4
        %v1674 = vsel %vm1606, %v1672, %v1673
        %v1675 = vrot.slane %v1136, 4
        %v1676 = vsel %vm1606, %v1673, %v1675
        %v1677 = vrot.slane %v1121, 4
        %v1678 = vrot.slane %v1055, 4
        %v1679 = vsel %vm1606, %v1677, %v1678
        %v1680 = vrot.slane %v1137, 4
        %v1681 = vsel %vm1606, %v1678, %v1680
        %v1682 = vrot.slane %v1122, 4
        %v1683 = vrot.slane %v1058, 4
        %v1684 = vsel %vm1606, %v1682, %v1683
        %v1685 = vrot.slane %v1138, 4
        %v1686 = vsel %vm1606, %v1683, %v1685
        %v1719 = vmax.f32 %v1574, %v1609
        %v1720 = vmax.f32 %v1575, %v1611
        %v1721 = vmax.f32 %v1576, %v1614
        %v1722 = vmax.f32 %v1577, %v1616
        %v1723 = vmax.f32 %v1578, %v1619
        %v1724 = vmax.f32 %v1579, %v1621
        %v1725 = vmax.f32 %v1580, %v1624
        %v1726 = vmax.f32 %v1581, %v1626
        %v1727 = vmax.f32 %v1582, %v1629
        %v1728 = vmax.f32 %v1583, %v1631
        %v1729 = vmax.f32 %v1584, %v1634
        %v1730 = vmax.f32 %v1585, %v1636
        %v1731 = vmax.f32 %v1586, %v1639
        %v1732 = vmax.f32 %v1587, %v1641
        %v1733 = vmax.f32 %v1588, %v1644
        %v1734 = vmax.f32 %v1589, %v1646
        %v1735 = vmax.f32 %v1590, %v1649
        %v1736 = vmax.f32 %v1591, %v1651
        %v1737 = vmax.f32 %v1592, %v1654
        %v1738 = vmax.f32 %v1593, %v1656
        %v1739 = vmax.f32 %v1594, %v1659
        %v1740 = vmax.f32 %v1595, %v1661
        %v1741 = vmax.f32 %v1596, %v1664
        %v1742 = vmax.f32 %v1597, %v1666
        %v1743 = vmax.f32 %v1598, %v1669
        %v1744 = vmax.f32 %v1599, %v1671
        %v1745 = vmax.f32 %v1600, %v1674
        %v1746 = vmax.f32 %v1601, %v1676
        %v1747 = vmax.f32 %v1602, %v1679
        %v1748 = vmax.f32 %v1603, %v1681
        %v1749 = vmax.f32 %v1604, %v1684
        %v1750 = vmax.f32 %v1605, %v1686
        %v1751 = vpack.c.bf16 %v1720, %v1719
        %v1752 = vpack.c.bf16 %v1722, %v1721
        %v1753 = vpack.c.bf16 %v1724, %v1723
        %v1754 = vpack.c.bf16 %v1726, %v1725
        %v1755 = vpack.c.bf16 %v1728, %v1727
        %v1756 = vpack.c.bf16 %v1730, %v1729
        %v1757 = vpack.c.bf16 %v1732, %v1731
        %v1758 = vpack.c.bf16 %v1734, %v1733
        %v1759 = vpack.c.bf16 %v1736, %v1735
        %v1760 = vpack.c.bf16 %v1738, %v1737
        %v1761 = vpack.c.bf16 %v1740, %v1739
        %v1762 = vpack.c.bf16 %v1742, %v1741
        %v1763 = vpack.c.bf16 %v1744, %v1743
        %v1764 = vpack.c.bf16 %v1746, %v1745
        %v1765 = vpack.c.bf16 %v1748, %v1747
        %v1766 = vpack.c.bf16 %v1750, %v1749
        %s1767 = scalar_lea.vmem %s3, 128
        %v1768 = vld [vmem:[%s1767] sm:$0xff]
        %v1769 = vld [vmem:[%s1767 + $0x8] sm:$0xff]
        %v1770 = vld [vmem:[%s1767 + $0x10] sm:$0xff]
        %v1771 = vld [vmem:[%s1767 + $0x18] sm:$0xff]
        %v1772 = vld [vmem:[%s1767 + $0x20] sm:$0xff]
        %v1773 = vld [vmem:[%s1767 + $0x28] sm:$0xff]
        %v1774 = vld [vmem:[%s1767 + $0x30] sm:$0xff]
        %v1775 = vld [vmem:[%s1767 + $0x38] sm:$0xff]
        %v1776 = vld [vmem:[%s1767 + $0x40] sm:$0xff]
        %v1777 = vld [vmem:[%s1767 + $0x48] sm:$0xff]
        %v1778 = vld [vmem:[%s1767 + $0x50] sm:$0xff]
        %v1779 = vld [vmem:[%s1767 + $0x58] sm:$0xff]
        %v1780 = vld [vmem:[%s1767 + $0x60] sm:$0xff]
        %v1781 = vld [vmem:[%s1767 + $0x68] sm:$0xff]
        %v1782 = vld [vmem:[%s1767 + $0x70] sm:$0xff]
        %v1783 = vld [vmem:[%s1767 + $0x78] sm:$0xff]
        %v1800 = vunpack.c.l.b16 %v1768
        %v1801 = vunpack.c.h.b16 %v1768
        %v1802 = vunpack.c.l.b16 %v1769
        %v1803 = vunpack.c.h.b16 %v1769
        %v1804 = vunpack.c.l.b16 %v1770
        %v1805 = vunpack.c.h.b16 %v1770
        %v1806 = vunpack.c.l.b16 %v1771
        %v1807 = vunpack.c.h.b16 %v1771
        %v1808 = vunpack.c.l.b16 %v1772
        %v1809 = vunpack.c.h.b16 %v1772
        %v1810 = vunpack.c.l.b16 %v1773
        %v1811 = vunpack.c.h.b16 %v1773
        %v1812 = vunpack.c.l.b16 %v1774
        %v1813 = vunpack.c.h.b16 %v1774
        %v1814 = vunpack.c.l.b16 %v1775
        %v1815 = vunpack.c.h.b16 %v1775
        %v1816 = vunpack.c.l.b16 %v1776
        %v1817 = vunpack.c.h.b16 %v1776
        %v1818 = vunpack.c.l.b16 %v1777
        %v1819 = vunpack.c.h.b16 %v1777
        %v1820 = vunpack.c.l.b16 %v1778
        %v1821 = vunpack.c.h.b16 %v1778
        %v1822 = vunpack.c.l.b16 %v1779
        %v1823 = vunpack.c.h.b16 %v1779
        %v1824 = vunpack.c.l.b16 %v1780
        %v1825 = vunpack.c.h.b16 %v1780
        %v1826 = vunpack.c.l.b16 %v1781
        %v1827 = vunpack.c.h.b16 %v1781
        %v1828 = vunpack.c.l.b16 %v1782
        %v1829 = vunpack.c.h.b16 %v1782
        %v1830 = vunpack.c.l.b16 %v1783
        %v1831 = vunpack.c.h.b16 %v1783
        %v1832 = vpack.c.b16 %v1802, %v1800
        %v1833 = vpack.c.b16 %v1803, %v1801
        %v1834 = vpack.c.b16 %v1806, %v1804
        %v1835 = vpack.c.b16 %v1807, %v1805
        %v1836 = vpack.c.b16 %v1810, %v1808
        %v1837 = vpack.c.b16 %v1811, %v1809
        %v1838 = vpack.c.b16 %v1814, %v1812
        %v1839 = vpack.c.b16 %v1815, %v1813
        %v1840 = vpack.c.b16 %v1818, %v1816
        %v1841 = vpack.c.b16 %v1819, %v1817
        %v1842 = vpack.c.b16 %v1822, %v1820
        %v1843 = vpack.c.b16 %v1823, %v1821
        %v1844 = vpack.c.b16 %v1826, %v1824
        %v1845 = vpack.c.b16 %v1827, %v1825
        %v1846 = vpack.c.b16 %v1830, %v1828
        %v1847 = vpack.c.b16 %v1831, %v1829
        %1864 = vmatprep.subr.bf16.mxu0 %v1833
        %1865 = vmatpush1.bf16.msra.mxu0 %v1832
        %1866 = vmatprep.subr.bf16.mxu0 %v1835
        %1867 = vmatpush1.bf16.msra.mxu0 %v1834
        %1868 = vmatprep.subr.bf16.mxu0 %v1837
        %1869 = vmatpush1.bf16.msra.mxu0 %v1836
        %1870 = vmatprep.subr.bf16.mxu0 %v1839
        %1871 = vmatpush1.bf16.msra.mxu0 %v1838
        %1872 = vmatprep.subr.bf16.mxu0 %v1841
        %1873 = vmatpush1.bf16.msra.mxu0 %v1840
        %1874 = vmatprep.subr.bf16.mxu0 %v1843
        %1875 = vmatpush1.bf16.msra.mxu0 %v1842
        %1876 = vmatprep.subr.bf16.mxu0 %v1845
        %1877 = vmatpush1.bf16.msra.mxu0 %v1844
        %1878 = vmatprep.subr.bf16.mxu0 %v1847
        %1879 = vmatpush1.bf16.msra.mxu0 %v1846
        %1880 = vmatprep.subr.bf16.mxu0 0
        %1881 = vmatpush1.bf16.msra.mxu0 0
        %1882 = vmatprep.subr.bf16.mxu0 0
        %1883 = vmatpush1.bf16.msra.mxu0 0
        %1884 = vmatprep.subr.bf16.mxu0 0
        %1885 = vmatpush1.bf16.msra.mxu0 0
        %1886 = vmatprep.subr.bf16.mxu0 0
        %1887 = vmatpush1.bf16.msra.mxu0 0
        %1888 = vmatprep.subr.bf16.mxu0 0
        %1889 = vmatpush1.bf16.msra.mxu0 0
        %1890 = vmatprep.subr.bf16.mxu0 0
        %1891 = vmatpush1.bf16.msra.mxu0 0
        %1892 = vmatprep.subr.bf16.mxu0 0
        %1893 = vmatpush1.bf16.msra.mxu0 0
        %1894 = vmatprep.subr.bf16.mxu0 0
        %1895 = vmatpush1.bf16.msra.mxu0 0
        %1896 = vmatprep.mubr.bf16.mxu0 0
        %1897 = vmatmul.mubr.bf16.gmra.mrb[0].mxu0 %v1751
        %v1898 = vpop.f32.mrb[0].mxu0
        %v1899 = vadd.f32 0.0, %v1898
        %v1900 = vpop.f32.mrb[0].mxu0
        %v1901 = vadd.f32 0.0, %v1900
        %v1902 = vpop.f32.mrb[0].mxu0
        %v1903 = vadd.f32 0.0, %v1902
        %v1904 = vpop.f32.mrb[0].mxu0
        %v1905 = vadd.f32 0.0, %v1904
        %1906 = vmatprep.mubr.bf16.mxu0 0
        %1907 = vmatmul.mubr.bf16.gmra.mrb[0].mxu0 %v1752
        %v1908 = vpop.f32.mrb[0].mxu0
        %v1909 = vadd.f32 0.0, %v1908
        %v1910 = vpop.f32.mrb[0].mxu0
        %v1911 = vadd.f32 0.0, %v1910
        %v1912 = vpop.f32.mrb[0].mxu0
        %v1913 = vadd.f32 0.0, %v1912
        %v1914 = vpop.f32.mrb[0].mxu0
        %v1915 = vadd.f32 0.0, %v1914
        %1916 = vmatprep.mubr.bf16.mxu0 0
        %1917 = vmatmul.mubr.bf16.gmra.mrb[0].mxu0 %v1753
        %v1918 = vpop.f32.mrb[0].mxu0
        %v1919 = vadd.f32 0.0, %v1918
        %v1920 = vpop.f32.mrb[0].mxu0
        %v1921 = vadd.f32 0.0, %v1920
        %v1922 = vpop.f32.mrb[0].mxu0
        %v1923 = vadd.f32 0.0, %v1922
        %v1924 = vpop.f32.mrb[0].mxu0
        %v1925 = vadd.f32 0.0, %v1924
        %1926 = vmatprep.mubr.bf16.mxu0 0
        %1927 = vmatmul.mubr.bf16.gmra.mrb[0].mxu0 %v1754
        %v1928 = vpop.f32.mrb[0].mxu0
        %v1929 = vadd.f32 0.0, %v1928
        %v1930 = vpop.f32.mrb[0].mxu0
        %v1931 = vadd.f32 0.0, %v1930
        %v1932 = vpop.f32.mrb[0].mxu0
        %v1933 = vadd.f32 0.0, %v1932
        %v1934 = vpop.f32.mrb[0].mxu0
        %v1935 = vadd.f32 0.0, %v1934
        %1936 = vmatprep.mubr.bf16.mxu0 0
        %1937 = vmatmul.mubr.bf16.gmra.mrb[0].mxu0 %v1755
        %v1938 = vpop.f32.mrb[0].mxu0
        %v1939 = vadd.f32 0.0, %v1938
        %v1940 = vpop.f32.mrb[0].mxu0
        %v1941 = vadd.f32 0.0, %v1940
        %v1942 = vpop.f32.mrb[0].mxu0
        %v1943 = vadd.f32 0.0, %v1942
        %v1944 = vpop.f32.mrb[0].mxu0
        %v1945 = vadd.f32 0.0, %v1944
        %1946 = vmatprep.mubr.bf16.mxu0 0
        %1947 = vmatmul.mubr.bf16.gmra.mrb[0].mxu0 %v1756
        %v1948 = vpop.f32.mrb[0].mxu0
        %v1949 = vadd.f32 0.0, %v1948
        %v1950 = vpop.f32.mrb[0].mxu0
        %v1951 = vadd.f32 0.0, %v1950
        %v1952 = vpop.f32.mrb[0].mxu0
        %v1953 = vadd.f32 0.0, %v1952
        %v1954 = vpop.f32.mrb[0].mxu0
        %v1955 = vadd.f32 0.0, %v1954
        %1956 = vmatprep.mubr.bf16.mxu0 0
        %1957 = vmatmul.mubr.bf16.gmra.mrb[0].mxu0 %v1757
        %v1958 = vpop.f32.mrb[0].mxu0
        %v1959 = vadd.f32 0.0, %v1958
        %v1960 = vpop.f32.mrb[0].mxu0
        %v1961 = vadd.f32 0.0, %v1960
        %v1962 = vpop.f32.mrb[0].mxu0
        %v1963 = vadd.f32 0.0, %v1962
        %v1964 = vpop.f32.mrb[0].mxu0
        %v1965 = vadd.f32 0.0, %v1964
        %1966 = vmatprep.mubr.bf16.mxu0 0
        %1967 = vmatmul.mubr.bf16.gmra.mrb[0].mxu0 %v1758
        %v1968 = vpop.f32.mrb[0].mxu0
        %v1969 = vadd.f32 0.0, %v1968
        %v1970 = vpop.f32.mrb[0].mxu0
        %v1971 = vadd.f32 0.0, %v1970
        %v1972 = vpop.f32.mrb[0].mxu0
        %v1973 = vadd.f32 0.0, %v1972
        %v1974 = vpop.f32.mrb[0].mxu0
        %v1975 = vadd.f32 0.0, %v1974
        %1976 = vmatprep.mubr.bf16.mxu0 0
        %1977 = vmatmul.mubr.bf16.gmra.mrb[0].mxu0 %v1759
        %v1978 = vpop.f32.mrb[0].mxu0
        %v1979 = vadd.f32 0.0, %v1978
        %v1980 = vpop.f32.mrb[0].mxu0
        %v1981 = vadd.f32 0.0, %v1980
        %v1982 = vpop.f32.mrb[0].mxu0
        %v1983 = vadd.f32 0.0, %v1982
        %v1984 = vpop.f32.mrb[0].mxu0
        %v1985 = vadd.f32 0.0, %v1984
        %1986 = vmatprep.mubr.bf16.mxu0 0
        %1987 = vmatmul.mubr.bf16.gmra.mrb[0].mxu0 %v1760
        %v1988 = vpop.f32.mrb[0].mxu0
        %v1989 = vadd.f32 0.0, %v1988
        %v1990 = vpop.f32.mrb[0].mxu0
        %v1991 = vadd.f32 0.0, %v1990
        %v1992 = vpop.f32.mrb[0].mxu0
        %v1993 = vadd.f32 0.0, %v1992
        %v1994 = vpop.f32.mrb[0].mxu0
        %v1995 = vadd.f32 0.0, %v1994
        %1996 = vmatprep.mubr.bf16.mxu0 0
        %1997 = vmatmul.mubr.bf16.gmra.mrb[0].mxu0 %v1761
        %v1998 = vpop.f32.mrb[0].mxu0
        %v1999 = vadd.f32 0.0, %v1998
        %v2000 = vpop.f32.mrb[0].mxu0
        %v2001 = vadd.f32 0.0, %v2000
        %v2002 = vpop.f32.mrb[0].mxu0
        %v2003 = vadd.f32 0.0, %v2002
        %v2004 = vpop.f32.mrb[0].mxu0
        %v2005 = vadd.f32 0.0, %v2004
        %2006 = vmatprep.mubr.bf16.mxu0 0
        %2007 = vmatmul.mubr.bf16.gmra.mrb[0].mxu0 %v1762
        %v2008 = vpop.f32.mrb[0].mxu0
        %v2009 = vadd.f32 0.0, %v2008
        %v2010 = vpop.f32.mrb[0].mxu0
        %v2011 = vadd.f32 0.0, %v2010
        %v2012 = vpop.f32.mrb[0].mxu0
        %v2013 = vadd.f32 0.0, %v2012
        %v2014 = vpop.f32.mrb[0].mxu0
        %v2015 = vadd.f32 0.0, %v2014
        %2016 = vmatprep.mubr.bf16.mxu0 0
        %2017 = vmatmul.mubr.bf16.gmra.mrb[0].mxu0 %v1763
        %v2018 = vpop.f32.mrb[0].mxu0
        %v2019 = vadd.f32 0.0, %v2018
        %v2020 = vpop.f32.mrb[0].mxu0
        %v2021 = vadd.f32 0.0, %v2020
        %v2022 = vpop.f32.mrb[0].mxu0
        %v2023 = vadd.f32 0.0, %v2022
        %v2024 = vpop.f32.mrb[0].mxu0
        %v2025 = vadd.f32 0.0, %v2024
        %2026 = vmatprep.mubr.bf16.mxu0 0
        %2027 = vmatmul.mubr.bf16.gmra.mrb[0].mxu0 %v1764
        %v2028 = vpop.f32.mrb[0].mxu0
        %v2029 = vadd.f32 0.0, %v2028
        %v2030 = vpop.f32.mrb[0].mxu0
        %v2031 = vadd.f32 0.0, %v2030
        %v2032 = vpop.f32.mrb[0].mxu0
        %v2033 = vadd.f32 0.0, %v2032
        %v2034 = vpop.f32.mrb[0].mxu0
        %v2035 = vadd.f32 0.0, %v2034
        %2036 = vmatprep.mubr.bf16.mxu0 0
        %2037 = vmatmul.mubr.bf16.gmra.mrb[0].mxu0 %v1765
        %v2038 = vpop.f32.mrb[0].mxu0
        %v2039 = vadd.f32 0.0, %v2038
        %v2040 = vpop.f32.mrb[0].mxu0
        %v2041 = vadd.f32 0.0, %v2040
        %v2042 = vpop.f32.mrb[0].mxu0
        %v2043 = vadd.f32 0.0, %v2042
        %v2044 = vpop.f32.mrb[0].mxu0
        %v2045 = vadd.f32 0.0, %v2044
        %2046 = vmatprep.mubr.bf16.mxu0 0
        %2047 = vmatmul.mubr.bf16.gmra.mrb[0].mxu0 %v1766
        %v2048 = vpop.f32.mrb[0].mxu0
        %v2049 = vadd.f32 0.0, %v2048
        %v2050 = vpop.f32.mrb[0].mxu0
        %v2051 = vadd.f32 0.0, %v2050
        %v2052 = vpop.f32.mrb[0].mxu0
        %v2053 = vadd.f32 0.0, %v2052
        %v2054 = vpop.f32.mrb[0].mxu0
        %v2055 = vadd.f32 0.0, %v2054
        %2056 = vdwg.mxu0
        %v2073 = vunpack.c.l.b16 %v856
        %v2074 = vunpack.c.h.b16 %v856
        %v2075 = vunpack.c.l.b16 %v857
        %v2076 = vunpack.c.h.b16 %v857
        %v2077 = vunpack.c.l.b16 %v858
        %v2078 = vunpack.c.h.b16 %v858
        %v2079 = vunpack.c.l.b16 %v859
        %v2080 = vunpack.c.h.b16 %v859
        %v2081 = vunpack.c.l.b16 %v860
        %v2082 = vunpack.c.h.b16 %v860
        %v2083 = vunpack.c.l.b16 %v861
        %v2084 = vunpack.c.h.b16 %v861
        %v2085 = vunpack.c.l.b16 %v862
        %v2086 = vunpack.c.h.b16 %v862
        %v2087 = vunpack.c.l.b16 %v863
        %v2088 = vunpack.c.h.b16 %v863
        %v2089 = vunpack.c.l.b16 %v864
        %v2090 = vunpack.c.h.b16 %v864
        %v2091 = vunpack.c.l.b16 %v865
        %v2092 = vunpack.c.h.b16 %v865
        %v2093 = vunpack.c.l.b16 %v866
        %v2094 = vunpack.c.h.b16 %v866
        %v2095 = vunpack.c.l.b16 %v867
        %v2096 = vunpack.c.h.b16 %v867
        %v2097 = vunpack.c.l.b16 %v868
        %v2098 = vunpack.c.h.b16 %v868
        %v2099 = vunpack.c.l.b16 %v869
        %v2100 = vunpack.c.h.b16 %v869
        %v2101 = vunpack.c.l.b16 %v870
        %v2102 = vunpack.c.h.b16 %v870
        %v2103 = vunpack.c.l.b16 %v871
        %v2104 = vunpack.c.h.b16 %v871
        %v2105 = vpack.c.b16 %v2075, %v2073
        %v2106 = vpack.c.b16 %v2076, %v2074
        %v2107 = vpack.c.b16 %v2079, %v2077
        %v2108 = vpack.c.b16 %v2080, %v2078
        %v2109 = vpack.c.b16 %v2083, %v2081
        %v2110 = vpack.c.b16 %v2084, %v2082
        %v2111 = vpack.c.b16 %v2087, %v2085
        %v2112 = vpack.c.b16 %v2088, %v2086
        %v2113 = vpack.c.b16 %v2091, %v2089
        %v2114 = vpack.c.b16 %v2092, %v2090
        %v2115 = vpack.c.b16 %v2095, %v2093
        %v2116 = vpack.c.b16 %v2096, %v2094
        %v2117 = vpack.c.b16 %v2099, %v2097
        %v2118 = vpack.c.b16 %v2100, %v2098
        %v2119 = vpack.c.b16 %v2103, %v2101
        %v2120 = vpack.c.b16 %v2104, %v2102
        %2137 = vmatprep.subr.bf16.mxu0 %v2106
        %2138 = vmatpush1.bf16.msra.mxu0 %v2105
        %2139 = vmatprep.subr.bf16.mxu0 %v2108
        %2140 = vmatpush1.bf16.msra.mxu0 %v2107
        %2141 = vmatprep.subr.bf16.mxu0 %v2110
        %2142 = vmatpush1.bf16.msra.mxu0 %v2109
        %2143 = vmatprep.subr.bf16.mxu0 %v2112
        %2144 = vmatpush1.bf16.msra.mxu0 %v2111
        %2145 = vmatprep.subr.bf16.mxu0 %v2114
        %2146 = vmatpush1.bf16.msra.mxu0 %v2113
        %2147 = vmatprep.subr.bf16.mxu0 %v2116
        %2148 = vmatpush1.bf16.msra.mxu0 %v2115
        %2149 = vmatprep.subr.bf16.mxu0 %v2118
        %2150 = vmatpush1.bf16.msra.mxu0 %v2117
        %2151 = vmatprep.subr.bf16.mxu0 %v2120
        %2152 = vmatpush1.bf16.msra.mxu0 %v2119
        %2153 = vmatprep.subr.bf16.mxu0 0
        %2154 = vmatpush1.bf16.msra.mxu0 0
        %2155 = vmatprep.subr.bf16.mxu0 0
        %2156 = vmatpush1.bf16.msra.mxu0 0
        %2157 = vmatprep.subr.bf16.mxu0 0
        %2158 = vmatpush1.bf16.msra.mxu0 0
        %2159 = vmatprep.subr.bf16.mxu0 0
        %2160 = vmatpush1.bf16.msra.mxu0 0
        %2161 = vmatprep.subr.bf16.mxu0 0
        %2162 = vmatpush1.bf16.msra.mxu0 0
        %2163 = vmatprep.subr.bf16.mxu0 0
        %2164 = vmatpush1.bf16.msra.mxu0 0
        %2165 = vmatprep.subr.bf16.mxu0 0
        %2166 = vmatpush1.bf16.msra.mxu0 0
        %2167 = vmatprep.subr.bf16.mxu0 0
        %2168 = vmatpush1.bf16.msra.mxu0 0
        %2169 = vmatprep.mubr.bf16.mxu0 0
        %2170 = vmatmul.mubr.bf16.gmra.mrb[0].mxu0 %v840
        %v2171 = vpop.f32.mrb[0].mxu0
        %v2172 = vadd.f32 %v1899, %v2171
        %v2173 = vpop.f32.mrb[0].mxu0
        %v2174 = vadd.f32 %v1901, %v2173
        %v2175 = vpop.f32.mrb[0].mxu0
        %v2176 = vadd.f32 %v1903, %v2175
        %v2177 = vpop.f32.mrb[0].mxu0
        %v2178 = vadd.f32 %v1905, %v2177
        %2179 = vmatprep.mubr.bf16.mxu0 0
        %2180 = vmatmul.mubr.bf16.gmra.mrb[0].mxu0 %v841
        %v2181 = vpop.f32.mrb[0].mxu0
        %v2182 = vadd.f32 %v1909, %v2181
        %v2183 = vpop.f32.mrb[0].mxu0
        %v2184 = vadd.f32 %v1911, %v2183
        %v2185 = vpop.f32.mrb[0].mxu0
        %v2186 = vadd.f32 %v1913, %v2185
        %v2187 = vpop.f32.mrb[0].mxu0
        %v2188 = vadd.f32 %v1915, %v2187
        %2189 = vmatprep.mubr.bf16.mxu0 0
        %2190 = vmatmul.mubr.bf16.gmra.mrb[0].mxu0 %v842
        %v2191 = vpop.f32.mrb[0].mxu0
        %v2192 = vadd.f32 %v1919, %v2191
        %v2193 = vpop.f32.mrb[0].mxu0
        %v2194 = vadd.f32 %v1921, %v2193
        %v2195 = vpop.f32.mrb[0].mxu0
        %v2196 = vadd.f32 %v1923, %v2195
        %v2197 = vpop.f32.mrb[0].mxu0
        %v2198 = vadd.f32 %v1925, %v2197
        %2199 = vmatprep.mubr.bf16.mxu0 0
        %2200 = vmatmul.mubr.bf16.gmra.mrb[0].mxu0 %v843
        %v2201 = vpop.f32.mrb[0].mxu0
        %v2202 = vadd.f32 %v1929, %v2201
        %v2203 = vpop.f32.mrb[0].mxu0
        %v2204 = vadd.f32 %v1931, %v2203
        %v2205 = vpop.f32.mrb[0].mxu0
        %v2206 = vadd.f32 %v1933, %v2205
        %v2207 = vpop.f32.mrb[0].mxu0
        %v2208 = vadd.f32 %v1935, %v2207
        %2209 = vmatprep.mubr.bf16.mxu0 0
        %2210 = vmatmul.mubr.bf16.gmra.mrb[0].mxu0 %v844
        %v2211 = vpop.f32.mrb[0].mxu0
        %v2212 = vadd.f32 %v1939, %v2211
        %v2213 = vpop.f32.mrb[0].mxu0
        %v2214 = vadd.f32 %v1941, %v2213
        %v2215 = vpop.f32.mrb[0].mxu0
        %v2216 = vadd.f32 %v1943, %v2215
        %v2217 = vpop.f32.mrb[0].mxu0
        %v2218 = vadd.f32 %v1945, %v2217
        %2219 = vmatprep.mubr.bf16.mxu0 0
        %2220 = vmatmul.mubr.bf16.gmra.mrb[0].mxu0 %v845
        %v2221 = vpop.f32.mrb[0].mxu0
        %v2222 = vadd.f32 %v1949, %v2221
        %v2223 = vpop.f32.mrb[0].mxu0
        %v2224 = vadd.f32 %v1951, %v2223
        %v2225 = vpop.f32.mrb[0].mxu0
        %v2226 = vadd.f32 %v1953, %v2225
        %v2227 = vpop.f32.mrb[0].mxu0
        %v2228 = vadd.f32 %v1955, %v2227
        %2229 = vmatprep.mubr.bf16.mxu0 0
        %2230 = vmatmul.mubr.bf16.gmra.mrb[0].mxu0 %v846
        %v2231 = vpop.f32.mrb[0].mxu0
        %v2232 = vadd.f32 %v1959, %v2231
        %v2233 = vpop.f32.mrb[0].mxu0
        %v2234 = vadd.f32 %v1961, %v2233
        %v2235 = vpop.f32.mrb[0].mxu0
        %v2236 = vadd.f32 %v1963, %v2235
        %v2237 = vpop.f32.mrb[0].mxu0
        %v2238 = vadd.f32 %v1965, %v2237
        %2239 = vmatprep.mubr.bf16.mxu0 0
        %2240 = vmatmul.mubr.bf16.gmra.mrb[0].mxu0 %v847
        %v2241 = vpop.f32.mrb[0].mxu0
        %v2242 = vadd.f32 %v1969, %v2241
        %v2243 = vpop.f32.mrb[0].mxu0
        %v2244 = vadd.f32 %v1971, %v2243
        %v2245 = vpop.f32.mrb[0].mxu0
        %v2246 = vadd.f32 %v1973, %v2245
        %v2247 = vpop.f32.mrb[0].mxu0
        %v2248 = vadd.f32 %v1975, %v2247
        %2249 = vmatprep.mubr.bf16.mxu0 0
        %2250 = vmatmul.mubr.bf16.gmra.mrb[0].mxu0 %v848
        %v2251 = vpop.f32.mrb[0].mxu0
        %v2252 = vadd.f32 %v1979, %v2251
        %v2253 = vpop.f32.mrb[0].mxu0
        %v2254 = vadd.f32 %v1981, %v2253
        %v2255 = vpop.f32.mrb[0].mxu0
        %v2256 = vadd.f32 %v1983, %v2255
        %v2257 = vpop.f32.mrb[0].mxu0
        %v2258 = vadd.f32 %v1985, %v2257
        %2259 = vmatprep.mubr.bf16.mxu0 0
        %2260 = vmatmul.mubr.bf16.gmra.mrb[0].mxu0 %v849
        %v2261 = vpop.f32.mrb[0].mxu0
        %v2262 = vadd.f32 %v1989, %v2261
        %v2263 = vpop.f32.mrb[0].mxu0
        %v2264 = vadd.f32 %v1991, %v2263
        %v2265 = vpop.f32.mrb[0].mxu0
        %v2266 = vadd.f32 %v1993, %v2265
        %v2267 = vpop.f32.mrb[0].mxu0
        %v2268 = vadd.f32 %v1995, %v2267
        %2269 = vmatprep.mubr.bf16.mxu0 0
        %2270 = vmatmul.mubr.bf16.gmra.mrb[0].mxu0 %v850
        %v2271 = vpop.f32.mrb[0].mxu0
        %v2272 = vadd.f32 %v1999, %v2271
        %v2273 = vpop.f32.mrb[0].mxu0
        %v2274 = vadd.f32 %v2001, %v2273
        %v2275 = vpop.f32.mrb[0].mxu0
        %v2276 = vadd.f32 %v2003, %v2275
        %v2277 = vpop.f32.mrb[0].mxu0
        %v2278 = vadd.f32 %v2005, %v2277
        %2279 = vmatprep.mubr.bf16.mxu0 0
        %2280 = vmatmul.mubr.bf16.gmra.mrb[0].mxu0 %v851
        %v2281 = vpop.f32.mrb[0].mxu0
        %v2282 = vadd.f32 %v2009, %v2281
        %v2283 = vpop.f32.mrb[0].mxu0
        %v2284 = vadd.f32 %v2011, %v2283
        %v2285 = vpop.f32.mrb[0].mxu0
        %v2286 = vadd.f32 %v2013, %v2285
        %v2287 = vpop.f32.mrb[0].mxu0
        %v2288 = vadd.f32 %v2015, %v2287
        %2289 = vmatprep.mubr.bf16.mxu0 0
        %2290 = vmatmul.mubr.bf16.gmra.mrb[0].mxu0 %v852
        %v2291 = vpop.f32.mrb[0].mxu0
        %v2292 = vadd.f32 %v2019, %v2291
        %v2293 = vpop.f32.mrb[0].mxu0
        %v2294 = vadd.f32 %v2021, %v2293
        %v2295 = vpop.f32.mrb[0].mxu0
        %v2296 = vadd.f32 %v2023, %v2295
        %v2297 = vpop.f32.mrb[0].mxu0
        %v2298 = vadd.f32 %v2025, %v2297
        %2299 = vmatprep.mubr.bf16.mxu0 0
        %2300 = vmatmul.mubr.bf16.gmra.mrb[0].mxu0 %v853
        %v2301 = vpop.f32.mrb[0].mxu0
        %v2302 = vadd.f32 %v2029, %v2301
        %v2303 = vpop.f32.mrb[0].mxu0
        %v2304 = vadd.f32 %v2031, %v2303
        %v2305 = vpop.f32.mrb[0].mxu0
        %v2306 = vadd.f32 %v2033, %v2305
        %v2307 = vpop.f32.mrb[0].mxu0
        %v2308 = vadd.f32 %v2035, %v2307
        %2309 = vmatprep.mubr.bf16.mxu0 0
        %2310 = vmatmul.mubr.bf16.gmra.mrb[0].mxu0 %v854
        %v2311 = vpop.f32.mrb[0].mxu0
        %v2312 = vadd.f32 %v2039, %v2311
        %v2313 = vpop.f32.mrb[0].mxu0
        %v2314 = vadd.f32 %v2041, %v2313
        %v2315 = vpop.f32.mrb[0].mxu0
        %v2316 = vadd.f32 %v2043, %v2315
        %v2317 = vpop.f32.mrb[0].mxu0
        %v2318 = vadd.f32 %v2045, %v2317
        %2319 = vmatprep.mubr.bf16.mxu0 0
        %2320 = vmatmul.mubr.bf16.gmra.mrb[0].mxu0 %v855
        %v2321 = vpop.f32.mrb[0].mxu0
        %v2322 = vadd.f32 %v2049, %v2321
        %v2323 = vpop.f32.mrb[0].mxu0
        %v2324 = vadd.f32 %v2051, %v2323
        %v2325 = vpop.f32.mrb[0].mxu0
        %v2326 = vadd.f32 %v2053, %v2325
        %v2327 = vpop.f32.mrb[0].mxu0
        %v2328 = vadd.f32 %v2055, %v2327
        %2329 = vdwg.mxu0
        %v2330 = vmax.f32 %v1719, %v1721
        %v2331 = vmax.f32 %v1720, %v1722
        %v2332 = vmax.f32 %v1721, %v1723
        %v2333 = vmax.f32 %v1722, %v1724
        %v2334 = vmax.f32 %v1723, %v1725
        %v2335 = vmax.f32 %v1724, %v1726
        %v2336 = vmax.f32 %v1725, %v1727
        %v2337 = vmax.f32 %v1726, %v1728
        %v2338 = vmax.f32 %v1727, %v1729
        %v2339 = vmax.f32 %v1728, %v1730
        %v2340 = vmax.f32 %v1729, %v1731
        %v2341 = vmax.f32 %v1730, %v1732
        %v2342 = vmax.f32 %v1731, %v1733
        %v2343 = vmax.f32 %v1732, %v1734
        %v2344 = vmax.f32 %v1733, %v1735
        %v2345 = vmax.f32 %v1734, %v1736
        %v2346 = vmax.f32 %v1735, %v1737
        %v2347 = vmax.f32 %v1736, %v1738
        %v2348 = vmax.f32 %v1737, %v1739
        %v2349 = vmax.f32 %v1738, %v1740
        %v2350 = vmax.f32 %v1739, %v1741
        %v2351 = vmax.f32 %v1740, %v1742
        %v2352 = vmax.f32 %v1741, %v1743
        %v2353 = vmax.f32 %v1742, %v1744
        %v2354 = vmax.f32 %v1743, %v1745
        %v2355 = vmax.f32 %v1744, %v1746
        %v2356 = vmax.f32 %v1745, %v1747
        %v2357 = vmax.f32 %v1746, %v1748
        %v2358 = vmax.f32 %v2330, %v1723
        %v2359 = vmax.f32 %v2331, %v1724
        %v2360 = vmax.f32 %v2332, %v1725
        %v2361 = vmax.f32 %v2333, %v1726
        %v2362 = vmax.f32 %v2334, %v1727
        %v2363 = vmax.f32 %v2335, %v1728
        %v2364 = vmax.f32 %v2336, %v1729
        %v2365 = vmax.f32 %v2337, %v1730
        %v2366 = vmax.f32 %v2338, %v1731
        %v2367 = vmax.f32 %v2339, %v1732
        %v2368 = vmax.f32 %v2340, %v1733
        %v2369 = vmax.f32 %v2341, %v1734
        %v2370 = vmax.f32 %v2342, %v1735
        %v2371 = vmax.f32 %v2343, %v1736
        %v2372 = vmax.f32 %v2344, %v1737
        %v2373 = vmax.f32 %v2345, %v1738
        %v2374 = vmax.f32 %v2346, %v1739
        %v2375 = vmax.f32 %v2347, %v1740
        %v2376 = vmax.f32 %v2348, %v1741
        %v2377 = vmax.f32 %v2349, %v1742
        %v2378 = vmax.f32 %v2350, %v1743
        %v2379 = vmax.f32 %v2351, %v1744
        %v2380 = vmax.f32 %v2352, %v1745
        %v2381 = vmax.f32 %v2353, %v1746
        %v2382 = vmax.f32 %v2354, %v1747
        %v2383 = vmax.f32 %v2355, %v1748
        %v2384 = vmax.f32 %v2356, %v1749
        %v2385 = vmax.f32 %v2357, %v1750
        %v2386 = vmax.f32 %v2358, %v1725
        %v2387 = vmax.f32 %v2359, %v1726
        %v2388 = vmax.f32 %v2360, %v1727
        %v2389 = vmax.f32 %v2361, %v1728
        %v2390 = vmax.f32 %v2362, %v1729
        %v2391 = vmax.f32 %v2363, %v1730
        %v2392 = vmax.f32 %v2364, %v1731
        %v2393 = vmax.f32 %v2365, %v1732
        %v2394 = vmax.f32 %v2366, %v1733
        %v2395 = vmax.f32 %v2367, %v1734
        %v2396 = vmax.f32 %v2368, %v1735
        %v2397 = vmax.f32 %v2369, %v1736
        %v2398 = vmax.f32 %v2370, %v1737
        %v2399 = vmax.f32 %v2371, %v1738
        %v2400 = vmax.f32 %v2372, %v1739
        %v2401 = vmax.f32 %v2373, %v1740
        %v2402 = vmax.f32 %v2374, %v1741
        %v2403 = vmax.f32 %v2375, %v1742
        %v2404 = vmax.f32 %v2376, %v1743
        %v2405 = vmax.f32 %v2377, %v1744
        %v2406 = vmax.f32 %v2378, %v1745
        %v2407 = vmax.f32 %v2379, %v1746
        %v2408 = vmax.f32 %v2380, %v1747
        %v2409 = vmax.f32 %v2381, %v1748
        %v2410 = vmax.f32 %v2382, %v1749
        %v2411 = vmax.f32 %v2383, %v1750
        %v2412 = vmax.f32 %v2386, %v1727
        %v2413 = vmax.f32 %v2387, %v1728
        %v2414 = vmax.f32 %v2388, %v1729
        %v2415 = vmax.f32 %v2389, %v1730
        %v2416 = vmax.f32 %v2390, %v1731
        %v2417 = vmax.f32 %v2391, %v1732
        %v2418 = vmax.f32 %v2392, %v1733
        %v2419 = vmax.f32 %v2393, %v1734
        %v2420 = vmax.f32 %v2394, %v1735
        %v2421 = vmax.f32 %v2395, %v1736
        %v2422 = vmax.f32 %v2396, %v1737
        %v2423 = vmax.f32 %v2397, %v1738
        %v2424 = vmax.f32 %v2398, %v1739
        %v2425 = vmax.f32 %v2399, %v1740
        %v2426 = vmax.f32 %v2400, %v1741
        %v2427 = vmax.f32 %v2401, %v1742
        %v2428 = vmax.f32 %v2402, %v1743
        %v2429 = vmax.f32 %v2403, %v1744
        %v2430 = vmax.f32 %v2404, %v1745
        %v2431 = vmax.f32 %v2405, %v1746
        %v2432 = vmax.f32 %v2406, %v1747
        %v2433 = vmax.f32 %v2407, %v1748
        %v2434 = vmax.f32 %v2408, %v1749
        %v2435 = vmax.f32 %v2409, %v1750
        %v2468 = vrot.slane %v2358, 6
        %v2469 = vrot.slane %v2359, 6
        %v2470 = vsel %vm1010, %v2468, %v2469
        %v2471 = vrot.slane %v2386, 6
        %v2472 = vrot.slane %v2387, 6
        %v2473 = vsel %vm1010, %v2471, %v2472
        %v2474 = vrot.slane %v2412, 6
        %v2475 = vrot.slane %v2413, 6
        %v2476 = vsel %vm1010, %v2474, %v2475
        %v2477 = vrot.slane %v2414, 6
        %v2478 = vrot.slane %v2415, 6
        %v2479 = vsel %vm1010, %v2477, %v2478
        %v2480 = vrot.slane %v2416, 6
        %v2481 = vrot.slane %v2417, 6
        %v2482 = vsel %vm1010, %v2480, %v2481
        %v2483 = vrot.slane %v2418, 6
        %v2484 = vrot.slane %v2419, 6
        %v2485 = vsel %vm1010, %v2483, %v2484
        %v2486 = vrot.slane %v2420, 6
        %v2487 = vrot.slane %v2421, 6
        %v2488 = vsel %vm1010, %v2486, %v2487
        %v2489 = vrot.slane %v2422, 6
        %v2490 = vrot.slane %v2423, 6
        %v2491 = vsel %vm1010, %v2489, %v2490
        %v2492 = vrot.slane %v2424, 6
        %v2493 = vrot.slane %v2425, 6
        %v2494 = vsel %vm1010, %v2492, %v2493
        %v2495 = vrot.slane %v2426, 6
        %v2496 = vrot.slane %v2427, 6
        %v2497 = vsel %vm1010, %v2495, %v2496
        %v2498 = vrot.slane %v2428, 6
        %v2499 = vrot.slane %v2429, 6
        %v2500 = vsel %vm1010, %v2498, %v2499
        %v2501 = vrot.slane %v2430, 6
        %v2502 = vrot.slane %v2431, 6
        %v2503 = vsel %vm1010, %v2501, %v2502
        %v2504 = vrot.slane %v2432, 6
        %v2505 = vrot.slane %v2433, 6
        %v2506 = vsel %vm1010, %v2504, %v2505
        %v2507 = vrot.slane %v2434, 6
        %v2508 = vrot.slane %v2435, 6
        %v2509 = vsel %vm1010, %v2507, %v2508
        %v2510 = vrot.slane %v2410, 6
        %v2511 = vrot.slane %v2411, 6
        %v2512 = vsel %vm1010, %v2510, %v2511
        %v2513 = vrot.slane %v2384, 6
        %v2514 = vrot.slane %v2385, 6
        %v2515 = vsel %vm1010, %v2513, %v2514
        %v2564 = vsel %vm1010, -inf, %v2468
        %v2565 = vsel %vm1010, -inf, %v2471
        %v2566 = vsel %vm1010, -inf, %v2474
        %v2567 = vsel %vm1010, -inf, %v2477
        %v2568 = vsel %vm1010, -inf, %v2480
        %v2569 = vsel %vm1010, -inf, %v2483
        %v2570 = vsel %vm1010, -inf, %v2486
        %v2571 = vsel %vm1010, -inf, %v2489
        %v2572 = vsel %vm1010, -inf, %v2492
        %v2573 = vsel %vm1010, -inf, %v2495
        %v2574 = vsel %vm1010, -inf, %v2498
        %v2575 = vsel %vm1010, -inf, %v2501
        %v2576 = vsel %vm1010, -inf, %v2504
        %v2577 = vsel %vm1010, -inf, %v2507
        %v2578 = vsel %vm1010, -inf, %v2510
        %v2579 = vsel %vm1010, -inf, %v2513
        %v2580 = vsel %vm1010, %v2469, -inf
        %v2581 = vsel %vm1010, %v2472, -inf
        %v2582 = vsel %vm1010, %v2475, -inf
        %v2583 = vsel %vm1010, %v2478, -inf
        %v2584 = vsel %vm1010, %v2481, -inf
        %v2585 = vsel %vm1010, %v2484, -inf
        %v2586 = vsel %vm1010, %v2487, -inf
        %v2587 = vsel %vm1010, %v2490, -inf
        %v2588 = vsel %vm1010, %v2493, -inf
        %v2589 = vsel %vm1010, %v2496, -inf
        %v2590 = vsel %vm1010, %v2499, -inf
        %v2591 = vsel %vm1010, %v2502, -inf
        %v2592 = vsel %vm1010, %v2505, -inf
        %v2593 = vsel %vm1010, %v2508, -inf
        %v2594 = vsel %vm1010, %v2511, -inf
        %v2595 = vsel %vm1010, %v2514, -inf
        %v2628 = vrot.slane %v2564, 1
        %v2629 = vrot.slane %v2470, 1
        %v2630 = vsel %vm1171, %v2628, %v2629
        %v2631 = vrot.slane %v2580, 1
        %v2632 = vsel %vm1171, %v2629, %v2631
        %v2633 = vrot.slane %v2565, 1
        %v2634 = vrot.slane %v2473, 1
        %v2635 = vsel %vm1171, %v2633, %v2634
        %v2636 = vrot.slane %v2581, 1
        %v2637 = vsel %vm1171, %v2634, %v2636
        %v2638 = vrot.slane %v2566, 1
        %v2639 = vrot.slane %v2476, 1
        %v2640 = vsel %vm1171, %v2638, %v2639
        %v2641 = vrot.slane %v2582, 1
        %v2642 = vsel %vm1171, %v2639, %v2641
        %v2643 = vrot.slane %v2567, 1
        %v2644 = vrot.slane %v2479, 1
        %v2645 = vsel %vm1171, %v2643, %v2644
        %v2646 = vrot.slane %v2583, 1
        %v2647 = vsel %vm1171, %v2644, %v2646
        %v2648 = vrot.slane %v2568, 1
        %v2649 = vrot.slane %v2482, 1
        %v2650 = vsel %vm1171, %v2648, %v2649
        %v2651 = vrot.slane %v2584, 1
        %v2652 = vsel %vm1171, %v2649, %v2651
        %v2653 = vrot.slane %v2569, 1
        %v2654 = vrot.slane %v2485, 1
        %v2655 = vsel %vm1171, %v2653, %v2654
        %v2656 = vrot.slane %v2585, 1
        %v2657 = vsel %vm1171, %v2654, %v2656
        %v2658 = vrot.slane %v2570, 1
        %v2659 = vrot.slane %v2488, 1
        %v2660 = vsel %vm1171, %v2658, %v2659
        %v2661 = vrot.slane %v2586, 1
        %v2662 = vsel %vm1171, %v2659, %v2661
        %v2663 = vrot.slane %v2571, 1
        %v2664 = vrot.slane %v2491, 1
        %v2665 = vsel %vm1171, %v2663, %v2664
        %v2666 = vrot.slane %v2587, 1
        %v2667 = vsel %vm1171, %v2664, %v2666
        %v2668 = vrot.slane %v2572, 1
        %v2669 = vrot.slane %v2494, 1
        %v2670 = vsel %vm1171, %v2668, %v2669
        %v2671 = vrot.slane %v2588, 1
        %v2672 = vsel %vm1171, %v2669, %v2671
        %v2673 = vrot.slane %v2573, 1
        %v2674 = vrot.slane %v2497, 1
        %v2675 = vsel %vm1171, %v2673, %v2674
        %v2676 = vrot.slane %v2589, 1
        %v2677 = vsel %vm1171, %v2674, %v2676
        %v2678 = vrot.slane %v2574, 1
        %v2679 = vrot.slane %v2500, 1
        %v2680 = vsel %vm1171, %v2678, %v2679
        %v2681 = vrot.slane %v2590, 1
        %v2682 = vsel %vm1171, %v2679, %v2681
        %v2683 = vrot.slane %v2575, 1
        %v2684 = vrot.slane %v2503, 1
        %v2685 = vsel %vm1171, %v2683, %v2684
        %v2686 = vrot.slane %v2591, 1
        %v2687 = vsel %vm1171, %v2684, %v2686
        %v2688 = vrot.slane %v2576, 1
        %v2689 = vrot.slane %v2506, 1
        %v2690 = vsel %vm1171, %v2688, %v2689
        %v2691 = vrot.slane %v2592, 1
        %v2692 = vsel %vm1171, %v2689, %v2691
        %v2693 = vrot.slane %v2577, 1
        %v2694 = vrot.slane %v2509, 1
        %v2695 = vsel %vm1171, %v2693, %v2694
        %v2696 = vrot.slane %v2593, 1
        %v2697 = vsel %vm1171, %v2694, %v2696
        %v2698 = vrot.slane %v2578, 1
        %v2699 = vrot.slane %v2512, 1
        %v2700 = vsel %vm1171, %v2698, %v2699
        %v2701 = vrot.slane %v2594, 1
        %v2702 = vsel %vm1171, %v2699, %v2701
        %v2703 = vrot.slane %v2579, 1
        %v2704 = vrot.slane %v2515, 1
        %v2705 = vsel %vm1171, %v2703, %v2704
        %v2706 = vrot.slane %v2595, 1
        %v2707 = vsel %vm1171, %v2704, %v2706
        %v2740 = vmax.f32 %v2564, %v2630
        %v2741 = vmax.f32 %v2470, %v2632
        %v2742 = vmax.f32 %v2565, %v2635
        %v2743 = vmax.f32 %v2473, %v2637
        %v2744 = vmax.f32 %v2566, %v2640
        %v2745 = vmax.f32 %v2476, %v2642
        %v2746 = vmax.f32 %v2567, %v2645
        %v2747 = vmax.f32 %v2479, %v2647
        %v2748 = vmax.f32 %v2568, %v2650
        %v2749 = vmax.f32 %v2482, %v2652
        %v2750 = vmax.f32 %v2569, %v2655
        %v2751 = vmax.f32 %v2485, %v2657
        %v2752 = vmax.f32 %v2570, %v2660
        %v2753 = vmax.f32 %v2488, %v2662
        %v2754 = vmax.f32 %v2571, %v2665
        %v2755 = vmax.f32 %v2491, %v2667
        %v2756 = vmax.f32 %v2572, %v2670
        %v2757 = vmax.f32 %v2494, %v2672
        %v2758 = vmax.f32 %v2573, %v2675
        %v2759 = vmax.f32 %v2497, %v2677
        %v2760 = vmax.f32 %v2574, %v2680
        %v2761 = vmax.f32 %v2500, %v2682
        %v2762 = vmax.f32 %v2575, %v2685
        %v2763 = vmax.f32 %v2503, %v2687
        %v2764 = vmax.f32 %v2576, %v2690
        %v2765 = vmax.f32 %v2506, %v2692
        %v2766 = vmax.f32 %v2577, %v2695
        %v2767 = vmax.f32 %v2509, %v2697
        %v2768 = vmax.f32 %v2578, %v2700
        %v2769 = vmax.f32 %v2512, %v2702
        %v2770 = vmax.f32 %v2579, %v2705
        %v2771 = vmax.f32 %v2515, %v2707
        %v2772 = vrot.slane %v2564, 2
        %v2773 = vrot.slane %v2470, 2
        %v2774 = vsel %vm1316, %v2772, %v2773
        %v2775 = vrot.slane %v2580, 2
        %v2776 = vsel %vm1316, %v2773, %v2775
        %v2777 = vrot.slane %v2565, 2
        %v2778 = vrot.slane %v2473, 2
        %v2779 = vsel %vm1316, %v2777, %v2778
        %v2780 = vrot.slane %v2581, 2
        %v2781 = vsel %vm1316, %v2778, %v2780
        %v2782 = vrot.slane %v2566, 2
        %v2783 = vrot.slane %v2476, 2
        %v2784 = vsel %vm1316, %v2782, %v2783
        %v2785 = vrot.slane %v2582, 2
        %v2786 = vsel %vm1316, %v2783, %v2785
        %v2787 = vrot.slane %v2567, 2
        %v2788 = vrot.slane %v2479, 2
        %v2789 = vsel %vm1316, %v2787, %v2788
        %v2790 = vrot.slane %v2583, 2
        %v2791 = vsel %vm1316, %v2788, %v2790
        %v2792 = vrot.slane %v2568, 2
        %v2793 = vrot.slane %v2482, 2
        %v2794 = vsel %vm1316, %v2792, %v2793
        %v2795 = vrot.slane %v2584, 2
        %v2796 = vsel %vm1316, %v2793, %v2795
        %v2797 = vrot.slane %v2569, 2
        %v2798 = vrot.slane %v2485, 2
        %v2799 = vsel %vm1316, %v2797, %v2798
        %v2800 = vrot.slane %v2585, 2
        %v2801 = vsel %vm1316, %v2798, %v2800
        %v2802 = vrot.slane %v2570, 2
        %v2803 = vrot.slane %v2488, 2
        %v2804 = vsel %vm1316, %v2802, %v2803
        %v2805 = vrot.slane %v2586, 2
        %v2806 = vsel %vm1316, %v2803, %v2805
        %v2807 = vrot.slane %v2571, 2
        %v2808 = vrot.slane %v2491, 2
        %v2809 = vsel %vm1316, %v2807, %v2808
        %v2810 = vrot.slane %v2587, 2
        %v2811 = vsel %vm1316, %v2808, %v2810
        %v2812 = vrot.slane %v2572, 2
        %v2813 = vrot.slane %v2494, 2
        %v2814 = vsel %vm1316, %v2812, %v2813
        %v2815 = vrot.slane %v2588, 2
        %v2816 = vsel %vm1316, %v2813, %v2815
        %v2817 = vrot.slane %v2573, 2
        %v2818 = vrot.slane %v2497, 2
        %v2819 = vsel %vm1316, %v2817, %v2818
        %v2820 = vrot.slane %v2589, 2
        %v2821 = vsel %vm1316, %v2818, %v2820
        %v2822 = vrot.slane %v2574, 2
        %v2823 = vrot.slane %v2500, 2
        %v2824 = vsel %vm1316, %v2822, %v2823
        %v2825 = vrot.slane %v2590, 2
        %v2826 = vsel %vm1316, %v2823, %v2825
        %v2827 = vrot.slane %v2575, 2
        %v2828 = vrot.slane %v2503, 2
        %v2829 = vsel %vm1316, %v2827, %v2828
        %v2830 = vrot.slane %v2591, 2
        %v2831 = vsel %vm1316, %v2828, %v2830
        %v2832 = vrot.slane %v2576, 2
        %v2833 = vrot.slane %v2506, 2
        %v2834 = vsel %vm1316, %v2832, %v2833
        %v2835 = vrot.slane %v2592, 2
        %v2836 = vsel %vm1316, %v2833, %v2835
        %v2837 = vrot.slane %v2577, 2
        %v2838 = vrot.slane %v2509, 2
        %v2839 = vsel %vm1316, %v2837, %v2838
        %v2840 = vrot.slane %v2593, 2
        %v2841 = vsel %vm1316, %v2838, %v2840
        %v2842 = vrot.slane %v2578, 2
        %v2843 = vrot.slane %v2512, 2
        %v2844 = vsel %vm1316, %v2842, %v2843
        %v2845 = vrot.slane %v2594, 2
        %v2846 = vsel %vm1316, %v2843, %v2845
        %v2847 = vrot.slane %v2579, 2
        %v2848 = vrot.slane %v2515, 2
        %v2849 = vsel %vm1316, %v2847, %v2848
        %v2850 = vrot.slane %v2595, 2
        %v2851 = vsel %vm1316, %v2848, %v2850
        %v2884 = vmax.f32 %v2740, %v2774
        %v2885 = vmax.f32 %v2741, %v2776
        %v2886 = vmax.f32 %v2742, %v2779
        %v2887 = vmax.f32 %v2743, %v2781
        %v2888 = vmax.f32 %v2744, %v2784
        %v2889 = vmax.f32 %v2745, %v2786
        %v2890 = vmax.f32 %v2746, %v2789
        %v2891 = vmax.f32 %v2747, %v2791
        %v2892 = vmax.f32 %v2748, %v2794
        %v2893 = vmax.f32 %v2749, %v2796
        %v2894 = vmax.f32 %v2750, %v2799
        %v2895 = vmax.f32 %v2751, %v2801
        %v2896 = vmax.f32 %v2752, %v2804
        %v2897 = vmax.f32 %v2753, %v2806
        %v2898 = vmax.f32 %v2754, %v2809
        %v2899 = vmax.f32 %v2755, %v2811
        %v2900 = vmax.f32 %v2756, %v2814
        %v2901 = vmax.f32 %v2757, %v2816
        %v2902 = vmax.f32 %v2758, %v2819
        %v2903 = vmax.f32 %v2759, %v2821
        %v2904 = vmax.f32 %v2760, %v2824
        %v2905 = vmax.f32 %v2761, %v2826
        %v2906 = vmax.f32 %v2762, %v2829
        %v2907 = vmax.f32 %v2763, %v2831
        %v2908 = vmax.f32 %v2764, %v2834
        %v2909 = vmax.f32 %v2765, %v2836
        %v2910 = vmax.f32 %v2766, %v2839
        %v2911 = vmax.f32 %v2767, %v2841
        %v2912 = vmax.f32 %v2768, %v2844
        %v2913 = vmax.f32 %v2769, %v2846
        %v2914 = vmax.f32 %v2770, %v2849
        %v2915 = vmax.f32 %v2771, %v2851
        %v2916 = vrot.slane %v2564, 3
        %v2917 = vrot.slane %v2470, 3
        %v2918 = vsel %vm1461, %v2916, %v2917
        %v2919 = vrot.slane %v2580, 3
        %v2920 = vsel %vm1461, %v2917, %v2919
        %v2921 = vrot.slane %v2565, 3
        %v2922 = vrot.slane %v2473, 3
        %v2923 = vsel %vm1461, %v2921, %v2922
        %v2924 = vrot.slane %v2581, 3
        %v2925 = vsel %vm1461, %v2922, %v2924
        %v2926 = vrot.slane %v2566, 3
        %v2927 = vrot.slane %v2476, 3
        %v2928 = vsel %vm1461, %v2926, %v2927
        %v2929 = vrot.slane %v2582, 3
        %v2930 = vsel %vm1461, %v2927, %v2929
        %v2931 = vrot.slane %v2567, 3
        %v2932 = vrot.slane %v2479, 3
        %v2933 = vsel %vm1461, %v2931, %v2932
        %v2934 = vrot.slane %v2583, 3
        %v2935 = vsel %vm1461, %v2932, %v2934
        %v2936 = vrot.slane %v2568, 3
        %v2937 = vrot.slane %v2482, 3
        %v2938 = vsel %vm1461, %v2936, %v2937
        %v2939 = vrot.slane %v2584, 3
        %v2940 = vsel %vm1461, %v2937, %v2939
        %v2941 = vrot.slane %v2569, 3
        %v2942 = vrot.slane %v2485, 3
        %v2943 = vsel %vm1461, %v2941, %v2942
        %v2944 = vrot.slane %v2585, 3
        %v2945 = vsel %vm1461, %v2942, %v2944
        %v2946 = vrot.slane %v2570, 3
        %v2947 = vrot.slane %v2488, 3
        %v2948 = vsel %vm1461, %v2946, %v2947
        %v2949 = vrot.slane %v2586, 3
        %v2950 = vsel %vm1461, %v2947, %v2949
        %v2951 = vrot.slane %v2571, 3
        %v2952 = vrot.slane %v2491, 3
        %v2953 = vsel %vm1461, %v2951, %v2952
        %v2954 = vrot.slane %v2587, 3
        %v2955 = vsel %vm1461, %v2952, %v2954
        %v2956 = vrot.slane %v2572, 3
        %v2957 = vrot.slane %v2494, 3
        %v2958 = vsel %vm1461, %v2956, %v2957
        %v2959 = vrot.slane %v2588, 3
        %v2960 = vsel %vm1461, %v2957, %v2959
        %v2961 = vrot.slane %v2573, 3
        %v2962 = vrot.slane %v2497, 3
        %v2963 = vsel %vm1461, %v2961, %v2962
        %v2964 = vrot.slane %v2589, 3
        %v2965 = vsel %vm1461, %v2962, %v2964
        %v2966 = vrot.slane %v2574, 3
        %v2967 = vrot.slane %v2500, 3
        %v2968 = vsel %vm1461, %v2966, %v2967
        %v2969 = vrot.slane %v2590, 3
        %v2970 = vsel %vm1461, %v2967, %v2969
        %v2971 = vrot.slane %v2575, 3
        %v2972 = vrot.slane %v2503, 3
        %v2973 = vsel %vm1461, %v2971, %v2972
        %v2974 = vrot.slane %v2591, 3
        %v2975 = vsel %vm1461, %v2972, %v2974
        %v2976 = vrot.slane %v2576, 3
        %v2977 = vrot.slane %v2506, 3
        %v2978 = vsel %vm1461, %v2976, %v2977
        %v2979 = vrot.slane %v2592, 3
        %v2980 = vsel %vm1461, %v2977, %v2979
        %v2981 = vrot.slane %v2577, 3
        %v2982 = vrot.slane %v2509, 3
        %v2983 = vsel %vm1461, %v2981, %v2982
        %v2984 = vrot.slane %v2593, 3
        %v2985 = vsel %vm1461, %v2982, %v2984
        %v2986 = vrot.slane %v2578, 3
        %v2987 = vrot.slane %v2512, 3
        %v2988 = vsel %vm1461, %v2986, %v2987
        %v2989 = vrot.slane %v2594, 3
        %v2990 = vsel %vm1461, %v2987, %v2989
        %v2991 = vrot.slane %v2579, 3
        %v2992 = vrot.slane %v2515, 3
        %v2993 = vsel %vm1461, %v2991, %v2992
        %v2994 = vrot.slane %v2595, 3
        %v2995 = vsel %vm1461, %v2992, %v2994
        %v3028 = vmax.f32 %v2884, %v2918
        %v3029 = vmax.f32 %v2885, %v2920
        %v3030 = vmax.f32 %v2886, %v2923
        %v3031 = vmax.f32 %v2887, %v2925
        %v3032 = vmax.f32 %v2888, %v2928
        %v3033 = vmax.f32 %v2889, %v2930
        %v3034 = vmax.f32 %v2890, %v2933
        %v3035 = vmax.f32 %v2891, %v2935
        %v3036 = vmax.f32 %v2892, %v2938
        %v3037 = vmax.f32 %v2893, %v2940
        %v3038 = vmax.f32 %v2894, %v2943
        %v3039 = vmax.f32 %v2895, %v2945
        %v3040 = vmax.f32 %v2896, %v2948
        %v3041 = vmax.f32 %v2897, %v2950
        %v3042 = vmax.f32 %v2898, %v2953
        %v3043 = vmax.f32 %v2899, %v2955
        %v3044 = vmax.f32 %v2900, %v2958
        %v3045 = vmax.f32 %v2901, %v2960
        %v3046 = vmax.f32 %v2902, %v2963
        %v3047 = vmax.f32 %v2903, %v2965
        %v3048 = vmax.f32 %v2904, %v2968
        %v3049 = vmax.f32 %v2905, %v2970
        %v3050 = vmax.f32 %v2906, %v2973
        %v3051 = vmax.f32 %v2907, %v2975
        %v3052 = vmax.f32 %v2908, %v2978
        %v3053 = vmax.f32 %v2909, %v2980
        %v3054 = vmax.f32 %v2910, %v2983
        %v3055 = vmax.f32 %v2911, %v2985
        %v3056 = vmax.f32 %v2912, %v2988
        %v3057 = vmax.f32 %v2913, %v2990
        %v3058 = vmax.f32 %v2914, %v2993
        %v3059 = vmax.f32 %v2915, %v2995
        %v3060 = vrot.slane %v2564, 4
        %v3061 = vrot.slane %v2470, 4
        %v3062 = vsel %vm1606, %v3060, %v3061
        %v3063 = vrot.slane %v2580, 4
        %v3064 = vsel %vm1606, %v3061, %v3063
        %v3065 = vrot.slane %v2565, 4
        %v3066 = vrot.slane %v2473, 4
        %v3067 = vsel %vm1606, %v3065, %v3066
        %v3068 = vrot.slane %v2581, 4
        %v3069 = vsel %vm1606, %v3066, %v3068
        %v3070 = vrot.slane %v2566, 4
        %v3071 = vrot.slane %v2476, 4
        %v3072 = vsel %vm1606, %v3070, %v3071
        %v3073 = vrot.slane %v2582, 4
        %v3074 = vsel %vm1606, %v3071, %v3073
        %v3075 = vrot.slane %v2567, 4
        %v3076 = vrot.slane %v2479, 4
        %v3077 = vsel %vm1606, %v3075, %v3076
        %v3078 = vrot.slane %v2583, 4
        %v3079 = vsel %vm1606, %v3076, %v3078
        %v3080 = vrot.slane %v2568, 4
        %v3081 = vrot.slane %v2482, 4
        %v3082 = vsel %vm1606, %v3080, %v3081
        %v3083 = vrot.slane %v2584, 4
        %v3084 = vsel %vm1606, %v3081, %v3083
        %v3085 = vrot.slane %v2569, 4
        %v3086 = vrot.slane %v2485, 4
        %v3087 = vsel %vm1606, %v3085, %v3086
        %v3088 = vrot.slane %v2585, 4
        %v3089 = vsel %vm1606, %v3086, %v3088
        %v3090 = vrot.slane %v2570, 4
        %v3091 = vrot.slane %v2488, 4
        %v3092 = vsel %vm1606, %v3090, %v3091
        %v3093 = vrot.slane %v2586, 4
        %v3094 = vsel %vm1606, %v3091, %v3093
        %v3095 = vrot.slane %v2571, 4
        %v3096 = vrot.slane %v2491, 4
        %v3097 = vsel %vm1606, %v3095, %v3096
        %v3098 = vrot.slane %v2587, 4
        %v3099 = vsel %vm1606, %v3096, %v3098
        %v3100 = vrot.slane %v2572, 4
        %v3101 = vrot.slane %v2494, 4
        %v3102 = vsel %vm1606, %v3100, %v3101
        %v3103 = vrot.slane %v2588, 4
        %v3104 = vsel %vm1606, %v3101, %v3103
        %v3105 = vrot.slane %v2573, 4
        %v3106 = vrot.slane %v2497, 4
        %v3107 = vsel %vm1606, %v3105, %v3106
        %v3108 = vrot.slane %v2589, 4
        %v3109 = vsel %vm1606, %v3106, %v3108
        %v3110 = vrot.slane %v2574, 4
        %v3111 = vrot.slane %v2500, 4
        %v3112 = vsel %vm1606, %v3110, %v3111
        %v3113 = vrot.slane %v2590, 4
        %v3114 = vsel %vm1606, %v3111, %v3113
        %v3115 = vrot.slane %v2575, 4
        %v3116 = vrot.slane %v2503, 4
        %v3117 = vsel %vm1606, %v3115, %v3116
        %v3118 = vrot.slane %v2591, 4
        %v3119 = vsel %vm1606, %v3116, %v3118
        %v3120 = vrot.slane %v2576, 4
        %v3121 = vrot.slane %v2506, 4
        %v3122 = vsel %vm1606, %v3120, %v3121
        %v3123 = vrot.slane %v2592, 4
        %v3124 = vsel %vm1606, %v3121, %v3123
        %v3125 = vrot.slane %v2577, 4
        %v3126 = vrot.slane %v2509, 4
        %v3127 = vsel %vm1606, %v3125, %v3126
        %v3128 = vrot.slane %v2593, 4
        %v3129 = vsel %vm1606, %v3126, %v3128
        %v3130 = vrot.slane %v2578, 4
        %v3131 = vrot.slane %v2512, 4
        %v3132 = vsel %vm1606, %v3130, %v3131
        %v3133 = vrot.slane %v2594, 4
        %v3134 = vsel %vm1606, %v3131, %v3133
        %v3135 = vrot.slane %v2579, 4
        %v3136 = vrot.slane %v2515, 4
        %v3137 = vsel %vm1606, %v3135, %v3136
        %v3138 = vrot.slane %v2595, 4
        %v3139 = vsel %vm1606, %v3136, %v3138
        %v3172 = vmax.f32 %v3028, %v3062
        %v3173 = vmax.f32 %v3029, %v3064
        %v3174 = vmax.f32 %v3030, %v3067
        %v3175 = vmax.f32 %v3031, %v3069
        %v3176 = vmax.f32 %v3032, %v3072
        %v3177 = vmax.f32 %v3033, %v3074
        %v3178 = vmax.f32 %v3034, %v3077
        %v3179 = vmax.f32 %v3035, %v3079
        %v3180 = vmax.f32 %v3036, %v3082
        %v3181 = vmax.f32 %v3037, %v3084
        %v3182 = vmax.f32 %v3038, %v3087
        %v3183 = vmax.f32 %v3039, %v3089
        %v3184 = vmax.f32 %v3040, %v3092
        %v3185 = vmax.f32 %v3041, %v3094
        %v3186 = vmax.f32 %v3042, %v3097
        %v3187 = vmax.f32 %v3043, %v3099
        %v3188 = vmax.f32 %v3044, %v3102
        %v3189 = vmax.f32 %v3045, %v3104
        %v3190 = vmax.f32 %v3046, %v3107
        %v3191 = vmax.f32 %v3047, %v3109
        %v3192 = vmax.f32 %v3048, %v3112
        %v3193 = vmax.f32 %v3049, %v3114
        %v3194 = vmax.f32 %v3050, %v3117
        %v3195 = vmax.f32 %v3051, %v3119
        %v3196 = vmax.f32 %v3052, %v3122
        %v3197 = vmax.f32 %v3053, %v3124
        %v3198 = vmax.f32 %v3054, %v3127
        %v3199 = vmax.f32 %v3055, %v3129
        %v3200 = vmax.f32 %v3056, %v3132
        %v3201 = vmax.f32 %v3057, %v3134
        %v3202 = vmax.f32 %v3058, %v3137
        %v3203 = vmax.f32 %v3059, %v3139
        %v3204 = vpack.c.bf16 %v3173, %v3172
        %v3205 = vpack.c.bf16 %v3175, %v3174
        %v3206 = vpack.c.bf16 %v3177, %v3176
        %v3207 = vpack.c.bf16 %v3179, %v3178
        %v3208 = vpack.c.bf16 %v3181, %v3180
        %v3209 = vpack.c.bf16 %v3183, %v3182
        %v3210 = vpack.c.bf16 %v3185, %v3184
        %v3211 = vpack.c.bf16 %v3187, %v3186
        %v3212 = vpack.c.bf16 %v3189, %v3188
        %v3213 = vpack.c.bf16 %v3191, %v3190
        %v3214 = vpack.c.bf16 %v3193, %v3192
        %v3215 = vpack.c.bf16 %v3195, %v3194
        %v3216 = vpack.c.bf16 %v3197, %v3196
        %v3217 = vpack.c.bf16 %v3199, %v3198
        %v3218 = vpack.c.bf16 %v3201, %v3200
        %v3219 = vpack.c.bf16 %v3203, %v3202
        %s3220 = scalar_lea.vmem %s3, 256
        %v3221 = vld [vmem:[%s3220] sm:$0xff]
        %v3222 = vld [vmem:[%s3220 + $0x8] sm:$0xff]
        %v3223 = vld [vmem:[%s3220 + $0x10] sm:$0xff]
        %v3224 = vld [vmem:[%s3220 + $0x18] sm:$0xff]
        %v3225 = vld [vmem:[%s3220 + $0x20] sm:$0xff]
        %v3226 = vld [vmem:[%s3220 + $0x28] sm:$0xff]
        %v3227 = vld [vmem:[%s3220 + $0x30] sm:$0xff]
        %v3228 = vld [vmem:[%s3220 + $0x38] sm:$0xff]
        %v3229 = vld [vmem:[%s3220 + $0x40] sm:$0xff]
        %v3230 = vld [vmem:[%s3220 + $0x48] sm:$0xff]
        %v3231 = vld [vmem:[%s3220 + $0x50] sm:$0xff]
        %v3232 = vld [vmem:[%s3220 + $0x58] sm:$0xff]
        %v3233 = vld [vmem:[%s3220 + $0x60] sm:$0xff]
        %v3234 = vld [vmem:[%s3220 + $0x68] sm:$0xff]
        %v3235 = vld [vmem:[%s3220 + $0x70] sm:$0xff]
        %v3236 = vld [vmem:[%s3220 + $0x78] sm:$0xff]
        %v3253 = vunpack.c.l.b16 %v3221
        %v3254 = vunpack.c.h.b16 %v3221
        %v3255 = vunpack.c.l.b16 %v3222
        %v3256 = vunpack.c.h.b16 %v3222
        %v3257 = vunpack.c.l.b16 %v3223
        %v3258 = vunpack.c.h.b16 %v3223
        %v3259 = vunpack.c.l.b16 %v3224
        %v3260 = vunpack.c.h.b16 %v3224
        %v3261 = vunpack.c.l.b16 %v3225
        %v3262 = vunpack.c.h.b16 %v3225
        %v3263 = vunpack.c.l.b16 %v3226
        %v3264 = vunpack.c.h.b16 %v3226
        %v3265 = vunpack.c.l.b16 %v3227
        %v3266 = vunpack.c.h.b16 %v3227
        %v3267 = vunpack.c.l.b16 %v3228
        %v3268 = vunpack.c.h.b16 %v3228
        %v3269 = vunpack.c.l.b16 %v3229
        %v3270 = vunpack.c.h.b16 %v3229
        %v3271 = vunpack.c.l.b16 %v3230
        %v3272 = vunpack.c.h.b16 %v3230
        %v3273 = vunpack.c.l.b16 %v3231
        %v3274 = vunpack.c.h.b16 %v3231
        %v3275 = vunpack.c.l.b16 %v3232
        %v3276 = vunpack.c.h.b16 %v3232
        %v3277 = vunpack.c.l.b16 %v3233
        %v3278 = vunpack.c.h.b16 %v3233
        %v3279 = vunpack.c.l.b16 %v3234
        %v3280 = vunpack.c.h.b16 %v3234
        %v3281 = vunpack.c.l.b16 %v3235
        %v3282 = vunpack.c.h.b16 %v3235
        %v3283 = vunpack.c.l.b16 %v3236
        %v3284 = vunpack.c.h.b16 %v3236
        %v3285 = vpack.c.b16 %v3255, %v3253
        %v3286 = vpack.c.b16 %v3256, %v3254
        %v3287 = vpack.c.b16 %v3259, %v3257
        %v3288 = vpack.c.b16 %v3260, %v3258
        %v3289 = vpack.c.b16 %v3263, %v3261
        %v3290 = vpack.c.b16 %v3264, %v3262
        %v3291 = vpack.c.b16 %v3267, %v3265
        %v3292 = vpack.c.b16 %v3268, %v3266
        %v3293 = vpack.c.b16 %v3271, %v3269
        %v3294 = vpack.c.b16 %v3272, %v3270
        %v3295 = vpack.c.b16 %v3275, %v3273
        %v3296 = vpack.c.b16 %v3276, %v3274
        %v3297 = vpack.c.b16 %v3279, %v3277
        %v3298 = vpack.c.b16 %v3280, %v3278
        %v3299 = vpack.c.b16 %v3283, %v3281
        %v3300 = vpack.c.b16 %v3284, %v3282
        %3317 = vmatprep.subr.bf16.mxu0 %v3286
        %3318 = vmatpush1.bf16.msra.mxu0 %v3285
        %3319 = vmatprep.subr.bf16.mxu0 %v3288
        %3320 = vmatpush1.bf16.msra.mxu0 %v3287
        %3321 = vmatprep.subr.bf16.mxu0 %v3290
        %3322 = vmatpush1.bf16.msra.mxu0 %v3289
        %3323 = vmatprep.subr.bf16.mxu0 %v3292
        %3324 = vmatpush1.bf16.msra.mxu0 %v3291
        %3325 = vmatprep.subr.bf16.mxu0 %v3294
        %3326 = vmatpush1.bf16.msra.mxu0 %v3293
        %3327 = vmatprep.subr.bf16.mxu0 %v3296
        %3328 = vmatpush1.bf16.msra.mxu0 %v3295
        %3329 = vmatprep.subr.bf16.mxu0 %v3298
        %3330 = vmatpush1.bf16.msra.mxu0 %v3297
        %3331 = vmatprep.subr.bf16.mxu0 %v3300
        %3332 = vmatpush1.bf16.msra.mxu0 %v3299
        %3333 = vmatprep.subr.bf16.mxu0 0
        %3334 = vmatpush1.bf16.msra.mxu0 0
        %3335 = vmatprep.subr.bf16.mxu0 0
        %3336 = vmatpush1.bf16.msra.mxu0 0
        %3337 = vmatprep.subr.bf16.mxu0 0
        %3338 = vmatpush1.bf16.msra.mxu0 0
        %3339 = vmatprep.subr.bf16.mxu0 0
        %3340 = vmatpush1.bf16.msra.mxu0 0
        %3341 = vmatprep.subr.bf16.mxu0 0
        %3342 = vmatpush1.bf16.msra.mxu0 0
        %3343 = vmatprep.subr.bf16.mxu0 0
        %3344 = vmatpush1.bf16.msra.mxu0 0
        %3345 = vmatprep.subr.bf16.mxu0 0
        %3346 = vmatpush1.bf16.msra.mxu0 0
        %3347 = vmatprep.subr.bf16.mxu0 0
        %3348 = vmatpush1.bf16.msra.mxu0 0
        %3349 = vmatprep.mubr.bf16.mxu0 0
        %3350 = vmatmul.mubr.bf16.gmra.mrb[0].mxu0 %v3204
        %v3351 = vpop.f32.mrb[0].mxu0
        %v3352 = vadd.f32 0.0, %v3351
        %v3353 = vpop.f32.mrb[0].mxu0
        %v3354 = vadd.f32 0.0, %v3353
        %v3355 = vpop.f32.mrb[0].mxu0
        %v3356 = vadd.f32 0.0, %v3355
        %v3357 = vpop.f32.mrb[0].mxu0
        %v3358 = vadd.f32 0.0, %v3357
        %3359 = vmatprep.mubr.bf16.mxu0 0
        %3360 = vmatmul.mubr.bf16.gmra.mrb[0].mxu0 %v3205
        %v3361 = vpop.f32.mrb[0].mxu0
        %v3362 = vadd.f32 0.0, %v3361
        %v3363 = vpop.f32.mrb[0].mxu0
        %v3364 = vadd.f32 0.0, %v3363
        %v3365 = vpop.f32.mrb[0].mxu0
        %v3366 = vadd.f32 0.0, %v3365
        %v3367 = vpop.f32.mrb[0].mxu0
        %v3368 = vadd.f32 0.0, %v3367
        %3369 = vmatprep.mubr.bf16.mxu0 0
        %3370 = vmatmul.mubr.bf16.gmra.mrb[0].mxu0 %v3206
        %v3371 = vpop.f32.mrb[0].mxu0
        %v3372 = vadd.f32 0.0, %v3371
        %v3373 = vpop.f32.mrb[0].mxu0
        %v3374 = vadd.f32 0.0, %v3373
        %v3375 = vpop.f32.mrb[0].mxu0
        %v3376 = vadd.f32 0.0, %v3375
        %v3377 = vpop.f32.mrb[0].mxu0
        %v3378 = vadd.f32 0.0, %v3377
        %3379 = vmatprep.mubr.bf16.mxu0 0
        %3380 = vmatmul.mubr.bf16.gmra.mrb[0].mxu0 %v3207
        %v3381 = vpop.f32.mrb[0].mxu0
        %v3382 = vadd.f32 0.0, %v3381
        %v3383 = vpop.f32.mrb[0].mxu0
        %v3384 = vadd.f32 0.0, %v3383
        %v3385 = vpop.f32.mrb[0].mxu0
        %v3386 = vadd.f32 0.0, %v3385
        %v3387 = vpop.f32.mrb[0].mxu0
        %v3388 = vadd.f32 0.0, %v3387
        %3389 = vmatprep.mubr.bf16.mxu0 0
        %3390 = vmatmul.mubr.bf16.gmra.mrb[0].mxu0 %v3208
        %v3391 = vpop.f32.mrb[0].mxu0
        %v3392 = vadd.f32 0.0, %v3391
        %v3393 = vpop.f32.mrb[0].mxu0
        %v3394 = vadd.f32 0.0, %v3393
        %v3395 = vpop.f32.mrb[0].mxu0
        %v3396 = vadd.f32 0.0, %v3395
        %v3397 = vpop.f32.mrb[0].mxu0
        %v3398 = vadd.f32 0.0, %v3397
        %3399 = vmatprep.mubr.bf16.mxu0 0
        %3400 = vmatmul.mubr.bf16.gmra.mrb[0].mxu0 %v3209
        %v3401 = vpop.f32.mrb[0].mxu0
        %v3402 = vadd.f32 0.0, %v3401
        %v3403 = vpop.f32.mrb[0].mxu0
        %v3404 = vadd.f32 0.0, %v3403
        %v3405 = vpop.f32.mrb[0].mxu0
        %v3406 = vadd.f32 0.0, %v3405
        %v3407 = vpop.f32.mrb[0].mxu0
        %v3408 = vadd.f32 0.0, %v3407
        %3409 = vmatprep.mubr.bf16.mxu0 0
        %3410 = vmatmul.mubr.bf16.gmra.mrb[0].mxu0 %v3210
        %v3411 = vpop.f32.mrb[0].mxu0
        %v3412 = vadd.f32 0.0, %v3411
        %v3413 = vpop.f32.mrb[0].mxu0
        %v3414 = vadd.f32 0.0, %v3413
        %v3415 = vpop.f32.mrb[0].mxu0
        %v3416 = vadd.f32 0.0, %v3415
        %v3417 = vpop.f32.mrb[0].mxu0
        %v3418 = vadd.f32 0.0, %v3417
        %3419 = vmatprep.mubr.bf16.mxu0 0
        %3420 = vmatmul.mubr.bf16.gmra.mrb[0].mxu0 %v3211
        %v3421 = vpop.f32.mrb[0].mxu0
        %v3422 = vadd.f32 0.0, %v3421
        %v3423 = vpop.f32.mrb[0].mxu0
        %v3424 = vadd.f32 0.0, %v3423
        %v3425 = vpop.f32.mrb[0].mxu0
        %v3426 = vadd.f32 0.0, %v3425
        %v3427 = vpop.f32.mrb[0].mxu0
        %v3428 = vadd.f32 0.0, %v3427
        %3429 = vmatprep.mubr.bf16.mxu0 0
        %3430 = vmatmul.mubr.bf16.gmra.mrb[0].mxu0 %v3212
        %v3431 = vpop.f32.mrb[0].mxu0
        %v3432 = vadd.f32 0.0, %v3431
        %v3433 = vpop.f32.mrb[0].mxu0
        %v3434 = vadd.f32 0.0, %v3433
        %v3435 = vpop.f32.mrb[0].mxu0
        %v3436 = vadd.f32 0.0, %v3435
        %v3437 = vpop.f32.mrb[0].mxu0
        %v3438 = vadd.f32 0.0, %v3437
        %3439 = vmatprep.mubr.bf16.mxu0 0
        %3440 = vmatmul.mubr.bf16.gmra.mrb[0].mxu0 %v3213
        %v3441 = vpop.f32.mrb[0].mxu0
        %v3442 = vadd.f32 0.0, %v3441
        %v3443 = vpop.f32.mrb[0].mxu0
        %v3444 = vadd.f32 0.0, %v3443
        %v3445 = vpop.f32.mrb[0].mxu0
        %v3446 = vadd.f32 0.0, %v3445
        %v3447 = vpop.f32.mrb[0].mxu0
        %v3448 = vadd.f32 0.0, %v3447
        %3449 = vmatprep.mubr.bf16.mxu0 0
        %3450 = vmatmul.mubr.bf16.gmra.mrb[0].mxu0 %v3214
        %v3451 = vpop.f32.mrb[0].mxu0
        %v3452 = vadd.f32 0.0, %v3451
        %v3453 = vpop.f32.mrb[0].mxu0
        %v3454 = vadd.f32 0.0, %v3453
        %v3455 = vpop.f32.mrb[0].mxu0
        %v3456 = vadd.f32 0.0, %v3455
        %v3457 = vpop.f32.mrb[0].mxu0
        %v3458 = vadd.f32 0.0, %v3457
        %3459 = vmatprep.mubr.bf16.mxu0 0
        %3460 = vmatmul.mubr.bf16.gmra.mrb[0].mxu0 %v3215
        %v3461 = vpop.f32.mrb[0].mxu0
        %v3462 = vadd.f32 0.0, %v3461
        %v3463 = vpop.f32.mrb[0].mxu0
        %v3464 = vadd.f32 0.0, %v3463
        %v3465 = vpop.f32.mrb[0].mxu0
        %v3466 = vadd.f32 0.0, %v3465
        %v3467 = vpop.f32.mrb[0].mxu0
        %v3468 = vadd.f32 0.0, %v3467
        %3469 = vmatprep.mubr.bf16.mxu0 0
        %3470 = vmatmul.mubr.bf16.gmra.mrb[0].mxu0 %v3216
        %v3471 = vpop.f32.mrb[0].mxu0
        %v3472 = vadd.f32 0.0, %v3471
        %v3473 = vpop.f32.mrb[0].mxu0
        %v3474 = vadd.f32 0.0, %v3473
        %v3475 = vpop.f32.mrb[0].mxu0
        %v3476 = vadd.f32 0.0, %v3475
        %v3477 = vpop.f32.mrb[0].mxu0
        %v3478 = vadd.f32 0.0, %v3477
        %3479 = vmatprep.mubr.bf16.mxu0 0
        %3480 = vmatmul.mubr.bf16.gmra.mrb[0].mxu0 %v3217
        %v3481 = vpop.f32.mrb[0].mxu0
        %v3482 = vadd.f32 0.0, %v3481
        %v3483 = vpop.f32.mrb[0].mxu0
        %v3484 = vadd.f32 0.0, %v3483
        %v3485 = vpop.f32.mrb[0].mxu0
        %v3486 = vadd.f32 0.0, %v3485
        %v3487 = vpop.f32.mrb[0].mxu0
        %v3488 = vadd.f32 0.0, %v3487
        %3489 = vmatprep.mubr.bf16.mxu0 0
        %3490 = vmatmul.mubr.bf16.gmra.mrb[0].mxu0 %v3218
        %v3491 = vpop.f32.mrb[0].mxu0
        %v3492 = vadd.f32 0.0, %v3491
        %v3493 = vpop.f32.mrb[0].mxu0
        %v3494 = vadd.f32 0.0, %v3493
        %v3495 = vpop.f32.mrb[0].mxu0
        %v3496 = vadd.f32 0.0, %v3495
        %v3497 = vpop.f32.mrb[0].mxu0
        %v3498 = vadd.f32 0.0, %v3497
        %3499 = vmatprep.mubr.bf16.mxu0 0
        %3500 = vmatmul.mubr.bf16.gmra.mrb[0].mxu0 %v3219
        %v3501 = vpop.f32.mrb[0].mxu0
        %v3502 = vadd.f32 0.0, %v3501
        %v3503 = vpop.f32.mrb[0].mxu0
        %v3504 = vadd.f32 0.0, %v3503
        %v3505 = vpop.f32.mrb[0].mxu0
        %v3506 = vadd.f32 0.0, %v3505
        %v3507 = vpop.f32.mrb[0].mxu0
        %v3508 = vadd.f32 0.0, %v3507
        %3509 = vdwg.mxu0
        %v3510 = vadd.f32 %v2172, %v3352
        %v3511 = vadd.f32 %v2174, %v3354
        %v3512 = vadd.f32 %v2176, %v3356
        %v3513 = vadd.f32 %v2178, %v3358
        %v3514 = vadd.f32 %v2182, %v3362
        %v3515 = vadd.f32 %v2184, %v3364
        %v3516 = vadd.f32 %v2186, %v3366
        %v3517 = vadd.f32 %v2188, %v3368
        %v3518 = vadd.f32 %v2192, %v3372
        %v3519 = vadd.f32 %v2194, %v3374
        %v3520 = vadd.f32 %v2196, %v3376
        %v3521 = vadd.f32 %v2198, %v3378
        %v3522 = vadd.f32 %v2202, %v3382
        %v3523 = vadd.f32 %v2204, %v3384
        %v3524 = vadd.f32 %v2206, %v3386
        %v3525 = vadd.f32 %v2208, %v3388
        %v3526 = vadd.f32 %v2212, %v3392
        %v3527 = vadd.f32 %v2214, %v3394
        %v3528 = vadd.f32 %v2216, %v3396
        %v3529 = vadd.f32 %v2218, %v3398
        %v3530 = vadd.f32 %v2222, %v3402
        %v3531 = vadd.f32 %v2224, %v3404
        %v3532 = vadd.f32 %v2226, %v3406
        %v3533 = vadd.f32 %v2228, %v3408
        %v3534 = vadd.f32 %v2232, %v3412
        %v3535 = vadd.f32 %v2234, %v3414
        %v3536 = vadd.f32 %v2236, %v3416
        %v3537 = vadd.f32 %v2238, %v3418
        %v3538 = vadd.f32 %v2242, %v3422
        %v3539 = vadd.f32 %v2244, %v3424
        %v3540 = vadd.f32 %v2246, %v3426
        %v3541 = vadd.f32 %v2248, %v3428
        %v3542 = vadd.f32 %v2252, %v3432
        %v3543 = vadd.f32 %v2254, %v3434
        %v3544 = vadd.f32 %v2256, %v3436
        %v3545 = vadd.f32 %v2258, %v3438
        %v3546 = vadd.f32 %v2262, %v3442
        %v3547 = vadd.f32 %v2264, %v3444
        %v3548 = vadd.f32 %v2266, %v3446
        %v3549 = vadd.f32 %v2268, %v3448
        %v3550 = vadd.f32 %v2272, %v3452
        %v3551 = vadd.f32 %v2274, %v3454
        %v3552 = vadd.f32 %v2276, %v3456
        %v3553 = vadd.f32 %v2278, %v3458
        %v3554 = vadd.f32 %v2282, %v3462
        %v3555 = vadd.f32 %v2284, %v3464
        %v3556 = vadd.f32 %v2286, %v3466
        %v3557 = vadd.f32 %v2288, %v3468
        %v3558 = vadd.f32 %v2292, %v3472
        %v3559 = vadd.f32 %v2294, %v3474
        %v3560 = vadd.f32 %v2296, %v3476
        %v3561 = vadd.f32 %v2298, %v3478
        %v3562 = vadd.f32 %v2302, %v3482
        %v3563 = vadd.f32 %v2304, %v3484
        %v3564 = vadd.f32 %v2306, %v3486
        %v3565 = vadd.f32 %v2308, %v3488
        %v3566 = vadd.f32 %v2312, %v3492
        %v3567 = vadd.f32 %v2314, %v3494
        %v3568 = vadd.f32 %v2316, %v3496
        %v3569 = vadd.f32 %v2318, %v3498
        %v3570 = vadd.f32 %v2322, %v3502
        %v3571 = vadd.f32 %v2324, %v3504
        %v3572 = vadd.f32 %v2326, %v3506
        %v3573 = vadd.f32 %v2328, %v3508
        %v3574 = vmax.f32 %v3172, %v3174
        %v3575 = vmax.f32 %v3173, %v3175
        %v3576 = vmax.f32 %v3174, %v3176
        %v3577 = vmax.f32 %v3175, %v3177
        %v3578 = vmax.f32 %v3176, %v3178
        %v3579 = vmax.f32 %v3177, %v3179
        %v3580 = vmax.f32 %v3178, %v3180
        %v3581 = vmax.f32 %v3179, %v3181
        %v3582 = vmax.f32 %v3180, %v3182
        %v3583 = vmax.f32 %v3181, %v3183
        %v3584 = vmax.f32 %v3182, %v3184
        %v3585 = vmax.f32 %v3183, %v3185
        %v3586 = vmax.f32 %v3184, %v3186
        %v3587 = vmax.f32 %v3185, %v3187
        %v3588 = vmax.f32 %v3186, %v3188
        %v3589 = vmax.f32 %v3187, %v3189
        %v3590 = vmax.f32 %v3188, %v3190
        %v3591 = vmax.f32 %v3189, %v3191
        %v3592 = vmax.f32 %v3190, %v3192
        %v3593 = vmax.f32 %v3191, %v3193
        %v3594 = vmax.f32 %v3192, %v3194
        %v3595 = vmax.f32 %v3193, %v3195
        %v3596 = vmax.f32 %v3194, %v3196
        %v3597 = vmax.f32 %v3195, %v3197
        %v3598 = vmax.f32 %v3196, %v3198
        %v3599 = vmax.f32 %v3197, %v3199
        %v3600 = vmax.f32 %v3198, %v3200
        %v3601 = vmax.f32 %v3199, %v3201
        %v3602 = vmax.f32 %v3574, %v3176
        %v3603 = vmax.f32 %v3575, %v3177
        %v3604 = vmax.f32 %v3576, %v3178
        %v3605 = vmax.f32 %v3577, %v3179
        %v3606 = vmax.f32 %v3578, %v3180
        %v3607 = vmax.f32 %v3579, %v3181
        %v3608 = vmax.f32 %v3580, %v3182
        %v3609 = vmax.f32 %v3581, %v3183
        %v3610 = vmax.f32 %v3582, %v3184
        %v3611 = vmax.f32 %v3583, %v3185
        %v3612 = vmax.f32 %v3584, %v3186
        %v3613 = vmax.f32 %v3585, %v3187
        %v3614 = vmax.f32 %v3586, %v3188
        %v3615 = vmax.f32 %v3587, %v3189
        %v3616 = vmax.f32 %v3588, %v3190
        %v3617 = vmax.f32 %v3589, %v3191
        %v3618 = vmax.f32 %v3590, %v3192
        %v3619 = vmax.f32 %v3591, %v3193
        %v3620 = vmax.f32 %v3592, %v3194
        %v3621 = vmax.f32 %v3593, %v3195
        %v3622 = vmax.f32 %v3594, %v3196
        %v3623 = vmax.f32 %v3595, %v3197
        %v3624 = vmax.f32 %v3596, %v3198
        %v3625 = vmax.f32 %v3597, %v3199
        %v3626 = vmax.f32 %v3598, %v3200
        %v3627 = vmax.f32 %v3599, %v3201
        %v3628 = vmax.f32 %v3600, %v3202
        %v3629 = vmax.f32 %v3601, %v3203
        %v3630 = vmax.f32 %v3602, %v3178
        %v3631 = vmax.f32 %v3603, %v3179
        %v3632 = vmax.f32 %v3604, %v3180
        %v3633 = vmax.f32 %v3605, %v3181
        %v3634 = vmax.f32 %v3606, %v3182
        %v3635 = vmax.f32 %v3607, %v3183
        %v3636 = vmax.f32 %v3608, %v3184
        %v3637 = vmax.f32 %v3609, %v3185
        %v3638 = vmax.f32 %v3610, %v3186
        %v3639 = vmax.f32 %v3611, %v3187
        %v3640 = vmax.f32 %v3612, %v3188
        %v3641 = vmax.f32 %v3613, %v3189
        %v3642 = vmax.f32 %v3614, %v3190
        %v3643 = vmax.f32 %v3615, %v3191
        %v3644 = vmax.f32 %v3616, %v3192
        %v3645 = vmax.f32 %v3617, %v3193
        %v3646 = vmax.f32 %v3618, %v3194
        %v3647 = vmax.f32 %v3619, %v3195
        %v3648 = vmax.f32 %v3620, %v3196
        %v3649 = vmax.f32 %v3621, %v3197
        %v3650 = vmax.f32 %v3622, %v3198
        %v3651 = vmax.f32 %v3623, %v3199
        %v3652 = vmax.f32 %v3624, %v3200
        %v3653 = vmax.f32 %v3625, %v3201
        %v3654 = vmax.f32 %v3626, %v3202
        %v3655 = vmax.f32 %v3627, %v3203
        %v3656 = vmax.f32 %v3630, %v3180
        %v3657 = vmax.f32 %v3631, %v3181
        %v3658 = vmax.f32 %v3632, %v3182
        %v3659 = vmax.f32 %v3633, %v3183
        %v3660 = vmax.f32 %v3634, %v3184
        %v3661 = vmax.f32 %v3635, %v3185
        %v3662 = vmax.f32 %v3636, %v3186
        %v3663 = vmax.f32 %v3637, %v3187
        %v3664 = vmax.f32 %v3638, %v3188
        %v3665 = vmax.f32 %v3639, %v3189
        %v3666 = vmax.f32 %v3640, %v3190
        %v3667 = vmax.f32 %v3641, %v3191
        %v3668 = vmax.f32 %v3642, %v3192
        %v3669 = vmax.f32 %v3643, %v3193
        %v3670 = vmax.f32 %v3644, %v3194
        %v3671 = vmax.f32 %v3645, %v3195
        %v3672 = vmax.f32 %v3646, %v3196
        %v3673 = vmax.f32 %v3647, %v3197
        %v3674 = vmax.f32 %v3648, %v3198
        %v3675 = vmax.f32 %v3649, %v3199
        %v3676 = vmax.f32 %v3650, %v3200
        %v3677 = vmax.f32 %v3651, %v3201
        %v3678 = vmax.f32 %v3652, %v3202
        %v3679 = vmax.f32 %v3653, %v3203
        %v3712 = vrot.slane %v3602, 6
        %v3713 = vrot.slane %v3603, 6
        %v3714 = vsel %vm1010, %v3712, %v3713
        %v3715 = vrot.slane %v3630, 6
        %v3716 = vrot.slane %v3631, 6
        %v3717 = vsel %vm1010, %v3715, %v3716
        %v3718 = vrot.slane %v3656, 6
        %v3719 = vrot.slane %v3657, 6
        %v3720 = vsel %vm1010, %v3718, %v3719
        %v3721 = vrot.slane %v3658, 6
        %v3722 = vrot.slane %v3659, 6
        %v3723 = vsel %vm1010, %v3721, %v3722
        %v3724 = vrot.slane %v3660, 6
        %v3725 = vrot.slane %v3661, 6
        %v3726 = vsel %vm1010, %v3724, %v3725
        %v3727 = vrot.slane %v3662, 6
        %v3728 = vrot.slane %v3663, 6
        %v3729 = vsel %vm1010, %v3727, %v3728
        %v3730 = vrot.slane %v3664, 6
        %v3731 = vrot.slane %v3665, 6
        %v3732 = vsel %vm1010, %v3730, %v3731
        %v3733 = vrot.slane %v3666, 6
        %v3734 = vrot.slane %v3667, 6
        %v3735 = vsel %vm1010, %v3733, %v3734
        %v3736 = vrot.slane %v3668, 6
        %v3737 = vrot.slane %v3669, 6
        %v3738 = vsel %vm1010, %v3736, %v3737
        %v3739 = vrot.slane %v3670, 6
        %v3740 = vrot.slane %v3671, 6
        %v3741 = vsel %vm1010, %v3739, %v3740
        %v3742 = vrot.slane %v3672, 6
        %v3743 = vrot.slane %v3673, 6
        %v3744 = vsel %vm1010, %v3742, %v3743
        %v3745 = vrot.slane %v3674, 6
        %v3746 = vrot.slane %v3675, 6
        %v3747 = vsel %vm1010, %v3745, %v3746
        %v3748 = vrot.slane %v3676, 6
        %v3749 = vrot.slane %v3677, 6
        %v3750 = vsel %vm1010, %v3748, %v3749
        %v3751 = vrot.slane %v3678, 6
        %v3752 = vrot.slane %v3679, 6
        %v3753 = vsel %vm1010, %v3751, %v3752
        %v3754 = vrot.slane %v3654, 6
        %v3755 = vrot.slane %v3655, 6
        %v3756 = vsel %vm1010, %v3754, %v3755
        %v3757 = vrot.slane %v3628, 6
        %v3758 = vrot.slane %v3629, 6
        %v3759 = vsel %vm1010, %v3757, %v3758
        %v3808 = vsel %vm1010, -inf, %v3712
        %v3809 = vsel %vm1010, -inf, %v3715
        %v3810 = vsel %vm1010, -inf, %v3718
        %v3811 = vsel %vm1010, -inf, %v3721
        %v3812 = vsel %vm1010, -inf, %v3724
        %v3813 = vsel %vm1010, -inf, %v3727
        %v3814 = vsel %vm1010, -inf, %v3730
        %v3815 = vsel %vm1010, -inf, %v3733
        %v3816 = vsel %vm1010, -inf, %v3736
        %v3817 = vsel %vm1010, -inf, %v3739
        %v3818 = vsel %vm1010, -inf, %v3742
        %v3819 = vsel %vm1010, -inf, %v3745
        %v3820 = vsel %vm1010, -inf, %v3748
        %v3821 = vsel %vm1010, -inf, %v3751
        %v3822 = vsel %vm1010, -inf, %v3754
        %v3823 = vsel %vm1010, -inf, %v3757
        %v3824 = vsel %vm1010, %v3713, -inf
        %v3825 = vsel %vm1010, %v3716, -inf
        %v3826 = vsel %vm1010, %v3719, -inf
        %v3827 = vsel %vm1010, %v3722, -inf
        %v3828 = vsel %vm1010, %v3725, -inf
        %v3829 = vsel %vm1010, %v3728, -inf
        %v3830 = vsel %vm1010, %v3731, -inf
        %v3831 = vsel %vm1010, %v3734, -inf
        %v3832 = vsel %vm1010, %v3737, -inf
        %v3833 = vsel %vm1010, %v3740, -inf
        %v3834 = vsel %vm1010, %v3743, -inf
        %v3835 = vsel %vm1010, %v3746, -inf
        %v3836 = vsel %vm1010, %v3749, -inf
        %v3837 = vsel %vm1010, %v3752, -inf
        %v3838 = vsel %vm1010, %v3755, -inf
        %v3839 = vsel %vm1010, %v3758, -inf
        %v3872 = vrot.slane %v3808, 1
        %v3873 = vrot.slane %v3714, 1
        %v3874 = vsel %vm1171, %v3872, %v3873
        %v3875 = vrot.slane %v3824, 1
        %v3876 = vsel %vm1171, %v3873, %v3875
        %v3877 = vrot.slane %v3809, 1
        %v3878 = vrot.slane %v3717, 1
        %v3879 = vsel %vm1171, %v3877, %v3878
        %v3880 = vrot.slane %v3825, 1
        %v3881 = vsel %vm1171, %v3878, %v3880
        %v3882 = vrot.slane %v3810, 1
        %v3883 = vrot.slane %v3720, 1
        %v3884 = vsel %vm1171, %v3882, %v3883
        %v3885 = vrot.slane %v3826, 1
        %v3886 = vsel %vm1171, %v3883, %v3885
        %v3887 = vrot.slane %v3811, 1
        %v3888 = vrot.slane %v3723, 1
        %v3889 = vsel %vm1171, %v3887, %v3888
        %v3890 = vrot.slane %v3827, 1
        %v3891 = vsel %vm1171, %v3888, %v3890
        %v3892 = vrot.slane %v3812, 1
        %v3893 = vrot.slane %v3726, 1
        %v3894 = vsel %vm1171, %v3892, %v3893
        %v3895 = vrot.slane %v3828, 1
        %v3896 = vsel %vm1171, %v3893, %v3895
        %v3897 = vrot.slane %v3813, 1
        %v3898 = vrot.slane %v3729, 1
        %v3899 = vsel %vm1171, %v3897, %v3898
        %v3900 = vrot.slane %v3829, 1
        %v3901 = vsel %vm1171, %v3898, %v3900
        %v3902 = vrot.slane %v3814, 1
        %v3903 = vrot.slane %v3732, 1
        %v3904 = vsel %vm1171, %v3902, %v3903
        %v3905 = vrot.slane %v3830, 1
        %v3906 = vsel %vm1171, %v3903, %v3905
        %v3907 = vrot.slane %v3815, 1
        %v3908 = vrot.slane %v3735, 1
        %v3909 = vsel %vm1171, %v3907, %v3908
        %v3910 = vrot.slane %v3831, 1
        %v3911 = vsel %vm1171, %v3908, %v3910
        %v3912 = vrot.slane %v3816, 1
        %v3913 = vrot.slane %v3738, 1
        %v3914 = vsel %vm1171, %v3912, %v3913
        %v3915 = vrot.slane %v3832, 1
        %v3916 = vsel %vm1171, %v3913, %v3915
        %v3917 = vrot.slane %v3817, 1
        %v3918 = vrot.slane %v3741, 1
        %v3919 = vsel %vm1171, %v3917, %v3918
        %v3920 = vrot.slane %v3833, 1
        %v3921 = vsel %vm1171, %v3918, %v3920
        %v3922 = vrot.slane %v3818, 1
        %v3923 = vrot.slane %v3744, 1
        %v3924 = vsel %vm1171, %v3922, %v3923
        %v3925 = vrot.slane %v3834, 1
        %v3926 = vsel %vm1171, %v3923, %v3925
        %v3927 = vrot.slane %v3819, 1
        %v3928 = vrot.slane %v3747, 1
        %v3929 = vsel %vm1171, %v3927, %v3928
        %v3930 = vrot.slane %v3835, 1
        %v3931 = vsel %vm1171, %v3928, %v3930
        %v3932 = vrot.slane %v3820, 1
        %v3933 = vrot.slane %v3750, 1
        %v3934 = vsel %vm1171, %v3932, %v3933
        %v3935 = vrot.slane %v3836, 1
        %v3936 = vsel %vm1171, %v3933, %v3935
        %v3937 = vrot.slane %v3821, 1
        %v3938 = vrot.slane %v3753, 1
        %v3939 = vsel %vm1171, %v3937, %v3938
        %v3940 = vrot.slane %v3837, 1
        %v3941 = vsel %vm1171, %v3938, %v3940
        %v3942 = vrot.slane %v3822, 1
        %v3943 = vrot.slane %v3756, 1
        %v3944 = vsel %vm1171, %v3942, %v3943
        %v3945 = vrot.slane %v3838, 1
        %v3946 = vsel %vm1171, %v3943, %v3945
        %v3947 = vrot.slane %v3823, 1
        %v3948 = vrot.slane %v3759, 1
        %v3949 = vsel %vm1171, %v3947, %v3948
        %v3950 = vrot.slane %v3839, 1
        %v3951 = vsel %vm1171, %v3948, %v3950
        %v3984 = vmax.f32 %v3808, %v3874
        %v3985 = vmax.f32 %v3714, %v3876
        %v3986 = vmax.f32 %v3809, %v3879
        %v3987 = vmax.f32 %v3717, %v3881
        %v3988 = vmax.f32 %v3810, %v3884
        %v3989 = vmax.f32 %v3720, %v3886
        %v3990 = vmax.f32 %v3811, %v3889
        %v3991 = vmax.f32 %v3723, %v3891
        %v3992 = vmax.f32 %v3812, %v3894
        %v3993 = vmax.f32 %v3726, %v3896
        %v3994 = vmax.f32 %v3813, %v3899
        %v3995 = vmax.f32 %v3729, %v3901
        %v3996 = vmax.f32 %v3814, %v3904
        %v3997 = vmax.f32 %v3732, %v3906
        %v3998 = vmax.f32 %v3815, %v3909
        %v3999 = vmax.f32 %v3735, %v3911
        %v4000 = vmax.f32 %v3816, %v3914
        %v4001 = vmax.f32 %v3738, %v3916
        %v4002 = vmax.f32 %v3817, %v3919
        %v4003 = vmax.f32 %v3741, %v3921
        %v4004 = vmax.f32 %v3818, %v3924
        %v4005 = vmax.f32 %v3744, %v3926
        %v4006 = vmax.f32 %v3819, %v3929
        %v4007 = vmax.f32 %v3747, %v3931
        %v4008 = vmax.f32 %v3820, %v3934
        %v4009 = vmax.f32 %v3750, %v3936
        %v4010 = vmax.f32 %v3821, %v3939
        %v4011 = vmax.f32 %v3753, %v3941
        %v4012 = vmax.f32 %v3822, %v3944
        %v4013 = vmax.f32 %v3756, %v3946
        %v4014 = vmax.f32 %v3823, %v3949
        %v4015 = vmax.f32 %v3759, %v3951
        %v4016 = vrot.slane %v3808, 2
        %v4017 = vrot.slane %v3714, 2
        %v4018 = vsel %vm1316, %v4016, %v4017
        %v4019 = vrot.slane %v3824, 2
        %v4020 = vsel %vm1316, %v4017, %v4019
        %v4021 = vrot.slane %v3809, 2
        %v4022 = vrot.slane %v3717, 2
        %v4023 = vsel %vm1316, %v4021, %v4022
        %v4024 = vrot.slane %v3825, 2
        %v4025 = vsel %vm1316, %v4022, %v4024
        %v4026 = vrot.slane %v3810, 2
        %v4027 = vrot.slane %v3720, 2
        %v4028 = vsel %vm1316, %v4026, %v4027
        %v4029 = vrot.slane %v3826, 2
        %v4030 = vsel %vm1316, %v4027, %v4029
        %v4031 = vrot.slane %v3811, 2
        %v4032 = vrot.slane %v3723, 2
        %v4033 = vsel %vm1316, %v4031, %v4032
        %v4034 = vrot.slane %v3827, 2
        %v4035 = vsel %vm1316, %v4032, %v4034
        %v4036 = vrot.slane %v3812, 2
        %v4037 = vrot.slane %v3726, 2
        %v4038 = vsel %vm1316, %v4036, %v4037
        %v4039 = vrot.slane %v3828, 2
        %v4040 = vsel %vm1316, %v4037, %v4039
        %v4041 = vrot.slane %v3813, 2
        %v4042 = vrot.slane %v3729, 2
        %v4043 = vsel %vm1316, %v4041, %v4042
        %v4044 = vrot.slane %v3829, 2
        %v4045 = vsel %vm1316, %v4042, %v4044
        %v4046 = vrot.slane %v3814, 2
        %v4047 = vrot.slane %v3732, 2
        %v4048 = vsel %vm1316, %v4046, %v4047
        %v4049 = vrot.slane %v3830, 2
        %v4050 = vsel %vm1316, %v4047, %v4049
        %v4051 = vrot.slane %v3815, 2
        %v4052 = vrot.slane %v3735, 2
        %v4053 = vsel %vm1316, %v4051, %v4052
        %v4054 = vrot.slane %v3831, 2
        %v4055 = vsel %vm1316, %v4052, %v4054
        %v4056 = vrot.slane %v3816, 2
        %v4057 = vrot.slane %v3738, 2
        %v4058 = vsel %vm1316, %v4056, %v4057
        %v4059 = vrot.slane %v3832, 2
        %v4060 = vsel %vm1316, %v4057, %v4059
        %v4061 = vrot.slane %v3817, 2
        %v4062 = vrot.slane %v3741, 2
        %v4063 = vsel %vm1316, %v4061, %v4062
        %v4064 = vrot.slane %v3833, 2
        %v4065 = vsel %vm1316, %v4062, %v4064
        %v4066 = vrot.slane %v3818, 2
        %v4067 = vrot.slane %v3744, 2
        %v4068 = vsel %vm1316, %v4066, %v4067
        %v4069 = vrot.slane %v3834, 2
        %v4070 = vsel %vm1316, %v4067, %v4069
        %v4071 = vrot.slane %v3819, 2
        %v4072 = vrot.slane %v3747, 2
        %v4073 = vsel %vm1316, %v4071, %v4072
        %v4074 = vrot.slane %v3835, 2
        %v4075 = vsel %vm1316, %v4072, %v4074
        %v4076 = vrot.slane %v3820, 2
        %v4077 = vrot.slane %v3750, 2
        %v4078 = vsel %vm1316, %v4076, %v4077
        %v4079 = vrot.slane %v3836, 2
        %v4080 = vsel %vm1316, %v4077, %v4079
        %v4081 = vrot.slane %v3821, 2
        %v4082 = vrot.slane %v3753, 2
        %v4083 = vsel %vm1316, %v4081, %v4082
        %v4084 = vrot.slane %v3837, 2
        %v4085 = vsel %vm1316, %v4082, %v4084
        %v4086 = vrot.slane %v3822, 2
        %v4087 = vrot.slane %v3756, 2
        %v4088 = vsel %vm1316, %v4086, %v4087
        %v4089 = vrot.slane %v3838, 2
        %v4090 = vsel %vm1316, %v4087, %v4089
        %v4091 = vrot.slane %v3823, 2
        %v4092 = vrot.slane %v3759, 2
        %v4093 = vsel %vm1316, %v4091, %v4092
        %v4094 = vrot.slane %v3839, 2
        %v4095 = vsel %vm1316, %v4092, %v4094
        %v4128 = vmax.f32 %v3984, %v4018
        %v4129 = vmax.f32 %v3985, %v4020
        %v4130 = vmax.f32 %v3986, %v4023
        %v4131 = vmax.f32 %v3987, %v4025
        %v4132 = vmax.f32 %v3988, %v4028
        %v4133 = vmax.f32 %v3989, %v4030
        %v4134 = vmax.f32 %v3990, %v4033
        %v4135 = vmax.f32 %v3991, %v4035
        %v4136 = vmax.f32 %v3992, %v4038
        %v4137 = vmax.f32 %v3993, %v4040
        %v4138 = vmax.f32 %v3994, %v4043
        %v4139 = vmax.f32 %v3995, %v4045
        %v4140 = vmax.f32 %v3996, %v4048
        %v4141 = vmax.f32 %v3997, %v4050
        %v4142 = vmax.f32 %v3998, %v4053
        %v4143 = vmax.f32 %v3999, %v4055
        %v4144 = vmax.f32 %v4000, %v4058
        %v4145 = vmax.f32 %v4001, %v4060
        %v4146 = vmax.f32 %v4002, %v4063
        %v4147 = vmax.f32 %v4003, %v4065
        %v4148 = vmax.f32 %v4004, %v4068
        %v4149 = vmax.f32 %v4005, %v4070
        %v4150 = vmax.f32 %v4006, %v4073
        %v4151 = vmax.f32 %v4007, %v4075
        %v4152 = vmax.f32 %v4008, %v4078
        %v4153 = vmax.f32 %v4009, %v4080
        %v4154 = vmax.f32 %v4010, %v4083
        %v4155 = vmax.f32 %v4011, %v4085
        %v4156 = vmax.f32 %v4012, %v4088
        %v4157 = vmax.f32 %v4013, %v4090
        %v4158 = vmax.f32 %v4014, %v4093
        %v4159 = vmax.f32 %v4015, %v4095
        %v4160 = vrot.slane %v3808, 3
        %v4161 = vrot.slane %v3714, 3
        %v4162 = vsel %vm1461, %v4160, %v4161
        %v4163 = vrot.slane %v3824, 3
        %v4164 = vsel %vm1461, %v4161, %v4163
        %v4165 = vrot.slane %v3809, 3
        %v4166 = vrot.slane %v3717, 3
        %v4167 = vsel %vm1461, %v4165, %v4166
        %v4168 = vrot.slane %v3825, 3
        %v4169 = vsel %vm1461, %v4166, %v4168
        %v4170 = vrot.slane %v3810, 3
        %v4171 = vrot.slane %v3720, 3
        %v4172 = vsel %vm1461, %v4170, %v4171
        %v4173 = vrot.slane %v3826, 3
        %v4174 = vsel %vm1461, %v4171, %v4173
        %v4175 = vrot.slane %v3811, 3
        %v4176 = vrot.slane %v3723, 3
        %v4177 = vsel %vm1461, %v4175, %v4176
        %v4178 = vrot.slane %v3827, 3
        %v4179 = vsel %vm1461, %v4176, %v4178
        %v4180 = vrot.slane %v3812, 3
        %v4181 = vrot.slane %v3726, 3
        %v4182 = vsel %vm1461, %v4180, %v4181
        %v4183 = vrot.slane %v3828, 3
        %v4184 = vsel %vm1461, %v4181, %v4183
        %v4185 = vrot.slane %v3813, 3
        %v4186 = vrot.slane %v3729, 3
        %v4187 = vsel %vm1461, %v4185, %v4186
        %v4188 = vrot.slane %v3829, 3
        %v4189 = vsel %vm1461, %v4186, %v4188
        %v4190 = vrot.slane %v3814, 3
        %v4191 = vrot.slane %v3732, 3
        %v4192 = vsel %vm1461, %v4190, %v4191
        %v4193 = vrot.slane %v3830, 3
        %v4194 = vsel %vm1461, %v4191, %v4193
        %v4195 = vrot.slane %v3815, 3
        %v4196 = vrot.slane %v3735, 3
        %v4197 = vsel %vm1461, %v4195, %v4196
        %v4198 = vrot.slane %v3831, 3
        %v4199 = vsel %vm1461, %v4196, %v4198
        %v4200 = vrot.slane %v3816, 3
        %v4201 = vrot.slane %v3738, 3
        %v4202 = vsel %vm1461, %v4200, %v4201
        %v4203 = vrot.slane %v3832, 3
        %v4204 = vsel %vm1461, %v4201, %v4203
        %v4205 = vrot.slane %v3817, 3
        %v4206 = vrot.slane %v3741, 3
        %v4207 = vsel %vm1461, %v4205, %v4206
        %v4208 = vrot.slane %v3833, 3
        %v4209 = vsel %vm1461, %v4206, %v4208
        %v4210 = vrot.slane %v3818, 3
        %v4211 = vrot.slane %v3744, 3
        %v4212 = vsel %vm1461, %v4210, %v4211
        %v4213 = vrot.slane %v3834, 3
        %v4214 = vsel %vm1461, %v4211, %v4213
        %v4215 = vrot.slane %v3819, 3
        %v4216 = vrot.slane %v3747, 3
        %v4217 = vsel %vm1461, %v4215, %v4216
        %v4218 = vrot.slane %v3835, 3
        %v4219 = vsel %vm1461, %v4216, %v4218
        %v4220 = vrot.slane %v3820, 3
        %v4221 = vrot.slane %v3750, 3
        %v4222 = vsel %vm1461, %v4220, %v4221
        %v4223 = vrot.slane %v3836, 3
        %v4224 = vsel %vm1461, %v4221, %v4223
        %v4225 = vrot.slane %v3821, 3
        %v4226 = vrot.slane %v3753, 3
        %v4227 = vsel %vm1461, %v4225, %v4226
        %v4228 = vrot.slane %v3837, 3
        %v4229 = vsel %vm1461, %v4226, %v4228
        %v4230 = vrot.slane %v3822, 3
        %v4231 = vrot.slane %v3756, 3
        %v4232 = vsel %vm1461, %v4230, %v4231
        %v4233 = vrot.slane %v3838, 3
        %v4234 = vsel %vm1461, %v4231, %v4233
        %v4235 = vrot.slane %v3823, 3
        %v4236 = vrot.slane %v3759, 3
        %v4237 = vsel %vm1461, %v4235, %v4236
        %v4238 = vrot.slane %v3839, 3
        %v4239 = vsel %vm1461, %v4236, %v4238
        %v4272 = vmax.f32 %v4128, %v4162
        %v4273 = vmax.f32 %v4129, %v4164
        %v4274 = vmax.f32 %v4130, %v4167
        %v4275 = vmax.f32 %v4131, %v4169
        %v4276 = vmax.f32 %v4132, %v4172
        %v4277 = vmax.f32 %v4133, %v4174
        %v4278 = vmax.f32 %v4134, %v4177
        %v4279 = vmax.f32 %v4135, %v4179
        %v4280 = vmax.f32 %v4136, %v4182
        %v4281 = vmax.f32 %v4137, %v4184
        %v4282 = vmax.f32 %v4138, %v4187
        %v4283 = vmax.f32 %v4139, %v4189
        %v4284 = vmax.f32 %v4140, %v4192
        %v4285 = vmax.f32 %v4141, %v4194
        %v4286 = vmax.f32 %v4142, %v4197
        %v4287 = vmax.f32 %v4143, %v4199
        %v4288 = vmax.f32 %v4144, %v4202
        %v4289 = vmax.f32 %v4145, %v4204
        %v4290 = vmax.f32 %v4146, %v4207
        %v4291 = vmax.f32 %v4147, %v4209
        %v4292 = vmax.f32 %v4148, %v4212
        %v4293 = vmax.f32 %v4149, %v4214
        %v4294 = vmax.f32 %v4150, %v4217
        %v4295 = vmax.f32 %v4151, %v4219
        %v4296 = vmax.f32 %v4152, %v4222
        %v4297 = vmax.f32 %v4153, %v4224
        %v4298 = vmax.f32 %v4154, %v4227
        %v4299 = vmax.f32 %v4155, %v4229
        %v4300 = vmax.f32 %v4156, %v4232
        %v4301 = vmax.f32 %v4157, %v4234
        %v4302 = vmax.f32 %v4158, %v4237
        %v4303 = vmax.f32 %v4159, %v4239
        %v4304 = vrot.slane %v3808, 4
        %v4305 = vrot.slane %v3714, 4
        %v4306 = vsel %vm1606, %v4304, %v4305
        %v4307 = vrot.slane %v3824, 4
        %v4308 = vsel %vm1606, %v4305, %v4307
        %v4309 = vrot.slane %v3809, 4
        %v4310 = vrot.slane %v3717, 4
        %v4311 = vsel %vm1606, %v4309, %v4310
        %v4312 = vrot.slane %v3825, 4
        %v4313 = vsel %vm1606, %v4310, %v4312
        %v4314 = vrot.slane %v3810, 4
        %v4315 = vrot.slane %v3720, 4
        %v4316 = vsel %vm1606, %v4314, %v4315
        %v4317 = vrot.slane %v3826, 4
        %v4318 = vsel %vm1606, %v4315, %v4317
        %v4319 = vrot.slane %v3811, 4
        %v4320 = vrot.slane %v3723, 4
        %v4321 = vsel %vm1606, %v4319, %v4320
        %v4322 = vrot.slane %v3827, 4
        %v4323 = vsel %vm1606, %v4320, %v4322
        %v4324 = vrot.slane %v3812, 4
        %v4325 = vrot.slane %v3726, 4
        %v4326 = vsel %vm1606, %v4324, %v4325
        %v4327 = vrot.slane %v3828, 4
        %v4328 = vsel %vm1606, %v4325, %v4327
        %v4329 = vrot.slane %v3813, 4
        %v4330 = vrot.slane %v3729, 4
        %v4331 = vsel %vm1606, %v4329, %v4330
        %v4332 = vrot.slane %v3829, 4
        %v4333 = vsel %vm1606, %v4330, %v4332
        %v4334 = vrot.slane %v3814, 4
        %v4335 = vrot.slane %v3732, 4
        %v4336 = vsel %vm1606, %v4334, %v4335
        %v4337 = vrot.slane %v3830, 4
        %v4338 = vsel %vm1606, %v4335, %v4337
        %v4339 = vrot.slane %v3815, 4
        %v4340 = vrot.slane %v3735, 4
        %v4341 = vsel %vm1606, %v4339, %v4340
        %v4342 = vrot.slane %v3831, 4
        %v4343 = vsel %vm1606, %v4340, %v4342
        %v4344 = vrot.slane %v3816, 4
        %v4345 = vrot.slane %v3738, 4
        %v4346 = vsel %vm1606, %v4344, %v4345
        %v4347 = vrot.slane %v3832, 4
        %v4348 = vsel %vm1606, %v4345, %v4347
        %v4349 = vrot.slane %v3817, 4
        %v4350 = vrot.slane %v3741, 4
        %v4351 = vsel %vm1606, %v4349, %v4350
        %v4352 = vrot.slane %v3833, 4
        %v4353 = vsel %vm1606, %v4350, %v4352
        %v4354 = vrot.slane %v3818, 4
        %v4355 = vrot.slane %v3744, 4
        %v4356 = vsel %vm1606, %v4354, %v4355
        %v4357 = vrot.slane %v3834, 4
        %v4358 = vsel %vm1606, %v4355, %v4357
        %v4359 = vrot.slane %v3819, 4
        %v4360 = vrot.slane %v3747, 4
        %v4361 = vsel %vm1606, %v4359, %v4360
        %v4362 = vrot.slane %v3835, 4
        %v4363 = vsel %vm1606, %v4360, %v4362
        %v4364 = vrot.slane %v3820, 4
        %v4365 = vrot.slane %v3750, 4
        %v4366 = vsel %vm1606, %v4364, %v4365
        %v4367 = vrot.slane %v3836, 4
        %v4368 = vsel %vm1606, %v4365, %v4367
        %v4369 = vrot.slane %v3821, 4
        %v4370 = vrot.slane %v3753, 4
        %v4371 = vsel %vm1606, %v4369, %v4370
        %v4372 = vrot.slane %v3837, 4
        %v4373 = vsel %vm1606, %v4370, %v4372
        %v4374 = vrot.slane %v3822, 4
        %v4375 = vrot.slane %v3756, 4
        %v4376 = vsel %vm1606, %v4374, %v4375
        %v4377 = vrot.slane %v3838, 4
        %v4378 = vsel %vm1606, %v4375, %v4377
        %v4379 = vrot.slane %v3823, 4
        %v4380 = vrot.slane %v3759, 4
        %v4381 = vsel %vm1606, %v4379, %v4380
        %v4382 = vrot.slane %v3839, 4
        %v4383 = vsel %vm1606, %v4380, %v4382
        %v4416 = vmax.f32 %v4272, %v4306
        %v4417 = vmax.f32 %v4273, %v4308
        %v4418 = vmax.f32 %v4274, %v4311
        %v4419 = vmax.f32 %v4275, %v4313
        %v4420 = vmax.f32 %v4276, %v4316
        %v4421 = vmax.f32 %v4277, %v4318
        %v4422 = vmax.f32 %v4278, %v4321
        %v4423 = vmax.f32 %v4279, %v4323
        %v4424 = vmax.f32 %v4280, %v4326
        %v4425 = vmax.f32 %v4281, %v4328
        %v4426 = vmax.f32 %v4282, %v4331
        %v4427 = vmax.f32 %v4283, %v4333
        %v4428 = vmax.f32 %v4284, %v4336
        %v4429 = vmax.f32 %v4285, %v4338
        %v4430 = vmax.f32 %v4286, %v4341
        %v4431 = vmax.f32 %v4287, %v4343
        %v4432 = vmax.f32 %v4288, %v4346
        %v4433 = vmax.f32 %v4289, %v4348
        %v4434 = vmax.f32 %v4290, %v4351
        %v4435 = vmax.f32 %v4291, %v4353
        %v4436 = vmax.f32 %v4292, %v4356
        %v4437 = vmax.f32 %v4293, %v4358
        %v4438 = vmax.f32 %v4294, %v4361
        %v4439 = vmax.f32 %v4295, %v4363
        %v4440 = vmax.f32 %v4296, %v4366
        %v4441 = vmax.f32 %v4297, %v4368
        %v4442 = vmax.f32 %v4298, %v4371
        %v4443 = vmax.f32 %v4299, %v4373
        %v4444 = vmax.f32 %v4300, %v4376
        %v4445 = vmax.f32 %v4301, %v4378
        %v4446 = vmax.f32 %v4302, %v4381
        %v4447 = vmax.f32 %v4303, %v4383
        %v4448 = vpack.c.bf16 %v4417, %v4416
        %v4449 = vpack.c.bf16 %v4419, %v4418
        %v4450 = vpack.c.bf16 %v4421, %v4420
        %v4451 = vpack.c.bf16 %v4423, %v4422
        %v4452 = vpack.c.bf16 %v4425, %v4424
        %v4453 = vpack.c.bf16 %v4427, %v4426
        %v4454 = vpack.c.bf16 %v4429, %v4428
        %v4455 = vpack.c.bf16 %v4431, %v4430
        %v4456 = vpack.c.bf16 %v4433, %v4432
        %v4457 = vpack.c.bf16 %v4435, %v4434
        %v4458 = vpack.c.bf16 %v4437, %v4436
        %v4459 = vpack.c.bf16 %v4439, %v4438
        %v4460 = vpack.c.bf16 %v4441, %v4440
        %v4461 = vpack.c.bf16 %v4443, %v4442
        %v4462 = vpack.c.bf16 %v4445, %v4444
        %v4463 = vpack.c.bf16 %v4447, %v4446
        %s4464 = scalar_lea.vmem %s3, 384
        %v4465 = vld [vmem:[%s4464] sm:$0xff]
        %v4466 = vld [vmem:[%s4464 + $0x8] sm:$0xff]
        %v4467 = vld [vmem:[%s4464 + $0x10] sm:$0xff]
        %v4468 = vld [vmem:[%s4464 + $0x18] sm:$0xff]
        %v4469 = vld [vmem:[%s4464 + $0x20] sm:$0xff]
        %v4470 = vld [vmem:[%s4464 + $0x28] sm:$0xff]
        %v4471 = vld [vmem:[%s4464 + $0x30] sm:$0xff]
        %v4472 = vld [vmem:[%s4464 + $0x38] sm:$0xff]
        %v4473 = vld [vmem:[%s4464 + $0x40] sm:$0xff]
        %v4474 = vld [vmem:[%s4464 + $0x48] sm:$0xff]
        %v4475 = vld [vmem:[%s4464 + $0x50] sm:$0xff]
        %v4476 = vld [vmem:[%s4464 + $0x58] sm:$0xff]
        %v4477 = vld [vmem:[%s4464 + $0x60] sm:$0xff]
        %v4478 = vld [vmem:[%s4464 + $0x68] sm:$0xff]
        %v4479 = vld [vmem:[%s4464 + $0x70] sm:$0xff]
        %v4480 = vld [vmem:[%s4464 + $0x78] sm:$0xff]
        %v4497 = vunpack.c.l.b16 %v4465
        %v4498 = vunpack.c.h.b16 %v4465
        %v4499 = vunpack.c.l.b16 %v4466
        %v4500 = vunpack.c.h.b16 %v4466
        %v4501 = vunpack.c.l.b16 %v4467
        %v4502 = vunpack.c.h.b16 %v4467
        %v4503 = vunpack.c.l.b16 %v4468
        %v4504 = vunpack.c.h.b16 %v4468
        %v4505 = vunpack.c.l.b16 %v4469
        %v4506 = vunpack.c.h.b16 %v4469
        %v4507 = vunpack.c.l.b16 %v4470
        %v4508 = vunpack.c.h.b16 %v4470
        %v4509 = vunpack.c.l.b16 %v4471
        %v4510 = vunpack.c.h.b16 %v4471
        %v4511 = vunpack.c.l.b16 %v4472
        %v4512 = vunpack.c.h.b16 %v4472
        %v4513 = vunpack.c.l.b16 %v4473
        %v4514 = vunpack.c.h.b16 %v4473
        %v4515 = vunpack.c.l.b16 %v4474
        %v4516 = vunpack.c.h.b16 %v4474
        %v4517 = vunpack.c.l.b16 %v4475
        %v4518 = vunpack.c.h.b16 %v4475
        %v4519 = vunpack.c.l.b16 %v4476
        %v4520 = vunpack.c.h.b16 %v4476
        %v4521 = vunpack.c.l.b16 %v4477
        %v4522 = vunpack.c.h.b16 %v4477
        %v4523 = vunpack.c.l.b16 %v4478
        %v4524 = vunpack.c.h.b16 %v4478
        %v4525 = vunpack.c.l.b16 %v4479
        %v4526 = vunpack.c.h.b16 %v4479
        %v4527 = vunpack.c.l.b16 %v4480
        %v4528 = vunpack.c.h.b16 %v4480
        %v4529 = vpack.c.b16 %v4499, %v4497
        %v4530 = vpack.c.b16 %v4500, %v4498
        %v4531 = vpack.c.b16 %v4503, %v4501
        %v4532 = vpack.c.b16 %v4504, %v4502
        %v4533 = vpack.c.b16 %v4507, %v4505
        %v4534 = vpack.c.b16 %v4508, %v4506
        %v4535 = vpack.c.b16 %v4511, %v4509
        %v4536 = vpack.c.b16 %v4512, %v4510
        %v4537 = vpack.c.b16 %v4515, %v4513
        %v4538 = vpack.c.b16 %v4516, %v4514
        %v4539 = vpack.c.b16 %v4519, %v4517
        %v4540 = vpack.c.b16 %v4520, %v4518
        %v4541 = vpack.c.b16 %v4523, %v4521
        %v4542 = vpack.c.b16 %v4524, %v4522
        %v4543 = vpack.c.b16 %v4527, %v4525
        %v4544 = vpack.c.b16 %v4528, %v4526
        %4561 = vmatprep.subr.bf16.mxu0 %v4530
        %4562 = vmatpush1.bf16.msra.mxu0 %v4529
        %4563 = vmatprep.subr.bf16.mxu0 %v4532
        %4564 = vmatpush1.bf16.msra.mxu0 %v4531
        %4565 = vmatprep.subr.bf16.mxu0 %v4534
        %4566 = vmatpush1.bf16.msra.mxu0 %v4533
        %4567 = vmatprep.subr.bf16.mxu0 %v4536
        %4568 = vmatpush1.bf16.msra.mxu0 %v4535
        %4569 = vmatprep.subr.bf16.mxu0 %v4538
        %4570 = vmatpush1.bf16.msra.mxu0 %v4537
        %4571 = vmatprep.subr.bf16.mxu0 %v4540
        %4572 = vmatpush1.bf16.msra.mxu0 %v4539
        %4573 = vmatprep.subr.bf16.mxu0 %v4542
        %4574 = vmatpush1.bf16.msra.mxu0 %v4541
        %4575 = vmatprep.subr.bf16.mxu0 %v4544
        %4576 = vmatpush1.bf16.msra.mxu0 %v4543
        %4577 = vmatprep.subr.bf16.mxu0 0
        %4578 = vmatpush1.bf16.msra.mxu0 0
        %4579 = vmatprep.subr.bf16.mxu0 0
        %4580 = vmatpush1.bf16.msra.mxu0 0
        %4581 = vmatprep.subr.bf16.mxu0 0
        %4582 = vmatpush1.bf16.msra.mxu0 0
        %4583 = vmatprep.subr.bf16.mxu0 0
        %4584 = vmatpush1.bf16.msra.mxu0 0
        %4585 = vmatprep.subr.bf16.mxu0 0
        %4586 = vmatpush1.bf16.msra.mxu0 0
        %4587 = vmatprep.subr.bf16.mxu0 0
        %4588 = vmatpush1.bf16.msra.mxu0 0
        %4589 = vmatprep.subr.bf16.mxu0 0
        %4590 = vmatpush1.bf16.msra.mxu0 0
        %4591 = vmatprep.subr.bf16.mxu0 0
        %4592 = vmatpush1.bf16.msra.mxu0 0
        %4593 = vmatprep.mubr.bf16.mxu0 0
        %4594 = vmatmul.mubr.bf16.gmra.mrb[0].mxu0 %v4448
        %v4595 = vpop.f32.mrb[0].mxu0
        %v4596 = vadd.f32 0.0, %v4595
        %v4597 = vpop.f32.mrb[0].mxu0
        %v4598 = vadd.f32 0.0, %v4597
        %v4599 = vpop.f32.mrb[0].mxu0
        %v4600 = vadd.f32 0.0, %v4599
        %v4601 = vpop.f32.mrb[0].mxu0
        %v4602 = vadd.f32 0.0, %v4601
        %4603 = vmatprep.mubr.bf16.mxu0 0
        %4604 = vmatmul.mubr.bf16.gmra.mrb[0].mxu0 %v4449
        %v4605 = vpop.f32.mrb[0].mxu0
        %v4606 = vadd.f32 0.0, %v4605
        %v4607 = vpop.f32.mrb[0].mxu0
        %v4608 = vadd.f32 0.0, %v4607
        %v4609 = vpop.f32.mrb[0].mxu0
        %v4610 = vadd.f32 0.0, %v4609
        %v4611 = vpop.f32.mrb[0].mxu0
        %v4612 = vadd.f32 0.0, %v4611
        %4613 = vmatprep.mubr.bf16.mxu0 0
        %4614 = vmatmul.mubr.bf16.gmra.mrb[0].mxu0 %v4450
        %v4615 = vpop.f32.mrb[0].mxu0
        %v4616 = vadd.f32 0.0, %v4615
        %v4617 = vpop.f32.mrb[0].mxu0
        %v4618 = vadd.f32 0.0, %v4617
        %v4619 = vpop.f32.mrb[0].mxu0
        %v4620 = vadd.f32 0.0, %v4619
        %v4621 = vpop.f32.mrb[0].mxu0
        %v4622 = vadd.f32 0.0, %v4621
        %4623 = vmatprep.mubr.bf16.mxu0 0
        %4624 = vmatmul.mubr.bf16.gmra.mrb[0].mxu0 %v4451
        %v4625 = vpop.f32.mrb[0].mxu0
        %v4626 = vadd.f32 0.0, %v4625
        %v4627 = vpop.f32.mrb[0].mxu0
        %v4628 = vadd.f32 0.0, %v4627
        %v4629 = vpop.f32.mrb[0].mxu0
        %v4630 = vadd.f32 0.0, %v4629
        %v4631 = vpop.f32.mrb[0].mxu0
        %v4632 = vadd.f32 0.0, %v4631
        %4633 = vmatprep.mubr.bf16.mxu0 0
        %4634 = vmatmul.mubr.bf16.gmra.mrb[0].mxu0 %v4452
        %v4635 = vpop.f32.mrb[0].mxu0
        %v4636 = vadd.f32 0.0, %v4635
        %v4637 = vpop.f32.mrb[0].mxu0
        %v4638 = vadd.f32 0.0, %v4637
        %v4639 = vpop.f32.mrb[0].mxu0
        %v4640 = vadd.f32 0.0, %v4639
        %v4641 = vpop.f32.mrb[0].mxu0
        %v4642 = vadd.f32 0.0, %v4641
        %4643 = vmatprep.mubr.bf16.mxu0 0
        %4644 = vmatmul.mubr.bf16.gmra.mrb[0].mxu0 %v4453
        %v4645 = vpop.f32.mrb[0].mxu0
        %v4646 = vadd.f32 0.0, %v4645
        %v4647 = vpop.f32.mrb[0].mxu0
        %v4648 = vadd.f32 0.0, %v4647
        %v4649 = vpop.f32.mrb[0].mxu0
        %v4650 = vadd.f32 0.0, %v4649
        %v4651 = vpop.f32.mrb[0].mxu0
        %v4652 = vadd.f32 0.0, %v4651
        %4653 = vmatprep.mubr.bf16.mxu0 0
        %4654 = vmatmul.mubr.bf16.gmra.mrb[0].mxu0 %v4454
        %v4655 = vpop.f32.mrb[0].mxu0
        %v4656 = vadd.f32 0.0, %v4655
        %v4657 = vpop.f32.mrb[0].mxu0
        %v4658 = vadd.f32 0.0, %v4657
        %v4659 = vpop.f32.mrb[0].mxu0
        %v4660 = vadd.f32 0.0, %v4659
        %v4661 = vpop.f32.mrb[0].mxu0
        %v4662 = vadd.f32 0.0, %v4661
        %4663 = vmatprep.mubr.bf16.mxu0 0
        %4664 = vmatmul.mubr.bf16.gmra.mrb[0].mxu0 %v4455
        %v4665 = vpop.f32.mrb[0].mxu0
        %v4666 = vadd.f32 0.0, %v4665
        %v4667 = vpop.f32.mrb[0].mxu0
        %v4668 = vadd.f32 0.0, %v4667
        %v4669 = vpop.f32.mrb[0].mxu0
        %v4670 = vadd.f32 0.0, %v4669
        %v4671 = vpop.f32.mrb[0].mxu0
        %v4672 = vadd.f32 0.0, %v4671
        %4673 = vmatprep.mubr.bf16.mxu0 0
        %4674 = vmatmul.mubr.bf16.gmra.mrb[0].mxu0 %v4456
        %v4675 = vpop.f32.mrb[0].mxu0
        %v4676 = vadd.f32 0.0, %v4675
        %v4677 = vpop.f32.mrb[0].mxu0
        %v4678 = vadd.f32 0.0, %v4677
        %v4679 = vpop.f32.mrb[0].mxu0
        %v4680 = vadd.f32 0.0, %v4679
        %v4681 = vpop.f32.mrb[0].mxu0
        %v4682 = vadd.f32 0.0, %v4681
        %4683 = vmatprep.mubr.bf16.mxu0 0
        %4684 = vmatmul.mubr.bf16.gmra.mrb[0].mxu0 %v4457
        %v4685 = vpop.f32.mrb[0].mxu0
        %v4686 = vadd.f32 0.0, %v4685
        %v4687 = vpop.f32.mrb[0].mxu0
        %v4688 = vadd.f32 0.0, %v4687
        %v4689 = vpop.f32.mrb[0].mxu0
        %v4690 = vadd.f32 0.0, %v4689
        %v4691 = vpop.f32.mrb[0].mxu0
        %v4692 = vadd.f32 0.0, %v4691
        %4693 = vmatprep.mubr.bf16.mxu0 0
        %4694 = vmatmul.mubr.bf16.gmra.mrb[0].mxu0 %v4458
        %v4695 = vpop.f32.mrb[0].mxu0
        %v4696 = vadd.f32 0.0, %v4695
        %v4697 = vpop.f32.mrb[0].mxu0
        %v4698 = vadd.f32 0.0, %v4697
        %v4699 = vpop.f32.mrb[0].mxu0
        %v4700 = vadd.f32 0.0, %v4699
        %v4701 = vpop.f32.mrb[0].mxu0
        %v4702 = vadd.f32 0.0, %v4701
        %4703 = vmatprep.mubr.bf16.mxu0 0
        %4704 = vmatmul.mubr.bf16.gmra.mrb[0].mxu0 %v4459
        %v4705 = vpop.f32.mrb[0].mxu0
        %v4706 = vadd.f32 0.0, %v4705
        %v4707 = vpop.f32.mrb[0].mxu0
        %v4708 = vadd.f32 0.0, %v4707
        %v4709 = vpop.f32.mrb[0].mxu0
        %v4710 = vadd.f32 0.0, %v4709
        %v4711 = vpop.f32.mrb[0].mxu0
        %v4712 = vadd.f32 0.0, %v4711
        %4713 = vmatprep.mubr.bf16.mxu0 0
        %4714 = vmatmul.mubr.bf16.gmra.mrb[0].mxu0 %v4460
        %v4715 = vpop.f32.mrb[0].mxu0
        %v4716 = vadd.f32 0.0, %v4715
        %v4717 = vpop.f32.mrb[0].mxu0
        %v4718 = vadd.f32 0.0, %v4717
        %v4719 = vpop.f32.mrb[0].mxu0
        %v4720 = vadd.f32 0.0, %v4719
        %v4721 = vpop.f32.mrb[0].mxu0
        %v4722 = vadd.f32 0.0, %v4721
        %4723 = vmatprep.mubr.bf16.mxu0 0
        %4724 = vmatmul.mubr.bf16.gmra.mrb[0].mxu0 %v4461
        %v4725 = vpop.f32.mrb[0].mxu0
        %v4726 = vadd.f32 0.0, %v4725
        %v4727 = vpop.f32.mrb[0].mxu0
        %v4728 = vadd.f32 0.0, %v4727
        %v4729 = vpop.f32.mrb[0].mxu0
        %v4730 = vadd.f32 0.0, %v4729
        %v4731 = vpop.f32.mrb[0].mxu0
        %v4732 = vadd.f32 0.0, %v4731
        %4733 = vmatprep.mubr.bf16.mxu0 0
        %4734 = vmatmul.mubr.bf16.gmra.mrb[0].mxu0 %v4462
        %v4735 = vpop.f32.mrb[0].mxu0
        %v4736 = vadd.f32 0.0, %v4735
        %v4737 = vpop.f32.mrb[0].mxu0
        %v4738 = vadd.f32 0.0, %v4737
        %v4739 = vpop.f32.mrb[0].mxu0
        %v4740 = vadd.f32 0.0, %v4739
        %v4741 = vpop.f32.mrb[0].mxu0
        %v4742 = vadd.f32 0.0, %v4741
        %4743 = vmatprep.mubr.bf16.mxu0 0
        %4744 = vmatmul.mubr.bf16.gmra.mrb[0].mxu0 %v4463
        %v4745 = vpop.f32.mrb[0].mxu0
        %v4746 = vadd.f32 0.0, %v4745
        %v4747 = vpop.f32.mrb[0].mxu0
        %v4748 = vadd.f32 0.0, %v4747
        %v4749 = vpop.f32.mrb[0].mxu0
        %v4750 = vadd.f32 0.0, %v4749
        %v4751 = vpop.f32.mrb[0].mxu0
        %v4752 = vadd.f32 0.0, %v4751
        %4753 = vdwg.mxu0
        %v4754 = vadd.f32 %v3510, %v4596
        %v4755 = vadd.f32 %v3511, %v4598
        %v4756 = vadd.f32 %v3512, %v4600
        %v4757 = vadd.f32 %v3513, %v4602
        %v4758 = vadd.f32 %v3514, %v4606
        %v4759 = vadd.f32 %v3515, %v4608
        %v4760 = vadd.f32 %v3516, %v4610
        %v4761 = vadd.f32 %v3517, %v4612
        %v4762 = vadd.f32 %v3518, %v4616
        %v4763 = vadd.f32 %v3519, %v4618
        %v4764 = vadd.f32 %v3520, %v4620
        %v4765 = vadd.f32 %v3521, %v4622
        %v4766 = vadd.f32 %v3522, %v4626
        %v4767 = vadd.f32 %v3523, %v4628
        %v4768 = vadd.f32 %v3524, %v4630
        %v4769 = vadd.f32 %v3525, %v4632
        %v4770 = vadd.f32 %v3526, %v4636
        %v4771 = vadd.f32 %v3527, %v4638
        %v4772 = vadd.f32 %v3528, %v4640
        %v4773 = vadd.f32 %v3529, %v4642
        %v4774 = vadd.f32 %v3530, %v4646
        %v4775 = vadd.f32 %v3531, %v4648
        %v4776 = vadd.f32 %v3532, %v4650
        %v4777 = vadd.f32 %v3533, %v4652
        %v4778 = vadd.f32 %v3534, %v4656
        %v4779 = vadd.f32 %v3535, %v4658
        %v4780 = vadd.f32 %v3536, %v4660
        %v4781 = vadd.f32 %v3537, %v4662
        %v4782 = vadd.f32 %v3538, %v4666
        %v4783 = vadd.f32 %v3539, %v4668
        %v4784 = vadd.f32 %v3540, %v4670
        %v4785 = vadd.f32 %v3541, %v4672
        %v4786 = vadd.f32 %v3542, %v4676
        %v4787 = vadd.f32 %v3543, %v4678
        %v4788 = vadd.f32 %v3544, %v4680
        %v4789 = vadd.f32 %v3545, %v4682
        %v4790 = vadd.f32 %v3546, %v4686
        %v4791 = vadd.f32 %v3547, %v4688
        %v4792 = vadd.f32 %v3548, %v4690
        %v4793 = vadd.f32 %v3549, %v4692
        %v4794 = vadd.f32 %v3550, %v4696
        %v4795 = vadd.f32 %v3551, %v4698
        %v4796 = vadd.f32 %v3552, %v4700
        %v4797 = vadd.f32 %v3553, %v4702
        %v4798 = vadd.f32 %v3554, %v4706
        %v4799 = vadd.f32 %v3555, %v4708
        %v4800 = vadd.f32 %v3556, %v4710
        %v4801 = vadd.f32 %v3557, %v4712
        %v4802 = vadd.f32 %v3558, %v4716
        %v4803 = vadd.f32 %v3559, %v4718
        %v4804 = vadd.f32 %v3560, %v4720
        %v4805 = vadd.f32 %v3561, %v4722
        %v4806 = vadd.f32 %v3562, %v4726
        %v4807 = vadd.f32 %v3563, %v4728
        %v4808 = vadd.f32 %v3564, %v4730
        %v4809 = vadd.f32 %v3565, %v4732
        %v4810 = vadd.f32 %v3566, %v4736
        %v4811 = vadd.f32 %v3567, %v4738
        %v4812 = vadd.f32 %v3568, %v4740
        %v4813 = vadd.f32 %v3569, %v4742
        %v4814 = vadd.f32 %v3570, %v4746
        %v4815 = vadd.f32 %v3571, %v4748
        %v4816 = vadd.f32 %v3572, %v4750
        %v4817 = vadd.f32 %v3573, %v4752
        %v4818 = vld [vmem:[%s4] sm:$0x3]
        %v4820 = vlaneseq
        %v4821 = vshrl.u32 %v4820, 7
        %v4822 = vsub.s32 0, %v4821
        %v4823 = vrot.slane %v4818, %v4822
        %v4824 = vlaneseq
        %v4825 = vshrl.u32 %v4824, 7
        %v4826 = vsub.s32 1, %v4825
        %v4827 = vrot.slane %v4818, %v4826
        %v4830 = vadd.f32 %v4754, %v4823
        %v4831 = vadd.f32 %v4755, %v4827
        %v4832 = vadd.f32 %v4756, %v4823
        %v4833 = vadd.f32 %v4757, %v4827
        %v4834 = vadd.f32 %v4758, %v4823
        %v4835 = vadd.f32 %v4759, %v4827
        %v4836 = vadd.f32 %v4760, %v4823
        %v4837 = vadd.f32 %v4761, %v4827
        %v4838 = vadd.f32 %v4762, %v4823
        %v4839 = vadd.f32 %v4763, %v4827
        %v4840 = vadd.f32 %v4764, %v4823
        %v4841 = vadd.f32 %v4765, %v4827
        %v4842 = vadd.f32 %v4766, %v4823
        %v4843 = vadd.f32 %v4767, %v4827
        %v4844 = vadd.f32 %v4768, %v4823
        %v4845 = vadd.f32 %v4769, %v4827
        %v4846 = vadd.f32 %v4770, %v4823
        %v4847 = vadd.f32 %v4771, %v4827
        %v4848 = vadd.f32 %v4772, %v4823
        %v4849 = vadd.f32 %v4773, %v4827
        %v4850 = vadd.f32 %v4774, %v4823
        %v4851 = vadd.f32 %v4775, %v4827
        %v4852 = vadd.f32 %v4776, %v4823
        %v4853 = vadd.f32 %v4777, %v4827
        %v4854 = vadd.f32 %v4778, %v4823
        %v4855 = vadd.f32 %v4779, %v4827
        %v4856 = vadd.f32 %v4780, %v4823
        %v4857 = vadd.f32 %v4781, %v4827
        %v4858 = vadd.f32 %v4782, %v4823
        %v4859 = vadd.f32 %v4783, %v4827
        %v4860 = vadd.f32 %v4784, %v4823
        %v4861 = vadd.f32 %v4785, %v4827
        %v4862 = vadd.f32 %v4786, %v4823
        %v4863 = vadd.f32 %v4787, %v4827
        %v4864 = vadd.f32 %v4788, %v4823
        %v4865 = vadd.f32 %v4789, %v4827
        %v4866 = vadd.f32 %v4790, %v4823
        %v4867 = vadd.f32 %v4791, %v4827
        %v4868 = vadd.f32 %v4792, %v4823
        %v4869 = vadd.f32 %v4793, %v4827
        %v4870 = vadd.f32 %v4794, %v4823
        %v4871 = vadd.f32 %v4795, %v4827
        %v4872 = vadd.f32 %v4796, %v4823
        %v4873 = vadd.f32 %v4797, %v4827
        %v4874 = vadd.f32 %v4798, %v4823
        %v4875 = vadd.f32 %v4799, %v4827
        %v4876 = vadd.f32 %v4800, %v4823
        %v4877 = vadd.f32 %v4801, %v4827
        %v4878 = vadd.f32 %v4802, %v4823
        %v4879 = vadd.f32 %v4803, %v4827
        %v4880 = vadd.f32 %v4804, %v4823
        %v4881 = vadd.f32 %v4805, %v4827
        %v4882 = vadd.f32 %v4806, %v4823
        %v4883 = vadd.f32 %v4807, %v4827
        %v4884 = vadd.f32 %v4808, %v4823
        %v4885 = vadd.f32 %v4809, %v4827
        %v4886 = vadd.f32 %v4810, %v4823
        %v4887 = vadd.f32 %v4811, %v4827
        %v4888 = vadd.f32 %v4812, %v4823
        %v4889 = vadd.f32 %v4813, %v4827
        %v4890 = vadd.f32 %v4814, %v4823
        %v4891 = vadd.f32 %v4815, %v4827
        %v4892 = vadd.f32 %v4816, %v4823
        %v4893 = vadd.f32 %v4817, %v4827
        %v4894 = vxor.u32 %v4830, 2147483648
        %v4895 = vxor.u32 %v4831, 2147483648
        %v4896 = vxor.u32 %v4832, 2147483648
        %v4897 = vxor.u32 %v4833, 2147483648
        %v4898 = vxor.u32 %v4834, 2147483648
        %v4899 = vxor.u32 %v4835, 2147483648
        %v4900 = vxor.u32 %v4836, 2147483648
        %v4901 = vxor.u32 %v4837, 2147483648
        %v4902 = vxor.u32 %v4838, 2147483648
        %v4903 = vxor.u32 %v4839, 2147483648
        %v4904 = vxor.u32 %v4840, 2147483648
        %v4905 = vxor.u32 %v4841, 2147483648
        %v4906 = vxor.u32 %v4842, 2147483648
        %v4907 = vxor.u32 %v4843, 2147483648
        %v4908 = vxor.u32 %v4844, 2147483648
        %v4909 = vxor.u32 %v4845, 2147483648
        %v4910 = vxor.u32 %v4846, 2147483648
        %v4911 = vxor.u32 %v4847, 2147483648
        %v4912 = vxor.u32 %v4848, 2147483648
        %v4913 = vxor.u32 %v4849, 2147483648
        %v4914 = vxor.u32 %v4850, 2147483648
        %v4915 = vxor.u32 %v4851, 2147483648
        %v4916 = vxor.u32 %v4852, 2147483648
        %v4917 = vxor.u32 %v4853, 2147483648
        %v4918 = vxor.u32 %v4854, 2147483648
        %v4919 = vxor.u32 %v4855, 2147483648
        %v4920 = vxor.u32 %v4856, 2147483648
        %v4921 = vxor.u32 %v4857, 2147483648
        %v4922 = vxor.u32 %v4858, 2147483648
        %v4923 = vxor.u32 %v4859, 2147483648
        %v4924 = vxor.u32 %v4860, 2147483648
        %v4925 = vxor.u32 %v4861, 2147483648
        %v4926 = vxor.u32 %v4862, 2147483648
        %v4927 = vxor.u32 %v4863, 2147483648
        %v4928 = vxor.u32 %v4864, 2147483648
        %v4929 = vxor.u32 %v4865, 2147483648
        %v4930 = vxor.u32 %v4866, 2147483648
        %v4931 = vxor.u32 %v4867, 2147483648
        %v4932 = vxor.u32 %v4868, 2147483648
        %v4933 = vxor.u32 %v4869, 2147483648
        %v4934 = vxor.u32 %v4870, 2147483648
        %v4935 = vxor.u32 %v4871, 2147483648
        %v4936 = vxor.u32 %v4872, 2147483648
        %v4937 = vxor.u32 %v4873, 2147483648
        %v4938 = vxor.u32 %v4874, 2147483648
        %v4939 = vxor.u32 %v4875, 2147483648
        %v4940 = vxor.u32 %v4876, 2147483648
        %v4941 = vxor.u32 %v4877, 2147483648
        %v4942 = vxor.u32 %v4878, 2147483648
        %v4943 = vxor.u32 %v4879, 2147483648
        %v4944 = vxor.u32 %v4880, 2147483648
        %v4945 = vxor.u32 %v4881, 2147483648
        %v4946 = vxor.u32 %v4882, 2147483648
        %v4947 = vxor.u32 %v4883, 2147483648
        %v4948 = vxor.u32 %v4884, 2147483648
        %v4949 = vxor.u32 %v4885, 2147483648
        %v4950 = vxor.u32 %v4886, 2147483648
        %v4951 = vxor.u32 %v4887, 2147483648
        %v4952 = vxor.u32 %v4888, 2147483648
        %v4953 = vxor.u32 %v4889, 2147483648
        %v4954 = vxor.u32 %v4890, 2147483648
        %v4955 = vxor.u32 %v4891, 2147483648
        %v4956 = vxor.u32 %v4892, 2147483648
        %v4957 = vxor.u32 %v4893, 2147483648
        %v4958 = vmul.f32 %v4894, 1.442695
        %v4959 = vpow.pop %v4958
        %v4960 = vmul.f32 %v4895, 1.442695
        %v4961 = vpow.pop %v4960
        %v4962 = vmul.f32 %v4896, 1.442695
        %v4963 = vpow.pop %v4962
        %v4964 = vmul.f32 %v4897, 1.442695
        %v4965 = vpow.pop %v4964
        %v4966 = vmul.f32 %v4898, 1.442695
        %v4967 = vpow.pop %v4966
        %v4968 = vmul.f32 %v4899, 1.442695
        %v4969 = vpow.pop %v4968
        %v4970 = vmul.f32 %v4900, 1.442695
        %v4971 = vpow.pop %v4970
        %v4972 = vmul.f32 %v4901, 1.442695
        %v4973 = vpow.pop %v4972
        %v4974 = vmul.f32 %v4902, 1.442695
        %v4975 = vpow.pop %v4974
        %v4976 = vmul.f32 %v4903, 1.442695
        %v4977 = vpow.pop %v4976
        %v4978 = vmul.f32 %v4904, 1.442695
        %v4979 = vpow.pop %v4978
        %v4980 = vmul.f32 %v4905, 1.442695
        %v4981 = vpow.pop %v4980
        %v4982 = vmul.f32 %v4906, 1.442695
        %v4983 = vpow.pop %v4982
        %v4984 = vmul.f32 %v4907, 1.442695
        %v4985 = vpow.pop %v4984
        %v4986 = vmul.f32 %v4908, 1.442695
        %v4987 = vpow.pop %v4986
        %v4988 = vmul.f32 %v4909, 1.442695
        %v4989 = vpow.pop %v4988
        %v4990 = vmul.f32 %v4910, 1.442695
        %v4991 = vpow.pop %v4990
        %v4992 = vmul.f32 %v4911, 1.442695
        %v4993 = vpow.pop %v4992
        %v4994 = vmul.f32 %v4912, 1.442695
        %v4995 = vpow.pop %v4994
        %v4996 = vmul.f32 %v4913, 1.442695
        %v4997 = vpow.pop %v4996
        %v4998 = vmul.f32 %v4914, 1.442695
        %v4999 = vpow.pop %v4998
        %v5000 = vmul.f32 %v4915, 1.442695
        %v5001 = vpow.pop %v5000
        %v5002 = vmul.f32 %v4916, 1.442695
        %v5003 = vpow.pop %v5002
        %v5004 = vmul.f32 %v4917, 1.442695
        %v5005 = vpow.pop %v5004
        %v5006 = vmul.f32 %v4918, 1.442695
        %v5007 = vpow.pop %v5006
        %v5008 = vmul.f32 %v4919, 1.442695
        %v5009 = vpow.pop %v5008
        %v5010 = vmul.f32 %v4920, 1.442695
        %v5011 = vpow.pop %v5010
        %v5012 = vmul.f32 %v4921, 1.442695
        %v5013 = vpow.pop %v5012
        %v5014 = vmul.f32 %v4922, 1.442695
        %v5015 = vpow.pop %v5014
        %v5016 = vmul.f32 %v4923, 1.442695
        %v5017 = vpow.pop %v5016
        %v5018 = vmul.f32 %v4924, 1.442695
        %v5019 = vpow.pop %v5018
        %v5020 = vmul.f32 %v4925, 1.442695
        %v5021 = vpow.pop %v5020
        %v5022 = vmul.f32 %v4926, 1.442695
        %v5023 = vpow.pop %v5022
        %v5024 = vmul.f32 %v4927, 1.442695
        %v5025 = vpow.pop %v5024
        %v5026 = vmul.f32 %v4928, 1.442695
        %v5027 = vpow.pop %v5026
        %v5028 = vmul.f32 %v4929, 1.442695
        %v5029 = vpow.pop %v5028
        %v5030 = vmul.f32 %v4930, 1.442695
        %v5031 = vpow.pop %v5030
        %v5032 = vmul.f32 %v4931, 1.442695
        %v5033 = vpow.pop %v5032
        %v5034 = vmul.f32 %v4932, 1.442695
        %v5035 = vpow.pop %v5034
        %v5036 = vmul.f32 %v4933, 1.442695
        %v5037 = vpow.pop %v5036
        %v5038 = vmul.f32 %v4934, 1.442695
        %v5039 = vpow.pop %v5038
        %v5040 = vmul.f32 %v4935, 1.442695
        %v5041 = vpow.pop %v5040
        %v5042 = vmul.f32 %v4936, 1.442695
        %v5043 = vpow.pop %v5042
        %v5044 = vmul.f32 %v4937, 1.442695
        %v5045 = vpow.pop %v5044
        %v5046 = vmul.f32 %v4938, 1.442695
        %v5047 = vpow.pop %v5046
        %v5048 = vmul.f32 %v4939, 1.442695
        %v5049 = vpow.pop %v5048
        %v5050 = vmul.f32 %v4940, 1.442695
        %v5051 = vpow.pop %v5050
        %v5052 = vmul.f32 %v4941, 1.442695
        %v5053 = vpow.pop %v5052
        %v5054 = vmul.f32 %v4942, 1.442695
        %v5055 = vpow.pop %v5054
        %v5056 = vmul.f32 %v4943, 1.442695
        %v5057 = vpow.pop %v5056
        %v5058 = vmul.f32 %v4944, 1.442695
        %v5059 = vpow.pop %v5058
        %v5060 = vmul.f32 %v4945, 1.442695
        %v5061 = vpow.pop %v5060
        %v5062 = vmul.f32 %v4946, 1.442695
        %v5063 = vpow.pop %v5062
        %v5064 = vmul.f32 %v4947, 1.442695
        %v5065 = vpow.pop %v5064
        %v5066 = vmul.f32 %v4948, 1.442695
        %v5067 = vpow.pop %v5066
        %v5068 = vmul.f32 %v4949, 1.442695
        %v5069 = vpow.pop %v5068
        %v5070 = vmul.f32 %v4950, 1.442695
        %v5071 = vpow.pop %v5070
        %v5072 = vmul.f32 %v4951, 1.442695
        %v5073 = vpow.pop %v5072
        %v5074 = vmul.f32 %v4952, 1.442695
        %v5075 = vpow.pop %v5074
        %v5076 = vmul.f32 %v4953, 1.442695
        %v5077 = vpow.pop %v5076
        %v5078 = vmul.f32 %v4954, 1.442695
        %v5079 = vpow.pop %v5078
        %v5080 = vmul.f32 %v4955, 1.442695
        %v5081 = vpow.pop %v5080
        %v5082 = vmul.f32 %v4956, 1.442695
        %v5083 = vpow.pop %v5082
        %v5084 = vmul.f32 %v4957, 1.442695
        %v5085 = vpow.pop %v5084
        %v5086 = vadd.f32 %v4959, 1.0
        %v5087 = vadd.f32 %v4961, 1.0
        %v5088 = vadd.f32 %v4963, 1.0
        %v5089 = vadd.f32 %v4965, 1.0
        %v5090 = vadd.f32 %v4967, 1.0
        %v5091 = vadd.f32 %v4969, 1.0
        %v5092 = vadd.f32 %v4971, 1.0
        %v5093 = vadd.f32 %v4973, 1.0
        %v5094 = vadd.f32 %v4975, 1.0
        %v5095 = vadd.f32 %v4977, 1.0
        %v5096 = vadd.f32 %v4979, 1.0
        %v5097 = vadd.f32 %v4981, 1.0
        %v5098 = vadd.f32 %v4983, 1.0
        %v5099 = vadd.f32 %v4985, 1.0
        %v5100 = vadd.f32 %v4987, 1.0
        %v5101 = vadd.f32 %v4989, 1.0
        %v5102 = vadd.f32 %v4991, 1.0
        %v5103 = vadd.f32 %v4993, 1.0
        %v5104 = vadd.f32 %v4995, 1.0
        %v5105 = vadd.f32 %v4997, 1.0
        %v5106 = vadd.f32 %v4999, 1.0
        %v5107 = vadd.f32 %v5001, 1.0
        %v5108 = vadd.f32 %v5003, 1.0
        %v5109 = vadd.f32 %v5005, 1.0
        %v5110 = vadd.f32 %v5007, 1.0
        %v5111 = vadd.f32 %v5009, 1.0
        %v5112 = vadd.f32 %v5011, 1.0
        %v5113 = vadd.f32 %v5013, 1.0
        %v5114 = vadd.f32 %v5015, 1.0
        %v5115 = vadd.f32 %v5017, 1.0
        %v5116 = vadd.f32 %v5019, 1.0
        %v5117 = vadd.f32 %v5021, 1.0
        %v5118 = vadd.f32 %v5023, 1.0
        %v5119 = vadd.f32 %v5025, 1.0
        %v5120 = vadd.f32 %v5027, 1.0
        %v5121 = vadd.f32 %v5029, 1.0
        %v5122 = vadd.f32 %v5031, 1.0
        %v5123 = vadd.f32 %v5033, 1.0
        %v5124 = vadd.f32 %v5035, 1.0
        %v5125 = vadd.f32 %v5037, 1.0
        %v5126 = vadd.f32 %v5039, 1.0
        %v5127 = vadd.f32 %v5041, 1.0
        %v5128 = vadd.f32 %v5043, 1.0
        %v5129 = vadd.f32 %v5045, 1.0
        %v5130 = vadd.f32 %v5047, 1.0
        %v5131 = vadd.f32 %v5049, 1.0
        %v5132 = vadd.f32 %v5051, 1.0
        %v5133 = vadd.f32 %v5053, 1.0
        %v5134 = vadd.f32 %v5055, 1.0
        %v5135 = vadd.f32 %v5057, 1.0
        %v5136 = vadd.f32 %v5059, 1.0
        %v5137 = vadd.f32 %v5061, 1.0
        %v5138 = vadd.f32 %v5063, 1.0
        %v5139 = vadd.f32 %v5065, 1.0
        %v5140 = vadd.f32 %v5067, 1.0
        %v5141 = vadd.f32 %v5069, 1.0
        %v5142 = vadd.f32 %v5071, 1.0
        %v5143 = vadd.f32 %v5073, 1.0
        %v5144 = vadd.f32 %v5075, 1.0
        %v5145 = vadd.f32 %v5077, 1.0
        %v5146 = vadd.f32 %v5079, 1.0
        %v5147 = vadd.f32 %v5081, 1.0
        %v5148 = vadd.f32 %v5083, 1.0
        %v5149 = vadd.f32 %v5085, 1.0
        %v5150 = vrcp.pop %v5086
        %v5151 = vmul.f32 1.0, %v5150
        %v5152 = vrcp.pop %v5087
        %v5153 = vmul.f32 1.0, %v5152
        %v5154 = vrcp.pop %v5088
        %v5155 = vmul.f32 1.0, %v5154
        %v5156 = vrcp.pop %v5089
        %v5157 = vmul.f32 1.0, %v5156
        %v5158 = vrcp.pop %v5090
        %v5159 = vmul.f32 1.0, %v5158
        %v5160 = vrcp.pop %v5091
        %v5161 = vmul.f32 1.0, %v5160
        %v5162 = vrcp.pop %v5092
        %v5163 = vmul.f32 1.0, %v5162
        %v5164 = vrcp.pop %v5093
        %v5165 = vmul.f32 1.0, %v5164
        %v5166 = vrcp.pop %v5094
        %v5167 = vmul.f32 1.0, %v5166
        %v5168 = vrcp.pop %v5095
        %v5169 = vmul.f32 1.0, %v5168
        %v5170 = vrcp.pop %v5096
        %v5171 = vmul.f32 1.0, %v5170
        %v5172 = vrcp.pop %v5097
        %v5173 = vmul.f32 1.0, %v5172
        %v5174 = vrcp.pop %v5098
        %v5175 = vmul.f32 1.0, %v5174
        %v5176 = vrcp.pop %v5099
        %v5177 = vmul.f32 1.0, %v5176
        %v5178 = vrcp.pop %v5100
        %v5179 = vmul.f32 1.0, %v5178
        %v5180 = vrcp.pop %v5101
        %v5181 = vmul.f32 1.0, %v5180
        %v5182 = vrcp.pop %v5102
        %v5183 = vmul.f32 1.0, %v5182
        %v5184 = vrcp.pop %v5103
        %v5185 = vmul.f32 1.0, %v5184
        %v5186 = vrcp.pop %v5104
        %v5187 = vmul.f32 1.0, %v5186
        %v5188 = vrcp.pop %v5105
        %v5189 = vmul.f32 1.0, %v5188
        %v5190 = vrcp.pop %v5106
        %v5191 = vmul.f32 1.0, %v5190
        %v5192 = vrcp.pop %v5107
        %v5193 = vmul.f32 1.0, %v5192
        %v5194 = vrcp.pop %v5108
        %v5195 = vmul.f32 1.0, %v5194
        %v5196 = vrcp.pop %v5109
        %v5197 = vmul.f32 1.0, %v5196
        %v5198 = vrcp.pop %v5110
        %v5199 = vmul.f32 1.0, %v5198
        %v5200 = vrcp.pop %v5111
        %v5201 = vmul.f32 1.0, %v5200
        %v5202 = vrcp.pop %v5112
        %v5203 = vmul.f32 1.0, %v5202
        %v5204 = vrcp.pop %v5113
        %v5205 = vmul.f32 1.0, %v5204
        %v5206 = vrcp.pop %v5114
        %v5207 = vmul.f32 1.0, %v5206
        %v5208 = vrcp.pop %v5115
        %v5209 = vmul.f32 1.0, %v5208
        %v5210 = vrcp.pop %v5116
        %v5211 = vmul.f32 1.0, %v5210
        %v5212 = vrcp.pop %v5117
        %v5213 = vmul.f32 1.0, %v5212
        %v5214 = vrcp.pop %v5118
        %v5215 = vmul.f32 1.0, %v5214
        %v5216 = vrcp.pop %v5119
        %v5217 = vmul.f32 1.0, %v5216
        %v5218 = vrcp.pop %v5120
        %v5219 = vmul.f32 1.0, %v5218
        %v5220 = vrcp.pop %v5121
        %v5221 = vmul.f32 1.0, %v5220
        %v5222 = vrcp.pop %v5122
        %v5223 = vmul.f32 1.0, %v5222
        %v5224 = vrcp.pop %v5123
        %v5225 = vmul.f32 1.0, %v5224
        %v5226 = vrcp.pop %v5124
        %v5227 = vmul.f32 1.0, %v5226
        %v5228 = vrcp.pop %v5125
        %v5229 = vmul.f32 1.0, %v5228
        %v5230 = vrcp.pop %v5126
        %v5231 = vmul.f32 1.0, %v5230
        %v5232 = vrcp.pop %v5127
        %v5233 = vmul.f32 1.0, %v5232
        %v5234 = vrcp.pop %v5128
        %v5235 = vmul.f32 1.0, %v5234
        %v5236 = vrcp.pop %v5129
        %v5237 = vmul.f32 1.0, %v5236
        %v5238 = vrcp.pop %v5130
        %v5239 = vmul.f32 1.0, %v5238
        %v5240 = vrcp.pop %v5131
        %v5241 = vmul.f32 1.0, %v5240
        %v5242 = vrcp.pop %v5132
        %v5243 = vmul.f32 1.0, %v5242
        %v5244 = vrcp.pop %v5133
        %v5245 = vmul.f32 1.0, %v5244
        %v5246 = vrcp.pop %v5134
        %v5247 = vmul.f32 1.0, %v5246
        %v5248 = vrcp.pop %v5135
        %v5249 = vmul.f32 1.0, %v5248
        %v5250 = vrcp.pop %v5136
        %v5251 = vmul.f32 1.0, %v5250
        %v5252 = vrcp.pop %v5137
        %v5253 = vmul.f32 1.0, %v5252
        %v5254 = vrcp.pop %v5138
        %v5255 = vmul.f32 1.0, %v5254
        %v5256 = vrcp.pop %v5139
        %v5257 = vmul.f32 1.0, %v5256
        %v5258 = vrcp.pop %v5140
        %v5259 = vmul.f32 1.0, %v5258
        %v5260 = vrcp.pop %v5141
        %v5261 = vmul.f32 1.0, %v5260
        %v5262 = vrcp.pop %v5142
        %v5263 = vmul.f32 1.0, %v5262
        %v5264 = vrcp.pop %v5143
        %v5265 = vmul.f32 1.0, %v5264
        %v5266 = vrcp.pop %v5144
        %v5267 = vmul.f32 1.0, %v5266
        %v5268 = vrcp.pop %v5145
        %v5269 = vmul.f32 1.0, %v5268
        %v5270 = vrcp.pop %v5146
        %v5271 = vmul.f32 1.0, %v5270
        %v5272 = vrcp.pop %v5147
        %v5273 = vmul.f32 1.0, %v5272
        %v5274 = vrcp.pop %v5148
        %v5275 = vmul.f32 1.0, %v5274
        %v5276 = vrcp.pop %v5149
        %v5277 = vmul.f32 1.0, %v5276
        %v5278 = vmul.f32 %v4830, %v5151
        %v5279 = vmul.f32 %v4831, %v5153
        %v5280 = vmul.f32 %v4832, %v5155
        %v5281 = vmul.f32 %v4833, %v5157
        %v5282 = vmul.f32 %v4834, %v5159
        %v5283 = vmul.f32 %v4835, %v5161
        %v5284 = vmul.f32 %v4836, %v5163
        %v5285 = vmul.f32 %v4837, %v5165
        %v5286 = vmul.f32 %v4838, %v5167
        %v5287 = vmul.f32 %v4839, %v5169
        %v5288 = vmul.f32 %v4840, %v5171
        %v5289 = vmul.f32 %v4841, %v5173
        %v5290 = vmul.f32 %v4842, %v5175
        %v5291 = vmul.f32 %v4843, %v5177
        %v5292 = vmul.f32 %v4844, %v5179
        %v5293 = vmul.f32 %v4845, %v5181
        %v5294 = vmul.f32 %v4846, %v5183
        %v5295 = vmul.f32 %v4847, %v5185
        %v5296 = vmul.f32 %v4848, %v5187
        %v5297 = vmul.f32 %v4849, %v5189
        %v5298 = vmul.f32 %v4850, %v5191
        %v5299 = vmul.f32 %v4851, %v5193
        %v5300 = vmul.f32 %v4852, %v5195
        %v5301 = vmul.f32 %v4853, %v5197
        %v5302 = vmul.f32 %v4854, %v5199
        %v5303 = vmul.f32 %v4855, %v5201
        %v5304 = vmul.f32 %v4856, %v5203
        %v5305 = vmul.f32 %v4857, %v5205
        %v5306 = vmul.f32 %v4858, %v5207
        %v5307 = vmul.f32 %v4859, %v5209
        %v5308 = vmul.f32 %v4860, %v5211
        %v5309 = vmul.f32 %v4861, %v5213
        %v5310 = vmul.f32 %v4862, %v5215
        %v5311 = vmul.f32 %v4863, %v5217
        %v5312 = vmul.f32 %v4864, %v5219
        %v5313 = vmul.f32 %v4865, %v5221
        %v5314 = vmul.f32 %v4866, %v5223
        %v5315 = vmul.f32 %v4867, %v5225
        %v5316 = vmul.f32 %v4868, %v5227
        %v5317 = vmul.f32 %v4869, %v5229
        %v5318 = vmul.f32 %v4870, %v5231
        %v5319 = vmul.f32 %v4871, %v5233
        %v5320 = vmul.f32 %v4872, %v5235
        %v5321 = vmul.f32 %v4873, %v5237
        %v5322 = vmul.f32 %v4874, %v5239
        %v5323 = vmul.f32 %v4875, %v5241
        %v5324 = vmul.f32 %v4876, %v5243
        %v5325 = vmul.f32 %v4877, %v5245
        %v5326 = vmul.f32 %v4878, %v5247
        %v5327 = vmul.f32 %v4879, %v5249
        %v5328 = vmul.f32 %v4880, %v5251
        %v5329 = vmul.f32 %v4881, %v5253
        %v5330 = vmul.f32 %v4882, %v5255
        %v5331 = vmul.f32 %v4883, %v5257
        %v5332 = vmul.f32 %v4884, %v5259
        %v5333 = vmul.f32 %v4885, %v5261
        %v5334 = vmul.f32 %v4886, %v5263
        %v5335 = vmul.f32 %v4887, %v5265
        %v5336 = vmul.f32 %v4888, %v5267
        %v5337 = vmul.f32 %v4889, %v5269
        %v5338 = vmul.f32 %v4890, %v5271
        %v5339 = vmul.f32 %v4891, %v5273
        %v5340 = vmul.f32 %v4892, %v5275
        %v5341 = vmul.f32 %v4893, %v5277
        %5342 = vst [vmem:[%s217] sm:$0xff] %v5278
        %5343 = vst [vmem:[%s217 + $0x8] sm:$0xff] %v5279
        %5344 = vst [vmem:[%s217 + $0x10] sm:$0xff] %v5280
        %5345 = vst [vmem:[%s217 + $0x18] sm:$0xff] %v5281
        %5346 = vst [vmem:[%s217 + $0x20] sm:$0xff] %v5282
        %5347 = vst [vmem:[%s217 + $0x28] sm:$0xff] %v5283
        %5348 = vst [vmem:[%s217 + $0x30] sm:$0xff] %v5284
        %5349 = vst [vmem:[%s217 + $0x38] sm:$0xff] %v5285
        %5350 = vst [vmem:[%s217 + $0x40] sm:$0xff] %v5286
        %5351 = vst [vmem:[%s217 + $0x48] sm:$0xff] %v5287
        %5352 = vst [vmem:[%s217 + $0x50] sm:$0xff] %v5288
        %5353 = vst [vmem:[%s217 + $0x58] sm:$0xff] %v5289
        %5354 = vst [vmem:[%s217 + $0x60] sm:$0xff] %v5290
        %5355 = vst [vmem:[%s217 + $0x68] sm:$0xff] %v5291
        %5356 = vst [vmem:[%s217 + $0x70] sm:$0xff] %v5292
        %5357 = vst [vmem:[%s217 + $0x78] sm:$0xff] %v5293
        %5358 = vst [vmem:[%s217 + $0x80] sm:$0xff] %v5294
        %5359 = vst [vmem:[%s217 + $0x88] sm:$0xff] %v5295
        %5360 = vst [vmem:[%s217 + $0x90] sm:$0xff] %v5296
        %5361 = vst [vmem:[%s217 + $0x98] sm:$0xff] %v5297
        %5362 = vst [vmem:[%s217 + $0xa0] sm:$0xff] %v5298
        %5363 = vst [vmem:[%s217 + $0xa8] sm:$0xff] %v5299
        %5364 = vst [vmem:[%s217 + $0xb0] sm:$0xff] %v5300
        %5365 = vst [vmem:[%s217 + $0xb8] sm:$0xff] %v5301
        %5366 = vst [vmem:[%s217 + $0xc0] sm:$0xff] %v5302
        %5367 = vst [vmem:[%s217 + $0xc8] sm:$0xff] %v5303
        %5368 = vst [vmem:[%s217 + $0xd0] sm:$0xff] %v5304
        %5369 = vst [vmem:[%s217 + $0xd8] sm:$0xff] %v5305
        %5370 = vst [vmem:[%s217 + $0xe0] sm:$0xff] %v5306
        %5371 = vst [vmem:[%s217 + $0xe8] sm:$0xff] %v5307
        %5372 = vst [vmem:[%s217 + $0xf0] sm:$0xff] %v5308
        %5373 = vst [vmem:[%s217 + $0xf8] sm:$0xff] %v5309
        %5374 = vst [vmem:[%s217 + $0x100] sm:$0xff] %v5310
        %5375 = vst [vmem:[%s217 + $0x108] sm:$0xff] %v5311
        %5376 = vst [vmem:[%s217 + $0x110] sm:$0xff] %v5312
        %5377 = vst [vmem:[%s217 + $0x118] sm:$0xff] %v5313
        %5378 = vst [vmem:[%s217 + $0x120] sm:$0xff] %v5314
        %5379 = vst [vmem:[%s217 + $0x128] sm:$0xff] %v5315
        %5380 = vst [vmem:[%s217 + $0x130] sm:$0xff] %v5316
        %5381 = vst [vmem:[%s217 + $0x138] sm:$0xff] %v5317
        %5382 = vst [vmem:[%s217 + $0x140] sm:$0xff] %v5318
        %5383 = vst [vmem:[%s217 + $0x148] sm:$0xff] %v5319
        %5384 = vst [vmem:[%s217 + $0x150] sm:$0xff] %v5320
        %5385 = vst [vmem:[%s217 + $0x158] sm:$0xff] %v5321
        %5386 = vst [vmem:[%s217 + $0x160] sm:$0xff] %v5322
        %5387 = vst [vmem:[%s217 + $0x168] sm:$0xff] %v5323
        %5388 = vst [vmem:[%s217 + $0x170] sm:$0xff] %v5324
        %5389 = vst [vmem:[%s217 + $0x178] sm:$0xff] %v5325
        %5390 = vst [vmem:[%s217 + $0x180] sm:$0xff] %v5326
        %5391 = vst [vmem:[%s217 + $0x188] sm:$0xff] %v5327
        %5392 = vst [vmem:[%s217 + $0x190] sm:$0xff] %v5328
        %5393 = vst [vmem:[%s217 + $0x198] sm:$0xff] %v5329
        %5394 = vst [vmem:[%s217 + $0x1a0] sm:$0xff] %v5330
        %5395 = vst [vmem:[%s217 + $0x1a8] sm:$0xff] %v5331
        %5396 = vst [vmem:[%s217 + $0x1b0] sm:$0xff] %v5332
        %5397 = vst [vmem:[%s217 + $0x1b8] sm:$0xff] %v5333
        %5398 = vst [vmem:[%s217 + $0x1c0] sm:$0xff] %v5334
        %5399 = vst [vmem:[%s217 + $0x1c8] sm:$0xff] %v5335
        %5400 = vst [vmem:[%s217 + $0x1d0] sm:$0xff] %v5336
        %5401 = vst [vmem:[%s217 + $0x1d8] sm:$0xff] %v5337
        %5402 = vst [vmem:[%s217 + $0x1e0] sm:$0xff] %v5338
        %5403 = vst [vmem:[%s217 + $0x1e8] sm:$0xff] %v5339
        %5404 = vst [vmem:[%s217 + $0x1f0] sm:$0xff] %v5340
        %5405 = vst [vmem:[%s217 + $0x1f8] sm:$0xff] %v5341
        %s5406 = sand.u32 %s137, 1
        %s5407 = scalar_lea.sflag [#allocation3], %s5406
        %s5408 = sand.u32 %s137, 1
        %s5409 = smul.addr %s5408, 512
        %s5410 = scalar_lea.vmem [#allocation2], %s5409
        // Predicated region
        $region41: #{sppf_forward.1} parent=39 // pred_check
          %p5411 = pneg %p147
        $region42: #{sppf_forward.1} parent=39 // pred_check_branch
          %5413 = sbr.rel (%p5411) target = $region44
        $region43: #{sppf_forward.1} parent=39 // pred_region
          %s5415 = ssub.s32 8192, 8192
          %5416 = vsyncadd %s5407, %s5415
          %s5417 = smul.addr %s19, 64
          %s5418 = smul.addr %s5417, 128
          %s5419 = scalar_lea.hbm %s5, %s5418
          %s5420 = sshll.u32 %s5410, 4
          %s5421 = int_to_ptr.vmem [resolvable:$true] %s5420
          %5426 = dma.vmem_to_hbm [thread:$0]  %s5421, 8192, %s5419, %s5407, 256, 256, 16
        $region44: #{sppf_forward.1} parent=39 // pred_fallthru
          _
      $region40: #{sppf_forward.1} parent=5 // pred_fallthru
        _
      %p5427 = scmp.le.s32.totalorder 2, %s14
      // Predicated region
      $region45: #{sppf_forward.1} parent=5 // pred_check
        %p5428 = pneg %p5427
      $region46: #{sppf_forward.1} parent=5 // pred_check_branch
        %5430 = sbr.rel (%p5428) target = $region48
      $region47: #{sppf_forward.1} parent=5 // pred_region
        %s5431 = ssub.s32 %s14, 2
        // Predicated region
        $region49: #{sppf_forward.1} parent=47 // pred_check
          %p5432 = pneg %p153
        $region50: #{sppf_forward.1} parent=47 // pred_check_branch
          %5434 = sbr.rel (%p5432) target = $region52
        $region51: #{sppf_forward.1} parent=47 // pred_region
          %s5435 = sand.u32 %s138, 1
          %s5436 = scalar_lea.sflag [#allocation3], %s5435
          %s5437 = sand.u32 %s138, 1
          %s5438 = smul.addr %s5437, 512
          %s5439 = scalar_lea.vmem [#allocation2], %s5438
          %5440 = dma.done %s5436, 8192
        $region52: #{sppf_forward.1} parent=47 // pred_fallthru
          _
      $region48: #{sppf_forward.1} parent=5 // pred_fallthru
        _
    $region6: #{sppf_forward.1} parent=1 // loop_footer
      %s18 = sadd.s32 1, %s14
    $region7: #{sppf_forward.1} parent=1 // loop_footer_branch
      %13 = sbr.rel target = $region3
    $region8: #{sppf_forward.1} parent=1 // loop_exit
      _
    %5441 = vsyncpa [#allocation3], 1
    %s5442 = scalar_lea.sflag [#allocation3], 1
    %5443 = vsyncpa %s5442, 1

</llo_original>
